<compile_context>
chip_gen: v5e
topology: v5e:2x2
jax: 0.10.0
libtpu: 0.0.40
codegen_flags: <defaults>
</compile_context>

<pallas_src>
import functools
import math

import jax
import jax.numpy as jnp
from jax.experimental import pallas as pl
from jax.experimental.pallas import tpu as pltpu

# ----------------------------- model hyper-params -----------------------------
MODEL_PARAMS = {
    "embedding_dim": 8,
    "timestamp_embedding_dim": 4,
    "hidden_layer_size": 32,
    "num_layers": 2,
    "dropout": 0.0,  # inference path: LSTM inter-layer dropout inactive
    "num_symbols": 10,
    "num_intervals": 5,
}
SCALABLE_FEATURES = ["f0", "f1", "f2", "f3", "f4"]

NUMERICAL_COLUMNS = ["open", "high", "low", "close", "volume"]
CATEGORICAL_COLUMNS = ["symbol", "interval", "hour", "dayofweek"]
COLUMN_NAME_TO_INDEX = {
    "open": 0, "high": 1, "low": 2, "close": 3, "volume": 4,
    "symbol": 5, "interval": 6, "hour": 7, "dayofweek": 8, "timestamp": 9,
}


# --------------------------------- fused kernel --------------------------------
def fused_bilstm_kernel(T, Bp, H,
                        x_ref, wih0_ref, whh0_ref, b0_ref,
                        wih1_ref, whh1_ref, b1_ref,
                        attw_ref, linw_ref, linb_ref, out_ref):
    """Fused 2-layer BiLSTM + attention + linear + clamp + exp.

    x_ref   : (T*Bp, In0p)  time-major, batch-padded, feature-padded input
    wih*    : (In, 8H)      [fwd 4H | bwd 4H], gate order [i, f, g, o]
    whh*    : (2, H, 4H)    per-direction recurrent weights
    b*      : (1, 8H)       (b_ih + b_hh), fwd | bwd
    attw    : (1, 2H)       attention weights
    linw    : (2H, F), linb: (1, F)
    out_ref : (Bp, F)
    """
    G = 4 * H

    def run_direction(proj2d, whh, d, reverse):
        # serial recurrence: only h @ W_hh + pointwise gate work per step
        h = jnp.zeros((Bp, H), jnp.float32)
        c = jnp.zeros((Bp, H), jnp.float32)
        hs = [None] * T
        for s in range(T):                       # fully unrolled (T is small)
            t = (T - 1 - s) if reverse else s
            gates = proj2d[t * Bp:(t + 1) * Bp, d * G:(d + 1) * G] + jnp.dot(
                h, whh, preferred_element_type=jnp.float32)       # (Bp, 4H)
            i_g = jax.nn.sigmoid(gates[:, 0:H])
            f_g = jax.nn.sigmoid(gates[:, H:2 * H])
            g_g = jnp.tanh(gates[:, 2 * H:3 * H])
            o_g = jax.nn.sigmoid(gates[:, 3 * H:4 * H])
            c = f_g * c + i_g * g_g
            h = o_g * jnp.tanh(c)
            hs[t] = h
        return hs

    # ---- layer 0: hoisted input projection, both directions in one matmul ----
    proj0 = jnp.dot(x_ref[...], wih0_ref[...],
                    preferred_element_type=jnp.float32) + b0_ref[...]   # (T*Bp, 8H)
    # TODO(synk): on v7x the independent fwd/bwd recurrences could be split
    # across the two TensorCores via core_map; kept single-core for simplicity.
    h0f = run_direction(proj0, whh0_ref[0], 0, False)
    h0b = run_direction(proj0, whh0_ref[1], 1, True)
    l0 = jnp.concatenate([jnp.concatenate(h0f, axis=0),
                          jnp.concatenate(h0b, axis=0)], axis=1)        # (T*Bp, 2H)

    # ---- layer 1 ----
    proj1 = jnp.dot(l0, wih1_ref[...],
                    preferred_element_type=jnp.float32) + b1_ref[...]   # (T*Bp, 8H)
    h1f = run_direction(proj1, whh1_ref[0], 0, False)
    h1b = run_direction(proj1, whh1_ref[1], 1, True)
    out_t = [jnp.concatenate([h1f[t], h1b[t]], axis=1) for t in range(T)]  # T x (Bp, 2H)

    # ---- attention (softmax over time) kept fully 2-D -------------------------
    aw = attw_ref[...]                                                     # (1, 2H)
    scores = [jnp.sum(o * aw, axis=1, keepdims=True) for o in out_t]       # T x (Bp, 1)
    m = scores[0]
    for t in range(1, T):
        m = jnp.maximum(m, scores[t])
    es = [jnp.exp(s - m) for s in scores]
    denom = es[0]
    for t in range(1, T):
        denom = denom + es[t]
    inv = 1.0 / denom                                                      # (Bp, 1)
    context = es[0] * inv * out_t[0]
    for t in range(1, T):
        context = context + es[t] * inv * out_t[t]                         # (Bp, 2H)

    # ---- final linear + clamp + exp -------------------------------------------
    pred = jnp.dot(context, linw_ref[...],
                   preferred_element_type=jnp.float32) + linb_ref[...]
    out_ref[...] = jnp.exp(jnp.clip(pred, -10.0, 10.0))


# ------------------------------ pallas wrapper ---------------------------------
def fused_bilstm(x_tbi, params):
    """x_tbi: (T, B, In0) time-major features. Returns (B, F)."""
    T, B, In0 = x_tbi.shape
    H = MODEL_PARAMS["hidden_layer_size"]
    F = len(SCALABLE_FEATURES)
    In0p = params["wih0"].shape[0]
    Bp = ((max(B, 8) + 7) // 8) * 8          # pad batch to full sublane groups

    x_pad = jnp.zeros((T, Bp, In0p), jnp.float32)
    x_pad = x_pad.at[:, :B, :In0].set(x_tbi)
    x2d = x_pad.reshape(T * Bp, In0p)

    vmem = pl.BlockSpec(memory_space=pltpu.MemorySpace.VMEM)
    out = pl.pallas_call(
        functools.partial(fused_bilstm_kernel, T, Bp, H),
        out_shape=jax.ShapeDtypeStruct((Bp, F), jnp.float32),
        in_specs=[vmem] * 10,
        out_specs=vmem,
    )(x2d,
      params["wih0"], params["whh0"], params["b0"],
      params["wih1"], params["whh1"], params["b1"],
      params["attw"], params["linw"], params["linb"])
    return out[:B]


# ------------------------------- param init ------------------------------------
def xavier_uniform(key, shape):
    fan_out, fan_in = shape[0], shape[1]           # PyTorch 2-D convention
    bound = math.sqrt(6.0 / (fan_in + fan_out))
    return jax.random.uniform(key, shape, jnp.float32, -bound, bound)


def orthogonal(key, shape):
    a = jax.random.normal(key, shape, jnp.float32)
    q, r = jnp.linalg.qr(a)
    q = q * jnp.sign(jnp.diagonal(r))[None, :]
    return q.astype(jnp.float32)


def init_params(key):
    E = MODEL_PARAMS["embedding_dim"]
    TS = MODEL_PARAMS["timestamp_embedding_dim"]
    H = MODEL_PARAMS["hidden_layer_size"]
    n_num = len(NUMERICAL_COLUMNS)
    in0 = n_num + 4 * E + TS                 # 41
    in0p = ((in0 + 7) // 8) * 8              # 48 (zero-padded features)
    F = len(SCALABLE_FEATURES)

    keys = iter(jax.random.split(key, 32))
    p = {}
    # nn.Embedding default init: N(0, 1) (not touched by _initialize_weights)
    p["symbol_emb"] = jax.random.normal(next(keys), (MODEL_PARAMS["num_symbols"], E), jnp.float32)
    p["interval_emb"] = jax.random.normal(next(keys), (MODEL_PARAMS["num_intervals"], E), jnp.float32)
    p["hour_emb"] = jax.random.normal(next(keys), (24, E), jnp.float32)
    p["day_emb"] = jax.random.normal(next(keys), (7, E), jnp.float32)
    # timestamp Linear(1, TS): xavier weight, zero bias
    p["ts_w"] = xavier_uniform(next(keys), (TS, 1)).reshape(TS)
    p["ts_b"] = jnp.zeros((TS,), jnp.float32)

    # Bidirectional 2-layer LSTM, packed for the fused kernel:
    #   wih: (In_pad, 8H) = [fwd 4H | bwd 4H] (W_ih transposed, zero-row padded)
    #   whh: (2, H, 4H), b: (1, 8H) (= b_ih + b_hh, zero init)
    def pack_layer(insz, insz_pad):
        wih_dirs, whh_dirs = [], []
        for _d in range(2):
            w_ih = xavier_uniform(next(keys), (4 * H, insz)).T        # (insz, 4H)
            w_ih = jnp.zeros((insz_pad, 4 * H), jnp.float32).at[:insz].set(w_ih)
            w_hh = orthogonal(next(keys), (4 * H, H)).T               # (H, 4H)
            wih_dirs.append(w_ih)
            whh_dirs.append(w_hh)
        wih = jnp.concatenate(wih_dirs, axis=1)                       # (insz_pad, 8H)
        whh = jnp.stack(whh_dirs, axis=0)                             # (2, H, 4H)
        b = jnp.zeros((1, 8 * H), jnp.float32)
        return wih, whh, b

    p["wih0"], p["whh0"], p["b0"] = pack_layer(in0, in0p)
    p["wih1"], p["whh1"], p["b1"] = pack_layer(2 * H, 2 * H)

    # attention weights (2H, 1) xavier — stored as a (1, 2H) row for lane broadcast
    p["attw"] = xavier_uniform(next(keys), (2 * H, 1)).reshape(1, 2 * H)
    # final linear (F, 2H) xavier, zero bias — stored transposed (2H, F)
    p["linw"] = xavier_uniform(next(keys), (F, 2 * H)).T
    p["linb"] = jnp.zeros((1, F), jnp.float32)
    return p


# ------------------------------- forward pass ----------------------------------
def model_forward(x, params):
    """x: (B, T, n_features) float32.  Returns (B, len(SCALABLE_FEATURES))."""
    c2i = COLUMN_NAME_TO_INDEX
    x = x.astype(jnp.float32)

    num_idx = jnp.array([c2i[c] for c in NUMERICAL_COLUMNS], dtype=jnp.int32)
    numerical = jnp.take(x, num_idx, axis=2)                      # (B,T,n_num)
    symbols = x[:, :, c2i["symbol"]].astype(jnp.int32)
    intervals = x[:, :, c2i["interval"]].astype(jnp.int32)
    hours = x[:, :, c2i["hour"]].astype(jnp.int32)
    days = x[:, :, c2i["dayofweek"]].astype(jnp.int32)
    timestamp = x[:, :, c2i["timestamp"]][..., None]              # (B,T,1)

    # TODO(synk): tiny embedding-table gathers stay in XLA (no win as a Pallas
    # DMA gather at this size); everything downstream is the fused Pallas kernel.
    sym_e = jnp.take(params["symbol_emb"], symbols, axis=0)       # (B,T,E)
    int_e = jnp.take(params["interval_emb"], intervals, axis=0)
    hour_e = jnp.take(params["hour_emb"], hours, axis=0)
    day_e = jnp.take(params["day_emb"], days, axis=0)
    ts_e = timestamp * params["ts_w"] + params["ts_b"]            # (B,T,TS)

    # same concat order as the PyTorch module
    lstm_in = jnp.concatenate(
        [numerical, sym_e, int_e, ts_e, hour_e, day_e], axis=2)   # (B,T,In0)
    h = jnp.transpose(lstm_in, (1, 0, 2))                         # (T,B,In0) time-major

    return fused_bilstm(h, params)


# ----------------------------------- main ---------------------------------------
if __name__ == "__main__":
    key = jax.random.PRNGKey(0)
    kp, kx = jax.random.split(key)
    params = init_params(kp)

    B, T = 2, 8
    k1, k2, k3, k4, k5, k6 = jax.random.split(kx, 6)
    numeric = jax.random.normal(k1, (B, T, len(NUMERICAL_COLUMNS)), jnp.float32)
    sym = jax.random.randint(k2, (B, T, 1), 0, MODEL_PARAMS["num_symbols"]).astype(jnp.float32)
    itv = jax.random.randint(k3, (B, T, 1), 0, MODEL_PARAMS["num_intervals"]).astype(jnp.float32)
    hour = jax.random.randint(k4, (B, T, 1), 0, 24).astype(jnp.float32)
    day = jax.random.randint(k5, (B, T, 1), 0, 7).astype(jnp.float32)
    ts = jax.random.uniform(k6, (B, T, 1), jnp.float32)
    # column order matches COLUMN_NAME_TO_INDEX
    x = jnp.concatenate([numeric, sym, itv, hour, day, ts], axis=2)  # (B, T, 10)

    out = jax.jit(lambda xx: model_forward(xx, params))(x)
    out = jax.block_until_ready(out)
    assert out.shape == (B, len(SCALABLE_FEATURES)), out.shape
    assert bool(jnp.all(jnp.isfinite(out))) and bool(jnp.all(out > 0.0))
    print("KERNEL_OK")
</pallas_src>

<mosaic_0001>
module attributes {stable_mosaic.version = 11 : i64} {
  func.func @fused_bilstm_kernel(%arg0: memref<64x48xf32, #tpu.memory_space<vmem>>, %arg1: memref<48x256xf32, #tpu.memory_space<vmem>>, %arg2: memref<2x32x128xf32, #tpu.memory_space<vmem>>, %arg3: memref<1x256xf32, #tpu.memory_space<vmem>>, %arg4: memref<64x256xf32, #tpu.memory_space<vmem>>, %arg5: memref<2x32x128xf32, #tpu.memory_space<vmem>>, %arg6: memref<1x256xf32, #tpu.memory_space<vmem>>, %arg7: memref<1x64xf32, #tpu.memory_space<vmem>>, %arg8: memref<64x5xf32, #tpu.memory_space<vmem>>, %arg9: memref<1x5xf32, #tpu.memory_space<vmem>>, %arg10: memref<8x5xf32, #tpu.memory_space<vmem>>) attributes {dimension_semantics = [], scalar_prefetch = 0 : i64, scratch_operands = 0 : i64, tpu.core_type = #tpu.core_type<tc>} {
    %c0 = arith.constant 0 : index
    %c0_0 = arith.constant 0 : index
    %0 = vector.load %arg0[%c0, %c0_0] : memref<64x48xf32, #tpu.memory_space<vmem>>, vector<64x48xf32>
    %c0_1 = arith.constant 0 : index
    %c0_2 = arith.constant 0 : index
    %1 = vector.load %arg1[%c0_1, %c0_2] : memref<48x256xf32, #tpu.memory_space<vmem>>, vector<48x256xf32>
    %cst = arith.constant dense<0.000000e+00> : vector<64x256xf32>
    %2 = tpu.matmul %0, %1, %cst {dimension_numbers = #tpu.dot_dimension_numbers<[1], [0], [0], [1], [0, 0, 1, 1], [], []>} : vector<64x48xf32>, vector<48x256xf32>, vector<64x256xf32> -> vector<64x256xf32>
    %c0_3 = arith.constant 0 : index
    %c0_4 = arith.constant 0 : index
    %3 = vector.load %arg3[%c0_3, %c0_4] : memref<1x256xf32, #tpu.memory_space<vmem>>, vector<1x256xf32>
    %4 = vector.broadcast %3 : vector<1x256xf32> to vector<64x256xf32>
    %5 = arith.addf %2, %4 : vector<64x256xf32>
    %c0_5 = arith.constant 0 : index
    %c0_6 = arith.constant 0 : index
    %c0_7 = arith.constant 0 : index
    %6 = vector.load %arg2[%c0_5, %c0_6, %c0_7] : memref<2x32x128xf32, #tpu.memory_space<vmem>>, vector<1x32x128xf32>
    %7 = vector.shape_cast %6 : vector<1x32x128xf32> to vector<32x128xf32>
    %cst_8 = arith.constant 0.000000e+00 : f32
    %8 = vector.broadcast %cst_8 : f32 to vector<8x32xf32>
    %cst_9 = arith.constant 0.000000e+00 : f32
    %9 = vector.broadcast %cst_9 : f32 to vector<8x32xf32>
    %10 = vector.extract_strided_slice %5 {offsets = [0, 0], sizes = [8, 128], strides = [1, 1]} : vector<64x256xf32> to vector<8x128xf32>
    %cst_10 = arith.constant dense<0.000000e+00> : vector<8x128xf32>
    %11 = tpu.matmul %8, %7, %cst_10 {dimension_numbers = #tpu.dot_dimension_numbers<[1], [0], [0], [1], [0, 0, 1, 1], [], []>} : vector<8x32xf32>, vector<32x128xf32>, vector<8x128xf32> -> vector<8x128xf32>
    %12 = arith.addf %10, %11 : vector<8x128xf32>
    %13 = vector.extract_strided_slice %12 {offsets = [0, 0], sizes = [8, 32], strides = [1, 1]} : vector<8x128xf32> to vector<8x32xf32>
    %14 = arith.negf %13 : vector<8x32xf32>
    %15 = math.exp %14 : vector<8x32xf32>
    %cst_11 = arith.constant 1.000000e+00 : f32
    %16 = vector.broadcast %cst_11 : f32 to vector<8x32xf32>
    %17 = arith.addf %16, %15 : vector<8x32xf32>
    %18 = arith.divf %16, %17 : vector<8x32xf32>
    %19 = vector.extract_strided_slice %12 {offsets = [0, 32], sizes = [8, 32], strides = [1, 1]} : vector<8x128xf32> to vector<8x32xf32>
    %20 = arith.negf %19 : vector<8x32xf32>
    %21 = math.exp %20 : vector<8x32xf32>
    %cst_12 = arith.constant 1.000000e+00 : f32
    %22 = vector.broadcast %cst_12 : f32 to vector<8x32xf32>
    %23 = arith.addf %22, %21 : vector<8x32xf32>
    %24 = arith.divf %22, %23 : vector<8x32xf32>
    %25 = vector.extract_strided_slice %12 {offsets = [0, 64], sizes = [8, 32], strides = [1, 1]} : vector<8x128xf32> to vector<8x32xf32>
    %26 = math.tanh %25 : vector<8x32xf32>
    %27 = vector.extract_strided_slice %12 {offsets = [0, 96], sizes = [8, 32], strides = [1, 1]} : vector<8x128xf32> to vector<8x32xf32>
    %28 = arith.negf %27 : vector<8x32xf32>
    %29 = math.exp %28 : vector<8x32xf32>
    %cst_13 = arith.constant 1.000000e+00 : f32
    %30 = vector.broadcast %cst_13 : f32 to vector<8x32xf32>
    %31 = arith.addf %30, %29 : vector<8x32xf32>
    %32 = arith.divf %30, %31 : vector<8x32xf32>
    %33 = arith.mulf %24, %9 : vector<8x32xf32>
    %34 = arith.mulf %18, %26 : vector<8x32xf32>
    %35 = arith.addf %33, %34 : vector<8x32xf32>
    %36 = math.tanh %35 : vector<8x32xf32>
    %37 = arith.mulf %32, %36 : vector<8x32xf32>
    %38 = vector.extract_strided_slice %5 {offsets = [8, 0], sizes = [8, 128], strides = [1, 1]} : vector<64x256xf32> to vector<8x128xf32>
    %cst_14 = arith.constant dense<0.000000e+00> : vector<8x128xf32>
    %39 = tpu.matmul %37, %7, %cst_14 {dimension_numbers = #tpu.dot_dimension_numbers<[1], [0], [0], [1], [0, 0, 1, 1], [], []>} : vector<8x32xf32>, vector<32x128xf32>, vector<8x128xf32> -> vector<8x128xf32>
    %40 = arith.addf %38, %39 : vector<8x128xf32>
    %41 = vector.extract_strided_slice %40 {offsets = [0, 0], sizes = [8, 32], strides = [1, 1]} : vector<8x128xf32> to vector<8x32xf32>
    %42 = arith.negf %41 : vector<8x32xf32>
    %43 = math.exp %42 : vector<8x32xf32>
    %cst_15 = arith.constant 1.000000e+00 : f32
    %44 = vector.broadcast %cst_15 : f32 to vector<8x32xf32>
    %45 = arith.addf %44, %43 : vector<8x32xf32>
    %46 = arith.divf %44, %45 : vector<8x32xf32>
    %47 = vector.extract_strided_slice %40 {offsets = [0, 32], sizes = [8, 32], strides = [1, 1]} : vector<8x128xf32> to vector<8x32xf32>
    %48 = arith.negf %47 : vector<8x32xf32>
    %49 = math.exp %48 : vector<8x32xf32>
    %cst_16 = arith.constant 1.000000e+00 : f32
    %50 = vector.broadcast %cst_16 : f32 to vector<8x32xf32>
    %51 = arith.addf %50, %49 : vector<8x32xf32>
    %52 = arith.divf %50, %51 : vector<8x32xf32>
    %53 = vector.extract_strided_slice %40 {offsets = [0, 64], sizes = [8, 32], strides = [1, 1]} : vector<8x128xf32> to vector<8x32xf32>
    %54 = math.tanh %53 : vector<8x32xf32>
    %55 = vector.extract_strided_slice %40 {offsets = [0, 96], sizes = [8, 32], strides = [1, 1]} : vector<8x128xf32> to vector<8x32xf32>
    %56 = arith.negf %55 : vector<8x32xf32>
    %57 = math.exp %56 : vector<8x32xf32>
    %cst_17 = arith.constant 1.000000e+00 : f32
    %58 = vector.broadcast %cst_17 : f32 to vector<8x32xf32>
    %59 = arith.addf %58, %57 : vector<8x32xf32>
    %60 = arith.divf %58, %59 : vector<8x32xf32>
    %61 = arith.mulf %52, %35 : vector<8x32xf32>
    %62 = arith.mulf %46, %54 : vector<8x32xf32>
    %63 = arith.addf %61, %62 : vector<8x32xf32>
    %64 = math.tanh %63 : vector<8x32xf32>
    %65 = arith.mulf %60, %64 : vector<8x32xf32>
    %66 = vector.extract_strided_slice %5 {offsets = [16, 0], sizes = [8, 128], strides = [1, 1]} : vector<64x256xf32> to vector<8x128xf32>
    %cst_18 = arith.constant dense<0.000000e+00> : vector<8x128xf32>
    %67 = tpu.matmul %65, %7, %cst_18 {dimension_numbers = #tpu.dot_dimension_numbers<[1], [0], [0], [1], [0, 0, 1, 1], [], []>} : vector<8x32xf32>, vector<32x128xf32>, vector<8x128xf32> -> vector<8x128xf32>
    %68 = arith.addf %66, %67 : vector<8x128xf32>
    %69 = vector.extract_strided_slice %68 {offsets = [0, 0], sizes = [8, 32], strides = [1, 1]} : vector<8x128xf32> to vector<8x32xf32>
    %70 = arith.negf %69 : vector<8x32xf32>
    %71 = math.exp %70 : vector<8x32xf32>
    %cst_19 = arith.constant 1.000000e+00 : f32
    %72 = vector.broadcast %cst_19 : f32 to vector<8x32xf32>
    %73 = arith.addf %72, %71 : vector<8x32xf32>
    %74 = arith.divf %72, %73 : vector<8x32xf32>
    %75 = vector.extract_strided_slice %68 {offsets = [0, 32], sizes = [8, 32], strides = [1, 1]} : vector<8x128xf32> to vector<8x32xf32>
    %76 = arith.negf %75 : vector<8x32xf32>
    %77 = math.exp %76 : vector<8x32xf32>
    %cst_20 = arith.constant 1.000000e+00 : f32
    %78 = vector.broadcast %cst_20 : f32 to vector<8x32xf32>
    %79 = arith.addf %78, %77 : vector<8x32xf32>
    %80 = arith.divf %78, %79 : vector<8x32xf32>
    %81 = vector.extract_strided_slice %68 {offsets = [0, 64], sizes = [8, 32], strides = [1, 1]} : vector<8x128xf32> to vector<8x32xf32>
    %82 = math.tanh %81 : vector<8x32xf32>
    %83 = vector.extract_strided_slice %68 {offsets = [0, 96], sizes = [8, 32], strides = [1, 1]} : vector<8x128xf32> to vector<8x32xf32>
    %84 = arith.negf %83 : vector<8x32xf32>
    %85 = math.exp %84 : vector<8x32xf32>
    %cst_21 = arith.constant 1.000000e+00 : f32
    %86 = vector.broadcast %cst_21 : f32 to vector<8x32xf32>
    %87 = arith.addf %86, %85 : vector<8x32xf32>
    %88 = arith.divf %86, %87 : vector<8x32xf32>
    %89 = arith.mulf %80, %63 : vector<8x32xf32>
    %90 = arith.mulf %74, %82 : vector<8x32xf32>
    %91 = arith.addf %89, %90 : vector<8x32xf32>
    %92 = math.tanh %91 : vector<8x32xf32>
    %93 = arith.mulf %88, %92 : vector<8x32xf32>
    %94 = vector.extract_strided_slice %5 {offsets = [24, 0], sizes = [8, 128], strides = [1, 1]} : vector<64x256xf32> to vector<8x128xf32>
    %cst_22 = arith.constant dense<0.000000e+00> : vector<8x128xf32>
    %95 = tpu.matmul %93, %7, %cst_22 {dimension_numbers = #tpu.dot_dimension_numbers<[1], [0], [0], [1], [0, 0, 1, 1], [], []>} : vector<8x32xf32>, vector<32x128xf32>, vector<8x128xf32> -> vector<8x128xf32>
    %96 = arith.addf %94, %95 : vector<8x128xf32>
    %97 = vector.extract_strided_slice %96 {offsets = [0, 0], sizes = [8, 32], strides = [1, 1]} : vector<8x128xf32> to vector<8x32xf32>
    %98 = arith.negf %97 : vector<8x32xf32>
    %99 = math.exp %98 : vector<8x32xf32>
    %cst_23 = arith.constant 1.000000e+00 : f32
    %100 = vector.broadcast %cst_23 : f32 to vector<8x32xf32>
    %101 = arith.addf %100, %99 : vector<8x32xf32>
    %102 = arith.divf %100, %101 : vector<8x32xf32>
    %103 = vector.extract_strided_slice %96 {offsets = [0, 32], sizes = [8, 32], strides = [1, 1]} : vector<8x128xf32> to vector<8x32xf32>
    %104 = arith.negf %103 : vector<8x32xf32>
    %105 = math.exp %104 : vector<8x32xf32>
    %cst_24 = arith.constant 1.000000e+00 : f32
    %106 = vector.broadcast %cst_24 : f32 to vector<8x32xf32>
    %107 = arith.addf %106, %105 : vector<8x32xf32>
    %108 = arith.divf %106, %107 : vector<8x32xf32>
    %109 = vector.extract_strided_slice %96 {offsets = [0, 64], sizes = [8, 32], strides = [1, 1]} : vector<8x128xf32> to vector<8x32xf32>
    %110 = math.tanh %109 : vector<8x32xf32>
    %111 = vector.extract_strided_slice %96 {offsets = [0, 96], sizes = [8, 32], strides = [1, 1]} : vector<8x128xf32> to vector<8x32xf32>
    %112 = arith.negf %111 : vector<8x32xf32>
    %113 = math.exp %112 : vector<8x32xf32>
    %cst_25 = arith.constant 1.000000e+00 : f32
    %114 = vector.broadcast %cst_25 : f32 to vector<8x32xf32>
    %115 = arith.addf %114, %113 : vector<8x32xf32>
    %116 = arith.divf %114, %115 : vector<8x32xf32>
    %117 = arith.mulf %108, %91 : vector<8x32xf32>
    %118 = arith.mulf %102, %110 : vector<8x32xf32>
    %119 = arith.addf %117, %118 : vector<8x32xf32>
    %120 = math.tanh %119 : vector<8x32xf32>
    %121 = arith.mulf %116, %120 : vector<8x32xf32>
    %122 = vector.extract_strided_slice %5 {offsets = [32, 0], sizes = [8, 128], strides = [1, 1]} : vector<64x256xf32> to vector<8x128xf32>
    %cst_26 = arith.constant dense<0.000000e+00> : vector<8x128xf32>
    %123 = tpu.matmul %121, %7, %cst_26 {dimension_numbers = #tpu.dot_dimension_numbers<[1], [0], [0], [1], [0, 0, 1, 1], [], []>} : vector<8x32xf32>, vector<32x128xf32>, vector<8x128xf32> -> vector<8x128xf32>
    %124 = arith.addf %122, %123 : vector<8x128xf32>
    %125 = vector.extract_strided_slice %124 {offsets = [0, 0], sizes = [8, 32], strides = [1, 1]} : vector<8x128xf32> to vector<8x32xf32>
    %126 = arith.negf %125 : vector<8x32xf32>
    %127 = math.exp %126 : vector<8x32xf32>
    %cst_27 = arith.constant 1.000000e+00 : f32
    %128 = vector.broadcast %cst_27 : f32 to vector<8x32xf32>
    %129 = arith.addf %128, %127 : vector<8x32xf32>
    %130 = arith.divf %128, %129 : vector<8x32xf32>
    %131 = vector.extract_strided_slice %124 {offsets = [0, 32], sizes = [8, 32], strides = [1, 1]} : vector<8x128xf32> to vector<8x32xf32>
    %132 = arith.negf %131 : vector<8x32xf32>
    %133 = math.exp %132 : vector<8x32xf32>
    %cst_28 = arith.constant 1.000000e+00 : f32
    %134 = vector.broadcast %cst_28 : f32 to vector<8x32xf32>
    %135 = arith.addf %134, %133 : vector<8x32xf32>
    %136 = arith.divf %134, %135 : vector<8x32xf32>
    %137 = vector.extract_strided_slice %124 {offsets = [0, 64], sizes = [8, 32], strides = [1, 1]} : vector<8x128xf32> to vector<8x32xf32>
    %138 = math.tanh %137 : vector<8x32xf32>
    %139 = vector.extract_strided_slice %124 {offsets = [0, 96], sizes = [8, 32], strides = [1, 1]} : vector<8x128xf32> to vector<8x32xf32>
    %140 = arith.negf %139 : vector<8x32xf32>
    %141 = math.exp %140 : vector<8x32xf32>
    %cst_29 = arith.constant 1.000000e+00 : f32
    %142 = vector.broadcast %cst_29 : f32 to vector<8x32xf32>
    %143 = arith.addf %142, %141 : vector<8x32xf32>
    %144 = arith.divf %142, %143 : vector<8x32xf32>
    %145 = arith.mulf %136, %119 : vector<8x32xf32>
    %146 = arith.mulf %130, %138 : vector<8x32xf32>
    %147 = arith.addf %145, %146 : vector<8x32xf32>
    %148 = math.tanh %147 : vector<8x32xf32>
    %149 = arith.mulf %144, %148 : vector<8x32xf32>
    %150 = vector.extract_strided_slice %5 {offsets = [40, 0], sizes = [8, 128], strides = [1, 1]} : vector<64x256xf32> to vector<8x128xf32>
    %cst_30 = arith.constant dense<0.000000e+00> : vector<8x128xf32>
    %151 = tpu.matmul %149, %7, %cst_30 {dimension_numbers = #tpu.dot_dimension_numbers<[1], [0], [0], [1], [0, 0, 1, 1], [], []>} : vector<8x32xf32>, vector<32x128xf32>, vector<8x128xf32> -> vector<8x128xf32>
    %152 = arith.addf %150, %151 : vector<8x128xf32>
    %153 = vector.extract_strided_slice %152 {offsets = [0, 0], sizes = [8, 32], strides = [1, 1]} : vector<8x128xf32> to vector<8x32xf32>
    %154 = arith.negf %153 : vector<8x32xf32>
    %155 = math.exp %154 : vector<8x32xf32>
    %cst_31 = arith.constant 1.000000e+00 : f32
    %156 = vector.broadcast %cst_31 : f32 to vector<8x32xf32>
    %157 = arith.addf %156, %155 : vector<8x32xf32>
    %158 = arith.divf %156, %157 : vector<8x32xf32>
    %159 = vector.extract_strided_slice %152 {offsets = [0, 32], sizes = [8, 32], strides = [1, 1]} : vector<8x128xf32> to vector<8x32xf32>
    %160 = arith.negf %159 : vector<8x32xf32>
    %161 = math.exp %160 : vector<8x32xf32>
    %cst_32 = arith.constant 1.000000e+00 : f32
    %162 = vector.broadcast %cst_32 : f32 to vector<8x32xf32>
    %163 = arith.addf %162, %161 : vector<8x32xf32>
    %164 = arith.divf %162, %163 : vector<8x32xf32>
    %165 = vector.extract_strided_slice %152 {offsets = [0, 64], sizes = [8, 32], strides = [1, 1]} : vector<8x128xf32> to vector<8x32xf32>
    %166 = math.tanh %165 : vector<8x32xf32>
    %167 = vector.extract_strided_slice %152 {offsets = [0, 96], sizes = [8, 32], strides = [1, 1]} : vector<8x128xf32> to vector<8x32xf32>
    %168 = arith.negf %167 : vector<8x32xf32>
    %169 = math.exp %168 : vector<8x32xf32>
    %cst_33 = arith.constant 1.000000e+00 : f32
    %170 = vector.broadcast %cst_33 : f32 to vector<8x32xf32>
    %171 = arith.addf %170, %169 : vector<8x32xf32>
    %172 = arith.divf %170, %171 : vector<8x32xf32>
    %173 = arith.mulf %164, %147 : vector<8x32xf32>
    %174 = arith.mulf %158, %166 : vector<8x32xf32>
    %175 = arith.addf %173, %174 : vector<8x32xf32>
    %176 = math.tanh %175 : vector<8x32xf32>
    %177 = arith.mulf %172, %176 : vector<8x32xf32>
    %178 = vector.extract_strided_slice %5 {offsets = [48, 0], sizes = [8, 128], strides = [1, 1]} : vector<64x256xf32> to vector<8x128xf32>
    %cst_34 = arith.constant dense<0.000000e+00> : vector<8x128xf32>
    %179 = tpu.matmul %177, %7, %cst_34 {dimension_numbers = #tpu.dot_dimension_numbers<[1], [0], [0], [1], [0, 0, 1, 1], [], []>} : vector<8x32xf32>, vector<32x128xf32>, vector<8x128xf32> -> vector<8x128xf32>
    %180 = arith.addf %178, %179 : vector<8x128xf32>
    %181 = vector.extract_strided_slice %180 {offsets = [0, 0], sizes = [8, 32], strides = [1, 1]} : vector<8x128xf32> to vector<8x32xf32>
    %182 = arith.negf %181 : vector<8x32xf32>
    %183 = math.exp %182 : vector<8x32xf32>
    %cst_35 = arith.constant 1.000000e+00 : f32
    %184 = vector.broadcast %cst_35 : f32 to vector<8x32xf32>
    %185 = arith.addf %184, %183 : vector<8x32xf32>
    %186 = arith.divf %184, %185 : vector<8x32xf32>
    %187 = vector.extract_strided_slice %180 {offsets = [0, 32], sizes = [8, 32], strides = [1, 1]} : vector<8x128xf32> to vector<8x32xf32>
    %188 = arith.negf %187 : vector<8x32xf32>
    %189 = math.exp %188 : vector<8x32xf32>
    %cst_36 = arith.constant 1.000000e+00 : f32
    %190 = vector.broadcast %cst_36 : f32 to vector<8x32xf32>
    %191 = arith.addf %190, %189 : vector<8x32xf32>
    %192 = arith.divf %190, %191 : vector<8x32xf32>
    %193 = vector.extract_strided_slice %180 {offsets = [0, 64], sizes = [8, 32], strides = [1, 1]} : vector<8x128xf32> to vector<8x32xf32>
    %194 = math.tanh %193 : vector<8x32xf32>
    %195 = vector.extract_strided_slice %180 {offsets = [0, 96], sizes = [8, 32], strides = [1, 1]} : vector<8x128xf32> to vector<8x32xf32>
    %196 = arith.negf %195 : vector<8x32xf32>
    %197 = math.exp %196 : vector<8x32xf32>
    %cst_37 = arith.constant 1.000000e+00 : f32
    %198 = vector.broadcast %cst_37 : f32 to vector<8x32xf32>
    %199 = arith.addf %198, %197 : vector<8x32xf32>
    %200 = arith.divf %198, %199 : vector<8x32xf32>
    %201 = arith.mulf %192, %175 : vector<8x32xf32>
    %202 = arith.mulf %186, %194 : vector<8x32xf32>
    %203 = arith.addf %201, %202 : vector<8x32xf32>
    %204 = math.tanh %203 : vector<8x32xf32>
    %205 = arith.mulf %200, %204 : vector<8x32xf32>
    %206 = vector.extract_strided_slice %5 {offsets = [56, 0], sizes = [8, 128], strides = [1, 1]} : vector<64x256xf32> to vector<8x128xf32>
    %cst_38 = arith.constant dense<0.000000e+00> : vector<8x128xf32>
    %207 = tpu.matmul %205, %7, %cst_38 {dimension_numbers = #tpu.dot_dimension_numbers<[1], [0], [0], [1], [0, 0, 1, 1], [], []>} : vector<8x32xf32>, vector<32x128xf32>, vector<8x128xf32> -> vector<8x128xf32>
    %208 = arith.addf %206, %207 : vector<8x128xf32>
    %209 = vector.extract_strided_slice %208 {offsets = [0, 0], sizes = [8, 32], strides = [1, 1]} : vector<8x128xf32> to vector<8x32xf32>
    %210 = arith.negf %209 : vector<8x32xf32>
    %211 = math.exp %210 : vector<8x32xf32>
    %cst_39 = arith.constant 1.000000e+00 : f32
    %212 = vector.broadcast %cst_39 : f32 to vector<8x32xf32>
    %213 = arith.addf %212, %211 : vector<8x32xf32>
    %214 = arith.divf %212, %213 : vector<8x32xf32>
    %215 = vector.extract_strided_slice %208 {offsets = [0, 32], sizes = [8, 32], strides = [1, 1]} : vector<8x128xf32> to vector<8x32xf32>
    %216 = arith.negf %215 : vector<8x32xf32>
    %217 = math.exp %216 : vector<8x32xf32>
    %cst_40 = arith.constant 1.000000e+00 : f32
    %218 = vector.broadcast %cst_40 : f32 to vector<8x32xf32>
    %219 = arith.addf %218, %217 : vector<8x32xf32>
    %220 = arith.divf %218, %219 : vector<8x32xf32>
    %221 = vector.extract_strided_slice %208 {offsets = [0, 64], sizes = [8, 32], strides = [1, 1]} : vector<8x128xf32> to vector<8x32xf32>
    %222 = math.tanh %221 : vector<8x32xf32>
    %223 = vector.extract_strided_slice %208 {offsets = [0, 96], sizes = [8, 32], strides = [1, 1]} : vector<8x128xf32> to vector<8x32xf32>
    %224 = arith.negf %223 : vector<8x32xf32>
    %225 = math.exp %224 : vector<8x32xf32>
    %cst_41 = arith.constant 1.000000e+00 : f32
    %226 = vector.broadcast %cst_41 : f32 to vector<8x32xf32>
    %227 = arith.addf %226, %225 : vector<8x32xf32>
    %228 = arith.divf %226, %227 : vector<8x32xf32>
    %229 = arith.mulf %220, %203 : vector<8x32xf32>
    %230 = arith.mulf %214, %222 : vector<8x32xf32>
    %231 = arith.addf %229, %230 : vector<8x32xf32>
    %232 = math.tanh %231 : vector<8x32xf32>
    %233 = arith.mulf %228, %232 : vector<8x32xf32>
    %c1 = arith.constant 1 : index
    %c0_42 = arith.constant 0 : index
    %c0_43 = arith.constant 0 : index
    %234 = vector.load %arg2[%c1, %c0_42, %c0_43] : memref<2x32x128xf32, #tpu.memory_space<vmem>>, vector<1x32x128xf32>
    %235 = vector.shape_cast %234 : vector<1x32x128xf32> to vector<32x128xf32>
    %cst_44 = arith.constant 0.000000e+00 : f32
    %236 = vector.broadcast %cst_44 : f32 to vector<8x32xf32>
    %cst_45 = arith.constant 0.000000e+00 : f32
    %237 = vector.broadcast %cst_45 : f32 to vector<8x32xf32>
    %238 = vector.extract_strided_slice %5 {offsets = [56, 128], sizes = [8, 128], strides = [1, 1]} : vector<64x256xf32> to vector<8x128xf32>
    %cst_46 = arith.constant dense<0.000000e+00> : vector<8x128xf32>
    %239 = tpu.matmul %236, %235, %cst_46 {dimension_numbers = #tpu.dot_dimension_numbers<[1], [0], [0], [1], [0, 0, 1, 1], [], []>} : vector<8x32xf32>, vector<32x128xf32>, vector<8x128xf32> -> vector<8x128xf32>
    %240 = arith.addf %238, %239 : vector<8x128xf32>
    %241 = vector.extract_strided_slice %240 {offsets = [0, 0], sizes = [8, 32], strides = [1, 1]} : vector<8x128xf32> to vector<8x32xf32>
    %242 = arith.negf %241 : vector<8x32xf32>
    %243 = math.exp %242 : vector<8x32xf32>
    %cst_47 = arith.constant 1.000000e+00 : f32
    %244 = vector.broadcast %cst_47 : f32 to vector<8x32xf32>
    %245 = arith.addf %244, %243 : vector<8x32xf32>
    %246 = arith.divf %244, %245 : vector<8x32xf32>
    %247 = vector.extract_strided_slice %240 {offsets = [0, 32], sizes = [8, 32], strides = [1, 1]} : vector<8x128xf32> to vector<8x32xf32>
    %248 = arith.negf %247 : vector<8x32xf32>
    %249 = math.exp %248 : vector<8x32xf32>
    %cst_48 = arith.constant 1.000000e+00 : f32
    %250 = vector.broadcast %cst_48 : f32 to vector<8x32xf32>
    %251 = arith.addf %250, %249 : vector<8x32xf32>
    %252 = arith.divf %250, %251 : vector<8x32xf32>
    %253 = vector.extract_strided_slice %240 {offsets = [0, 64], sizes = [8, 32], strides = [1, 1]} : vector<8x128xf32> to vector<8x32xf32>
    %254 = math.tanh %253 : vector<8x32xf32>
    %255 = vector.extract_strided_slice %240 {offsets = [0, 96], sizes = [8, 32], strides = [1, 1]} : vector<8x128xf32> to vector<8x32xf32>
    %256 = arith.negf %255 : vector<8x32xf32>
    %257 = math.exp %256 : vector<8x32xf32>
    %cst_49 = arith.constant 1.000000e+00 : f32
    %258 = vector.broadcast %cst_49 : f32 to vector<8x32xf32>
    %259 = arith.addf %258, %257 : vector<8x32xf32>
    %260 = arith.divf %258, %259 : vector<8x32xf32>
    %261 = arith.mulf %252, %237 : vector<8x32xf32>
    %262 = arith.mulf %246, %254 : vector<8x32xf32>
    %263 = arith.addf %261, %262 : vector<8x32xf32>
    %264 = math.tanh %263 : vector<8x32xf32>
    %265 = arith.mulf %260, %264 : vector<8x32xf32>
    %266 = vector.extract_strided_slice %5 {offsets = [48, 128], sizes = [8, 128], strides = [1, 1]} : vector<64x256xf32> to vector<8x128xf32>
    %cst_50 = arith.constant dense<0.000000e+00> : vector<8x128xf32>
    %267 = tpu.matmul %265, %235, %cst_50 {dimension_numbers = #tpu.dot_dimension_numbers<[1], [0], [0], [1], [0, 0, 1, 1], [], []>} : vector<8x32xf32>, vector<32x128xf32>, vector<8x128xf32> -> vector<8x128xf32>
    %268 = arith.addf %266, %267 : vector<8x128xf32>
    %269 = vector.extract_strided_slice %268 {offsets = [0, 0], sizes = [8, 32], strides = [1, 1]} : vector<8x128xf32> to vector<8x32xf32>
    %270 = arith.negf %269 : vector<8x32xf32>
    %271 = math.exp %270 : vector<8x32xf32>
    %cst_51 = arith.constant 1.000000e+00 : f32
    %272 = vector.broadcast %cst_51 : f32 to vector<8x32xf32>
    %273 = arith.addf %272, %271 : vector<8x32xf32>
    %274 = arith.divf %272, %273 : vector<8x32xf32>
    %275 = vector.extract_strided_slice %268 {offsets = [0, 32], sizes = [8, 32], strides = [1, 1]} : vector<8x128xf32> to vector<8x32xf32>
    %276 = arith.negf %275 : vector<8x32xf32>
    %277 = math.exp %276 : vector<8x32xf32>
    %cst_52 = arith.constant 1.000000e+00 : f32
    %278 = vector.broadcast %cst_52 : f32 to vector<8x32xf32>
    %279 = arith.addf %278, %277 : vector<8x32xf32>
    %280 = arith.divf %278, %279 : vector<8x32xf32>
    %281 = vector.extract_strided_slice %268 {offsets = [0, 64], sizes = [8, 32], strides = [1, 1]} : vector<8x128xf32> to vector<8x32xf32>
    %282 = math.tanh %281 : vector<8x32xf32>
    %283 = vector.extract_strided_slice %268 {offsets = [0, 96], sizes = [8, 32], strides = [1, 1]} : vector<8x128xf32> to vector<8x32xf32>
    %284 = arith.negf %283 : vector<8x32xf32>
    %285 = math.exp %284 : vector<8x32xf32>
    %cst_53 = arith.constant 1.000000e+00 : f32
    %286 = vector.broadcast %cst_53 : f32 to vector<8x32xf32>
    %287 = arith.addf %286, %285 : vector<8x32xf32>
    %288 = arith.divf %286, %287 : vector<8x32xf32>
    %289 = arith.mulf %280, %263 : vector<8x32xf32>
    %290 = arith.mulf %274, %282 : vector<8x32xf32>
    %291 = arith.addf %289, %290 : vector<8x32xf32>
    %292 = math.tanh %291 : vector<8x32xf32>
    %293 = arith.mulf %288, %292 : vector<8x32xf32>
    %294 = vector.extract_strided_slice %5 {offsets = [40, 128], sizes = [8, 128], strides = [1, 1]} : vector<64x256xf32> to vector<8x128xf32>
    %cst_54 = arith.constant dense<0.000000e+00> : vector<8x128xf32>
    %295 = tpu.matmul %293, %235, %cst_54 {dimension_numbers = #tpu.dot_dimension_numbers<[1], [0], [0], [1], [0, 0, 1, 1], [], []>} : vector<8x32xf32>, vector<32x128xf32>, vector<8x128xf32> -> vector<8x128xf32>
    %296 = arith.addf %294, %295 : vector<8x128xf32>
    %297 = vector.extract_strided_slice %296 {offsets = [0, 0], sizes = [8, 32], strides = [1, 1]} : vector<8x128xf32> to vector<8x32xf32>
    %298 = arith.negf %297 : vector<8x32xf32>
    %299 = math.exp %298 : vector<8x32xf32>
    %cst_55 = arith.constant 1.000000e+00 : f32
    %300 = vector.broadcast %cst_55 : f32 to vector<8x32xf32>
    %301 = arith.addf %300, %299 : vector<8x32xf32>
    %302 = arith.divf %300, %301 : vector<8x32xf32>
    %303 = vector.extract_strided_slice %296 {offsets = [0, 32], sizes = [8, 32], strides = [1, 1]} : vector<8x128xf32> to vector<8x32xf32>
    %304 = arith.negf %303 : vector<8x32xf32>
    %305 = math.exp %304 : vector<8x32xf32>
    %cst_56 = arith.constant 1.000000e+00 : f32
    %306 = vector.broadcast %cst_56 : f32 to vector<8x32xf32>
    %307 = arith.addf %306, %305 : vector<8x32xf32>
    %308 = arith.divf %306, %307 : vector<8x32xf32>
    %309 = vector.extract_strided_slice %296 {offsets = [0, 64], sizes = [8, 32], strides = [1, 1]} : vector<8x128xf32> to vector<8x32xf32>
    %310 = math.tanh %309 : vector<8x32xf32>
    %311 = vector.extract_strided_slice %296 {offsets = [0, 96], sizes = [8, 32], strides = [1, 1]} : vector<8x128xf32> to vector<8x32xf32>
    %312 = arith.negf %311 : vector<8x32xf32>
    %313 = math.exp %312 : vector<8x32xf32>
    %cst_57 = arith.constant 1.000000e+00 : f32
    %314 = vector.broadcast %cst_57 : f32 to vector<8x32xf32>
    %315 = arith.addf %314, %313 : vector<8x32xf32>
    %316 = arith.divf %314, %315 : vector<8x32xf32>
    %317 = arith.mulf %308, %291 : vector<8x32xf32>
    %318 = arith.mulf %302, %310 : vector<8x32xf32>
    %319 = arith.addf %317, %318 : vector<8x32xf32>
    %320 = math.tanh %319 : vector<8x32xf32>
    %321 = arith.mulf %316, %320 : vector<8x32xf32>
    %322 = vector.extract_strided_slice %5 {offsets = [32, 128], sizes = [8, 128], strides = [1, 1]} : vector<64x256xf32> to vector<8x128xf32>
    %cst_58 = arith.constant dense<0.000000e+00> : vector<8x128xf32>
    %323 = tpu.matmul %321, %235, %cst_58 {dimension_numbers = #tpu.dot_dimension_numbers<[1], [0], [0], [1], [0, 0, 1, 1], [], []>} : vector<8x32xf32>, vector<32x128xf32>, vector<8x128xf32> -> vector<8x128xf32>
    %324 = arith.addf %322, %323 : vector<8x128xf32>
    %325 = vector.extract_strided_slice %324 {offsets = [0, 0], sizes = [8, 32], strides = [1, 1]} : vector<8x128xf32> to vector<8x32xf32>
    %326 = arith.negf %325 : vector<8x32xf32>
    %327 = math.exp %326 : vector<8x32xf32>
    %cst_59 = arith.constant 1.000000e+00 : f32
    %328 = vector.broadcast %cst_59 : f32 to vector<8x32xf32>
    %329 = arith.addf %328, %327 : vector<8x32xf32>
    %330 = arith.divf %328, %329 : vector<8x32xf32>
    %331 = vector.extract_strided_slice %324 {offsets = [0, 32], sizes = [8, 32], strides = [1, 1]} : vector<8x128xf32> to vector<8x32xf32>
    %332 = arith.negf %331 : vector<8x32xf32>
    %333 = math.exp %332 : vector<8x32xf32>
    %cst_60 = arith.constant 1.000000e+00 : f32
    %334 = vector.broadcast %cst_60 : f32 to vector<8x32xf32>
    %335 = arith.addf %334, %333 : vector<8x32xf32>
    %336 = arith.divf %334, %335 : vector<8x32xf32>
    %337 = vector.extract_strided_slice %324 {offsets = [0, 64], sizes = [8, 32], strides = [1, 1]} : vector<8x128xf32> to vector<8x32xf32>
    %338 = math.tanh %337 : vector<8x32xf32>
    %339 = vector.extract_strided_slice %324 {offsets = [0, 96], sizes = [8, 32], strides = [1, 1]} : vector<8x128xf32> to vector<8x32xf32>
    %340 = arith.negf %339 : vector<8x32xf32>
    %341 = math.exp %340 : vector<8x32xf32>
    %cst_61 = arith.constant 1.000000e+00 : f32
    %342 = vector.broadcast %cst_61 : f32 to vector<8x32xf32>
    %343 = arith.addf %342, %341 : vector<8x32xf32>
    %344 = arith.divf %342, %343 : vector<8x32xf32>
    %345 = arith.mulf %336, %319 : vector<8x32xf32>
    %346 = arith.mulf %330, %338 : vector<8x32xf32>
    %347 = arith.addf %345, %346 : vector<8x32xf32>
    %348 = math.tanh %347 : vector<8x32xf32>
    %349 = arith.mulf %344, %348 : vector<8x32xf32>
    %350 = vector.extract_strided_slice %5 {offsets = [24, 128], sizes = [8, 128], strides = [1, 1]} : vector<64x256xf32> to vector<8x128xf32>
    %cst_62 = arith.constant dense<0.000000e+00> : vector<8x128xf32>
    %351 = tpu.matmul %349, %235, %cst_62 {dimension_numbers = #tpu.dot_dimension_numbers<[1], [0], [0], [1], [0, 0, 1, 1], [], []>} : vector<8x32xf32>, vector<32x128xf32>, vector<8x128xf32> -> vector<8x128xf32>
    %352 = arith.addf %350, %351 : vector<8x128xf32>
    %353 = vector.extract_strided_slice %352 {offsets = [0, 0], sizes = [8, 32], strides = [1, 1]} : vector<8x128xf32> to vector<8x32xf32>
    %354 = arith.negf %353 : vector<8x32xf32>
    %355 = math.exp %354 : vector<8x32xf32>
    %cst_63 = arith.constant 1.000000e+00 : f32
    %356 = vector.broadcast %cst_63 : f32 to vector<8x32xf32>
    %357 = arith.addf %356, %355 : vector<8x32xf32>
    %358 = arith.divf %356, %357 : vector<8x32xf32>
    %359 = vector.extract_strided_slice %352 {offsets = [0, 32], sizes = [8, 32], strides = [1, 1]} : vector<8x128xf32> to vector<8x32xf32>
    %360 = arith.negf %359 : vector<8x32xf32>
    %361 = math.exp %360 : vector<8x32xf32>
    %cst_64 = arith.constant 1.000000e+00 : f32
    %362 = vector.broadcast %cst_64 : f32 to vector<8x32xf32>
    %363 = arith.addf %362, %361 : vector<8x32xf32>
    %364 = arith.divf %362, %363 : vector<8x32xf32>
    %365 = vector.extract_strided_slice %352 {offsets = [0, 64], sizes = [8, 32], strides = [1, 1]} : vector<8x128xf32> to vector<8x32xf32>
    %366 = math.tanh %365 : vector<8x32xf32>
    %367 = vector.extract_strided_slice %352 {offsets = [0, 96], sizes = [8, 32], strides = [1, 1]} : vector<8x128xf32> to vector<8x32xf32>
    %368 = arith.negf %367 : vector<8x32xf32>
    %369 = math.exp %368 : vector<8x32xf32>
    %cst_65 = arith.constant 1.000000e+00 : f32
    %370 = vector.broadcast %cst_65 : f32 to vector<8x32xf32>
    %371 = arith.addf %370, %369 : vector<8x32xf32>
    %372 = arith.divf %370, %371 : vector<8x32xf32>
    %373 = arith.mulf %364, %347 : vector<8x32xf32>
    %374 = arith.mulf %358, %366 : vector<8x32xf32>
    %375 = arith.addf %373, %374 : vector<8x32xf32>
    %376 = math.tanh %375 : vector<8x32xf32>
    %377 = arith.mulf %372, %376 : vector<8x32xf32>
    %378 = vector.extract_strided_slice %5 {offsets = [16, 128], sizes = [8, 128], strides = [1, 1]} : vector<64x256xf32> to vector<8x128xf32>
    %cst_66 = arith.constant dense<0.000000e+00> : vector<8x128xf32>
    %379 = tpu.matmul %377, %235, %cst_66 {dimension_numbers = #tpu.dot_dimension_numbers<[1], [0], [0], [1], [0, 0, 1, 1], [], []>} : vector<8x32xf32>, vector<32x128xf32>, vector<8x128xf32> -> vector<8x128xf32>
    %380 = arith.addf %378, %379 : vector<8x128xf32>
    %381 = vector.extract_strided_slice %380 {offsets = [0, 0], sizes = [8, 32], strides = [1, 1]} : vector<8x128xf32> to vector<8x32xf32>
    %382 = arith.negf %381 : vector<8x32xf32>
    %383 = math.exp %382 : vector<8x32xf32>
    %cst_67 = arith.constant 1.000000e+00 : f32
    %384 = vector.broadcast %cst_67 : f32 to vector<8x32xf32>
    %385 = arith.addf %384, %383 : vector<8x32xf32>
    %386 = arith.divf %384, %385 : vector<8x32xf32>
    %387 = vector.extract_strided_slice %380 {offsets = [0, 32], sizes = [8, 32], strides = [1, 1]} : vector<8x128xf32> to vector<8x32xf32>
    %388 = arith.negf %387 : vector<8x32xf32>
    %389 = math.exp %388 : vector<8x32xf32>
    %cst_68 = arith.constant 1.000000e+00 : f32
    %390 = vector.broadcast %cst_68 : f32 to vector<8x32xf32>
    %391 = arith.addf %390, %389 : vector<8x32xf32>
    %392 = arith.divf %390, %391 : vector<8x32xf32>
    %393 = vector.extract_strided_slice %380 {offsets = [0, 64], sizes = [8, 32], strides = [1, 1]} : vector<8x128xf32> to vector<8x32xf32>
    %394 = math.tanh %393 : vector<8x32xf32>
    %395 = vector.extract_strided_slice %380 {offsets = [0, 96], sizes = [8, 32], strides = [1, 1]} : vector<8x128xf32> to vector<8x32xf32>
    %396 = arith.negf %395 : vector<8x32xf32>
    %397 = math.exp %396 : vector<8x32xf32>
    %cst_69 = arith.constant 1.000000e+00 : f32
    %398 = vector.broadcast %cst_69 : f32 to vector<8x32xf32>
    %399 = arith.addf %398, %397 : vector<8x32xf32>
    %400 = arith.divf %398, %399 : vector<8x32xf32>
    %401 = arith.mulf %392, %375 : vector<8x32xf32>
    %402 = arith.mulf %386, %394 : vector<8x32xf32>
    %403 = arith.addf %401, %402 : vector<8x32xf32>
    %404 = math.tanh %403 : vector<8x32xf32>
    %405 = arith.mulf %400, %404 : vector<8x32xf32>
    %406 = vector.extract_strided_slice %5 {offsets = [8, 128], sizes = [8, 128], strides = [1, 1]} : vector<64x256xf32> to vector<8x128xf32>
    %cst_70 = arith.constant dense<0.000000e+00> : vector<8x128xf32>
    %407 = tpu.matmul %405, %235, %cst_70 {dimension_numbers = #tpu.dot_dimension_numbers<[1], [0], [0], [1], [0, 0, 1, 1], [], []>} : vector<8x32xf32>, vector<32x128xf32>, vector<8x128xf32> -> vector<8x128xf32>
    %408 = arith.addf %406, %407 : vector<8x128xf32>
    %409 = vector.extract_strided_slice %408 {offsets = [0, 0], sizes = [8, 32], strides = [1, 1]} : vector<8x128xf32> to vector<8x32xf32>
    %410 = arith.negf %409 : vector<8x32xf32>
    %411 = math.exp %410 : vector<8x32xf32>
    %cst_71 = arith.constant 1.000000e+00 : f32
    %412 = vector.broadcast %cst_71 : f32 to vector<8x32xf32>
    %413 = arith.addf %412, %411 : vector<8x32xf32>
    %414 = arith.divf %412, %413 : vector<8x32xf32>
    %415 = vector.extract_strided_slice %408 {offsets = [0, 32], sizes = [8, 32], strides = [1, 1]} : vector<8x128xf32> to vector<8x32xf32>
    %416 = arith.negf %415 : vector<8x32xf32>
    %417 = math.exp %416 : vector<8x32xf32>
    %cst_72 = arith.constant 1.000000e+00 : f32
    %418 = vector.broadcast %cst_72 : f32 to vector<8x32xf32>
    %419 = arith.addf %418, %417 : vector<8x32xf32>
    %420 = arith.divf %418, %419 : vector<8x32xf32>
    %421 = vector.extract_strided_slice %408 {offsets = [0, 64], sizes = [8, 32], strides = [1, 1]} : vector<8x128xf32> to vector<8x32xf32>
    %422 = math.tanh %421 : vector<8x32xf32>
    %423 = vector.extract_strided_slice %408 {offsets = [0, 96], sizes = [8, 32], strides = [1, 1]} : vector<8x128xf32> to vector<8x32xf32>
    %424 = arith.negf %423 : vector<8x32xf32>
    %425 = math.exp %424 : vector<8x32xf32>
    %cst_73 = arith.constant 1.000000e+00 : f32
    %426 = vector.broadcast %cst_73 : f32 to vector<8x32xf32>
    %427 = arith.addf %426, %425 : vector<8x32xf32>
    %428 = arith.divf %426, %427 : vector<8x32xf32>
    %429 = arith.mulf %420, %403 : vector<8x32xf32>
    %430 = arith.mulf %414, %422 : vector<8x32xf32>
    %431 = arith.addf %429, %430 : vector<8x32xf32>
    %432 = math.tanh %431 : vector<8x32xf32>
    %433 = arith.mulf %428, %432 : vector<8x32xf32>
    %434 = vector.extract_strided_slice %5 {offsets = [0, 128], sizes = [8, 128], strides = [1, 1]} : vector<64x256xf32> to vector<8x128xf32>
    %cst_74 = arith.constant dense<0.000000e+00> : vector<8x128xf32>
    %435 = tpu.matmul %433, %235, %cst_74 {dimension_numbers = #tpu.dot_dimension_numbers<[1], [0], [0], [1], [0, 0, 1, 1], [], []>} : vector<8x32xf32>, vector<32x128xf32>, vector<8x128xf32> -> vector<8x128xf32>
    %436 = arith.addf %434, %435 : vector<8x128xf32>
    %437 = vector.extract_strided_slice %436 {offsets = [0, 0], sizes = [8, 32], strides = [1, 1]} : vector<8x128xf32> to vector<8x32xf32>
    %438 = arith.negf %437 : vector<8x32xf32>
    %439 = math.exp %438 : vector<8x32xf32>
    %cst_75 = arith.constant 1.000000e+00 : f32
    %440 = vector.broadcast %cst_75 : f32 to vector<8x32xf32>
    %441 = arith.addf %440, %439 : vector<8x32xf32>
    %442 = arith.divf %440, %441 : vector<8x32xf32>
    %443 = vector.extract_strided_slice %436 {offsets = [0, 32], sizes = [8, 32], strides = [1, 1]} : vector<8x128xf32> to vector<8x32xf32>
    %444 = arith.negf %443 : vector<8x32xf32>
    %445 = math.exp %444 : vector<8x32xf32>
    %cst_76 = arith.constant 1.000000e+00 : f32
    %446 = vector.broadcast %cst_76 : f32 to vector<8x32xf32>
    %447 = arith.addf %446, %445 : vector<8x32xf32>
    %448 = arith.divf %446, %447 : vector<8x32xf32>
    %449 = vector.extract_strided_slice %436 {offsets = [0, 64], sizes = [8, 32], strides = [1, 1]} : vector<8x128xf32> to vector<8x32xf32>
    %450 = math.tanh %449 : vector<8x32xf32>
    %451 = vector.extract_strided_slice %436 {offsets = [0, 96], sizes = [8, 32], strides = [1, 1]} : vector<8x128xf32> to vector<8x32xf32>
    %452 = arith.negf %451 : vector<8x32xf32>
    %453 = math.exp %452 : vector<8x32xf32>
    %cst_77 = arith.constant 1.000000e+00 : f32
    %454 = vector.broadcast %cst_77 : f32 to vector<8x32xf32>
    %455 = arith.addf %454, %453 : vector<8x32xf32>
    %456 = arith.divf %454, %455 : vector<8x32xf32>
    %457 = arith.mulf %448, %431 : vector<8x32xf32>
    %458 = arith.mulf %442, %450 : vector<8x32xf32>
    %459 = arith.addf %457, %458 : vector<8x32xf32>
    %460 = math.tanh %459 : vector<8x32xf32>
    %461 = arith.mulf %456, %460 : vector<8x32xf32>
    %462 = tpu.concatenate %37, %65, %93, %121, %149, %177, %205, %233 in 0 : vector<8x32xf32>, vector<8x32xf32>, vector<8x32xf32>, vector<8x32xf32>, vector<8x32xf32>, vector<8x32xf32>, vector<8x32xf32>, vector<8x32xf32> -> vector<64x32xf32>
    %463 = tpu.concatenate %461, %433, %405, %377, %349, %321, %293, %265 in 0 : vector<8x32xf32>, vector<8x32xf32>, vector<8x32xf32>, vector<8x32xf32>, vector<8x32xf32>, vector<8x32xf32>, vector<8x32xf32>, vector<8x32xf32> -> vector<64x32xf32>
    %464 = tpu.concatenate %462, %463 in 1 : vector<64x32xf32>, vector<64x32xf32> -> vector<64x64xf32>
    %c0_78 = arith.constant 0 : index
    %c0_79 = arith.constant 0 : index
    %465 = vector.load %arg4[%c0_78, %c0_79] : memref<64x256xf32, #tpu.memory_space<vmem>>, vector<64x256xf32>
    %cst_80 = arith.constant dense<0.000000e+00> : vector<64x256xf32>
    %466 = tpu.matmul %464, %465, %cst_80 {dimension_numbers = #tpu.dot_dimension_numbers<[1], [0], [0], [1], [0, 0, 1, 1], [], []>} : vector<64x64xf32>, vector<64x256xf32>, vector<64x256xf32> -> vector<64x256xf32>
    %c0_81 = arith.constant 0 : index
    %c0_82 = arith.constant 0 : index
    %467 = vector.load %arg6[%c0_81, %c0_82] : memref<1x256xf32, #tpu.memory_space<vmem>>, vector<1x256xf32>
    %468 = vector.broadcast %467 : vector<1x256xf32> to vector<64x256xf32>
    %469 = arith.addf %466, %468 : vector<64x256xf32>
    %c0_83 = arith.constant 0 : index
    %c0_84 = arith.constant 0 : index
    %c0_85 = arith.constant 0 : index
    %470 = vector.load %arg5[%c0_83, %c0_84, %c0_85] : memref<2x32x128xf32, #tpu.memory_space<vmem>>, vector<1x32x128xf32>
    %471 = vector.shape_cast %470 : vector<1x32x128xf32> to vector<32x128xf32>
    %cst_86 = arith.constant 0.000000e+00 : f32
    %472 = vector.broadcast %cst_86 : f32 to vector<8x32xf32>
    %cst_87 = arith.constant 0.000000e+00 : f32
    %473 = vector.broadcast %cst_87 : f32 to vector<8x32xf32>
    %474 = vector.extract_strided_slice %469 {offsets = [0, 0], sizes = [8, 128], strides = [1, 1]} : vector<64x256xf32> to vector<8x128xf32>
    %cst_88 = arith.constant dense<0.000000e+00> : vector<8x128xf32>
    %475 = tpu.matmul %472, %471, %cst_88 {dimension_numbers = #tpu.dot_dimension_numbers<[1], [0], [0], [1], [0, 0, 1, 1], [], []>} : vector<8x32xf32>, vector<32x128xf32>, vector<8x128xf32> -> vector<8x128xf32>
    %476 = arith.addf %474, %475 : vector<8x128xf32>
    %477 = vector.extract_strided_slice %476 {offsets = [0, 0], sizes = [8, 32], strides = [1, 1]} : vector<8x128xf32> to vector<8x32xf32>
    %478 = arith.negf %477 : vector<8x32xf32>
    %479 = math.exp %478 : vector<8x32xf32>
    %cst_89 = arith.constant 1.000000e+00 : f32
    %480 = vector.broadcast %cst_89 : f32 to vector<8x32xf32>
    %481 = arith.addf %480, %479 : vector<8x32xf32>
    %482 = arith.divf %480, %481 : vector<8x32xf32>
    %483 = vector.extract_strided_slice %476 {offsets = [0, 32], sizes = [8, 32], strides = [1, 1]} : vector<8x128xf32> to vector<8x32xf32>
    %484 = arith.negf %483 : vector<8x32xf32>
    %485 = math.exp %484 : vector<8x32xf32>
    %cst_90 = arith.constant 1.000000e+00 : f32
    %486 = vector.broadcast %cst_90 : f32 to vector<8x32xf32>
    %487 = arith.addf %486, %485 : vector<8x32xf32>
    %488 = arith.divf %486, %487 : vector<8x32xf32>
    %489 = vector.extract_strided_slice %476 {offsets = [0, 64], sizes = [8, 32], strides = [1, 1]} : vector<8x128xf32> to vector<8x32xf32>
    %490 = math.tanh %489 : vector<8x32xf32>
    %491 = vector.extract_strided_slice %476 {offsets = [0, 96], sizes = [8, 32], strides = [1, 1]} : vector<8x128xf32> to vector<8x32xf32>
    %492 = arith.negf %491 : vector<8x32xf32>
    %493 = math.exp %492 : vector<8x32xf32>
    %cst_91 = arith.constant 1.000000e+00 : f32
    %494 = vector.broadcast %cst_91 : f32 to vector<8x32xf32>
    %495 = arith.addf %494, %493 : vector<8x32xf32>
    %496 = arith.divf %494, %495 : vector<8x32xf32>
    %497 = arith.mulf %488, %473 : vector<8x32xf32>
    %498 = arith.mulf %482, %490 : vector<8x32xf32>
    %499 = arith.addf %497, %498 : vector<8x32xf32>
    %500 = math.tanh %499 : vector<8x32xf32>
    %501 = arith.mulf %496, %500 : vector<8x32xf32>
    %502 = vector.extract_strided_slice %469 {offsets = [8, 0], sizes = [8, 128], strides = [1, 1]} : vector<64x256xf32> to vector<8x128xf32>
    %cst_92 = arith.constant dense<0.000000e+00> : vector<8x128xf32>
    %503 = tpu.matmul %501, %471, %cst_92 {dimension_numbers = #tpu.dot_dimension_numbers<[1], [0], [0], [1], [0, 0, 1, 1], [], []>} : vector<8x32xf32>, vector<32x128xf32>, vector<8x128xf32> -> vector<8x128xf32>
    %504 = arith.addf %502, %503 : vector<8x128xf32>
    %505 = vector.extract_strided_slice %504 {offsets = [0, 0], sizes = [8, 32], strides = [1, 1]} : vector<8x128xf32> to vector<8x32xf32>
    %506 = arith.negf %505 : vector<8x32xf32>
    %507 = math.exp %506 : vector<8x32xf32>
    %cst_93 = arith.constant 1.000000e+00 : f32
    %508 = vector.broadcast %cst_93 : f32 to vector<8x32xf32>
    %509 = arith.addf %508, %507 : vector<8x32xf32>
    %510 = arith.divf %508, %509 : vector<8x32xf32>
    %511 = vector.extract_strided_slice %504 {offsets = [0, 32], sizes = [8, 32], strides = [1, 1]} : vector<8x128xf32> to vector<8x32xf32>
    %512 = arith.negf %511 : vector<8x32xf32>
    %513 = math.exp %512 : vector<8x32xf32>
    %cst_94 = arith.constant 1.000000e+00 : f32
    %514 = vector.broadcast %cst_94 : f32 to vector<8x32xf32>
    %515 = arith.addf %514, %513 : vector<8x32xf32>
    %516 = arith.divf %514, %515 : vector<8x32xf32>
    %517 = vector.extract_strided_slice %504 {offsets = [0, 64], sizes = [8, 32], strides = [1, 1]} : vector<8x128xf32> to vector<8x32xf32>
    %518 = math.tanh %517 : vector<8x32xf32>
    %519 = vector.extract_strided_slice %504 {offsets = [0, 96], sizes = [8, 32], strides = [1, 1]} : vector<8x128xf32> to vector<8x32xf32>
    %520 = arith.negf %519 : vector<8x32xf32>
    %521 = math.exp %520 : vector<8x32xf32>
    %cst_95 = arith.constant 1.000000e+00 : f32
    %522 = vector.broadcast %cst_95 : f32 to vector<8x32xf32>
    %523 = arith.addf %522, %521 : vector<8x32xf32>
    %524 = arith.divf %522, %523 : vector<8x32xf32>
    %525 = arith.mulf %516, %499 : vector<8x32xf32>
    %526 = arith.mulf %510, %518 : vector<8x32xf32>
    %527 = arith.addf %525, %526 : vector<8x32xf32>
    %528 = math.tanh %527 : vector<8x32xf32>
    %529 = arith.mulf %524, %528 : vector<8x32xf32>
    %530 = vector.extract_strided_slice %469 {offsets = [16, 0], sizes = [8, 128], strides = [1, 1]} : vector<64x256xf32> to vector<8x128xf32>
    %cst_96 = arith.constant dense<0.000000e+00> : vector<8x128xf32>
    %531 = tpu.matmul %529, %471, %cst_96 {dimension_numbers = #tpu.dot_dimension_numbers<[1], [0], [0], [1], [0, 0, 1, 1], [], []>} : vector<8x32xf32>, vector<32x128xf32>, vector<8x128xf32> -> vector<8x128xf32>
    %532 = arith.addf %530, %531 : vector<8x128xf32>
    %533 = vector.extract_strided_slice %532 {offsets = [0, 0], sizes = [8, 32], strides = [1, 1]} : vector<8x128xf32> to vector<8x32xf32>
    %534 = arith.negf %533 : vector<8x32xf32>
    %535 = math.exp %534 : vector<8x32xf32>
    %cst_97 = arith.constant 1.000000e+00 : f32
    %536 = vector.broadcast %cst_97 : f32 to vector<8x32xf32>
    %537 = arith.addf %536, %535 : vector<8x32xf32>
    %538 = arith.divf %536, %537 : vector<8x32xf32>
    %539 = vector.extract_strided_slice %532 {offsets = [0, 32], sizes = [8, 32], strides = [1, 1]} : vector<8x128xf32> to vector<8x32xf32>
    %540 = arith.negf %539 : vector<8x32xf32>
    %541 = math.exp %540 : vector<8x32xf32>
    %cst_98 = arith.constant 1.000000e+00 : f32
    %542 = vector.broadcast %cst_98 : f32 to vector<8x32xf32>
    %543 = arith.addf %542, %541 : vector<8x32xf32>
    %544 = arith.divf %542, %543 : vector<8x32xf32>
    %545 = vector.extract_strided_slice %532 {offsets = [0, 64], sizes = [8, 32], strides = [1, 1]} : vector<8x128xf32> to vector<8x32xf32>
    %546 = math.tanh %545 : vector<8x32xf32>
    %547 = vector.extract_strided_slice %532 {offsets = [0, 96], sizes = [8, 32], strides = [1, 1]} : vector<8x128xf32> to vector<8x32xf32>
    %548 = arith.negf %547 : vector<8x32xf32>
    %549 = math.exp %548 : vector<8x32xf32>
    %cst_99 = arith.constant 1.000000e+00 : f32
    %550 = vector.broadcast %cst_99 : f32 to vector<8x32xf32>
    %551 = arith.addf %550, %549 : vector<8x32xf32>
    %552 = arith.divf %550, %551 : vector<8x32xf32>
    %553 = arith.mulf %544, %527 : vector<8x32xf32>
    %554 = arith.mulf %538, %546 : vector<8x32xf32>
    %555 = arith.addf %553, %554 : vector<8x32xf32>
    %556 = math.tanh %555 : vector<8x32xf32>
    %557 = arith.mulf %552, %556 : vector<8x32xf32>
    %558 = vector.extract_strided_slice %469 {offsets = [24, 0], sizes = [8, 128], strides = [1, 1]} : vector<64x256xf32> to vector<8x128xf32>
    %cst_100 = arith.constant dense<0.000000e+00> : vector<8x128xf32>
    %559 = tpu.matmul %557, %471, %cst_100 {dimension_numbers = #tpu.dot_dimension_numbers<[1], [0], [0], [1], [0, 0, 1, 1], [], []>} : vector<8x32xf32>, vector<32x128xf32>, vector<8x128xf32> -> vector<8x128xf32>
    %560 = arith.addf %558, %559 : vector<8x128xf32>
    %561 = vector.extract_strided_slice %560 {offsets = [0, 0], sizes = [8, 32], strides = [1, 1]} : vector<8x128xf32> to vector<8x32xf32>
    %562 = arith.negf %561 : vector<8x32xf32>
    %563 = math.exp %562 : vector<8x32xf32>
    %cst_101 = arith.constant 1.000000e+00 : f32
    %564 = vector.broadcast %cst_101 : f32 to vector<8x32xf32>
    %565 = arith.addf %564, %563 : vector<8x32xf32>
    %566 = arith.divf %564, %565 : vector<8x32xf32>
    %567 = vector.extract_strided_slice %560 {offsets = [0, 32], sizes = [8, 32], strides = [1, 1]} : vector<8x128xf32> to vector<8x32xf32>
    %568 = arith.negf %567 : vector<8x32xf32>
    %569 = math.exp %568 : vector<8x32xf32>
    %cst_102 = arith.constant 1.000000e+00 : f32
    %570 = vector.broadcast %cst_102 : f32 to vector<8x32xf32>
    %571 = arith.addf %570, %569 : vector<8x32xf32>
    %572 = arith.divf %570, %571 : vector<8x32xf32>
    %573 = vector.extract_strided_slice %560 {offsets = [0, 64], sizes = [8, 32], strides = [1, 1]} : vector<8x128xf32> to vector<8x32xf32>
    %574 = math.tanh %573 : vector<8x32xf32>
    %575 = vector.extract_strided_slice %560 {offsets = [0, 96], sizes = [8, 32], strides = [1, 1]} : vector<8x128xf32> to vector<8x32xf32>
    %576 = arith.negf %575 : vector<8x32xf32>
    %577 = math.exp %576 : vector<8x32xf32>
    %cst_103 = arith.constant 1.000000e+00 : f32
    %578 = vector.broadcast %cst_103 : f32 to vector<8x32xf32>
    %579 = arith.addf %578, %577 : vector<8x32xf32>
    %580 = arith.divf %578, %579 : vector<8x32xf32>
    %581 = arith.mulf %572, %555 : vector<8x32xf32>
    %582 = arith.mulf %566, %574 : vector<8x32xf32>
    %583 = arith.addf %581, %582 : vector<8x32xf32>
    %584 = math.tanh %583 : vector<8x32xf32>
    %585 = arith.mulf %580, %584 : vector<8x32xf32>
    %586 = vector.extract_strided_slice %469 {offsets = [32, 0], sizes = [8, 128], strides = [1, 1]} : vector<64x256xf32> to vector<8x128xf32>
    %cst_104 = arith.constant dense<0.000000e+00> : vector<8x128xf32>
    %587 = tpu.matmul %585, %471, %cst_104 {dimension_numbers = #tpu.dot_dimension_numbers<[1], [0], [0], [1], [0, 0, 1, 1], [], []>} : vector<8x32xf32>, vector<32x128xf32>, vector<8x128xf32> -> vector<8x128xf32>
    %588 = arith.addf %586, %587 : vector<8x128xf32>
    %589 = vector.extract_strided_slice %588 {offsets = [0, 0], sizes = [8, 32], strides = [1, 1]} : vector<8x128xf32> to vector<8x32xf32>
    %590 = arith.negf %589 : vector<8x32xf32>
    %591 = math.exp %590 : vector<8x32xf32>
    %cst_105 = arith.constant 1.000000e+00 : f32
    %592 = vector.broadcast %cst_105 : f32 to vector<8x32xf32>
    %593 = arith.addf %592, %591 : vector<8x32xf32>
    %594 = arith.divf %592, %593 : vector<8x32xf32>
    %595 = vector.extract_strided_slice %588 {offsets = [0, 32], sizes = [8, 32], strides = [1, 1]} : vector<8x128xf32> to vector<8x32xf32>
    %596 = arith.negf %595 : vector<8x32xf32>
    %597 = math.exp %596 : vector<8x32xf32>
    %cst_106 = arith.constant 1.000000e+00 : f32
    %598 = vector.broadcast %cst_106 : f32 to vector<8x32xf32>
    %599 = arith.addf %598, %597 : vector<8x32xf32>
    %600 = arith.divf %598, %599 : vector<8x32xf32>
    %601 = vector.extract_strided_slice %588 {offsets = [0, 64], sizes = [8, 32], strides = [1, 1]} : vector<8x128xf32> to vector<8x32xf32>
    %602 = math.tanh %601 : vector<8x32xf32>
    %603 = vector.extract_strided_slice %588 {offsets = [0, 96], sizes = [8, 32], strides = [1, 1]} : vector<8x128xf32> to vector<8x32xf32>
    %604 = arith.negf %603 : vector<8x32xf32>
    %605 = math.exp %604 : vector<8x32xf32>
    %cst_107 = arith.constant 1.000000e+00 : f32
    %606 = vector.broadcast %cst_107 : f32 to vector<8x32xf32>
    %607 = arith.addf %606, %605 : vector<8x32xf32>
    %608 = arith.divf %606, %607 : vector<8x32xf32>
    %609 = arith.mulf %600, %583 : vector<8x32xf32>
    %610 = arith.mulf %594, %602 : vector<8x32xf32>
    %611 = arith.addf %609, %610 : vector<8x32xf32>
    %612 = math.tanh %611 : vector<8x32xf32>
    %613 = arith.mulf %608, %612 : vector<8x32xf32>
    %614 = vector.extract_strided_slice %469 {offsets = [40, 0], sizes = [8, 128], strides = [1, 1]} : vector<64x256xf32> to vector<8x128xf32>
    %cst_108 = arith.constant dense<0.000000e+00> : vector<8x128xf32>
    %615 = tpu.matmul %613, %471, %cst_108 {dimension_numbers = #tpu.dot_dimension_numbers<[1], [0], [0], [1], [0, 0, 1, 1], [], []>} : vector<8x32xf32>, vector<32x128xf32>, vector<8x128xf32> -> vector<8x128xf32>
    %616 = arith.addf %614, %615 : vector<8x128xf32>
    %617 = vector.extract_strided_slice %616 {offsets = [0, 0], sizes = [8, 32], strides = [1, 1]} : vector<8x128xf32> to vector<8x32xf32>
    %618 = arith.negf %617 : vector<8x32xf32>
    %619 = math.exp %618 : vector<8x32xf32>
    %cst_109 = arith.constant 1.000000e+00 : f32
    %620 = vector.broadcast %cst_109 : f32 to vector<8x32xf32>
    %621 = arith.addf %620, %619 : vector<8x32xf32>
    %622 = arith.divf %620, %621 : vector<8x32xf32>
    %623 = vector.extract_strided_slice %616 {offsets = [0, 32], sizes = [8, 32], strides = [1, 1]} : vector<8x128xf32> to vector<8x32xf32>
    %624 = arith.negf %623 : vector<8x32xf32>
    %625 = math.exp %624 : vector<8x32xf32>
    %cst_110 = arith.constant 1.000000e+00 : f32
    %626 = vector.broadcast %cst_110 : f32 to vector<8x32xf32>
    %627 = arith.addf %626, %625 : vector<8x32xf32>
    %628 = arith.divf %626, %627 : vector<8x32xf32>
    %629 = vector.extract_strided_slice %616 {offsets = [0, 64], sizes = [8, 32], strides = [1, 1]} : vector<8x128xf32> to vector<8x32xf32>
    %630 = math.tanh %629 : vector<8x32xf32>
    %631 = vector.extract_strided_slice %616 {offsets = [0, 96], sizes = [8, 32], strides = [1, 1]} : vector<8x128xf32> to vector<8x32xf32>
    %632 = arith.negf %631 : vector<8x32xf32>
    %633 = math.exp %632 : vector<8x32xf32>
    %cst_111 = arith.constant 1.000000e+00 : f32
    %634 = vector.broadcast %cst_111 : f32 to vector<8x32xf32>
    %635 = arith.addf %634, %633 : vector<8x32xf32>
    %636 = arith.divf %634, %635 : vector<8x32xf32>
    %637 = arith.mulf %628, %611 : vector<8x32xf32>
    %638 = arith.mulf %622, %630 : vector<8x32xf32>
    %639 = arith.addf %637, %638 : vector<8x32xf32>
    %640 = math.tanh %639 : vector<8x32xf32>
    %641 = arith.mulf %636, %640 : vector<8x32xf32>
    %642 = vector.extract_strided_slice %469 {offsets = [48, 0], sizes = [8, 128], strides = [1, 1]} : vector<64x256xf32> to vector<8x128xf32>
    %cst_112 = arith.constant dense<0.000000e+00> : vector<8x128xf32>
    %643 = tpu.matmul %641, %471, %cst_112 {dimension_numbers = #tpu.dot_dimension_numbers<[1], [0], [0], [1], [0, 0, 1, 1], [], []>} : vector<8x32xf32>, vector<32x128xf32>, vector<8x128xf32> -> vector<8x128xf32>
    %644 = arith.addf %642, %643 : vector<8x128xf32>
    %645 = vector.extract_strided_slice %644 {offsets = [0, 0], sizes = [8, 32], strides = [1, 1]} : vector<8x128xf32> to vector<8x32xf32>
    %646 = arith.negf %645 : vector<8x32xf32>
    %647 = math.exp %646 : vector<8x32xf32>
    %cst_113 = arith.constant 1.000000e+00 : f32
    %648 = vector.broadcast %cst_113 : f32 to vector<8x32xf32>
    %649 = arith.addf %648, %647 : vector<8x32xf32>
    %650 = arith.divf %648, %649 : vector<8x32xf32>
    %651 = vector.extract_strided_slice %644 {offsets = [0, 32], sizes = [8, 32], strides = [1, 1]} : vector<8x128xf32> to vector<8x32xf32>
    %652 = arith.negf %651 : vector<8x32xf32>
    %653 = math.exp %652 : vector<8x32xf32>
    %cst_114 = arith.constant 1.000000e+00 : f32
    %654 = vector.broadcast %cst_114 : f32 to vector<8x32xf32>
    %655 = arith.addf %654, %653 : vector<8x32xf32>
    %656 = arith.divf %654, %655 : vector<8x32xf32>
    %657 = vector.extract_strided_slice %644 {offsets = [0, 64], sizes = [8, 32], strides = [1, 1]} : vector<8x128xf32> to vector<8x32xf32>
    %658 = math.tanh %657 : vector<8x32xf32>
    %659 = vector.extract_strided_slice %644 {offsets = [0, 96], sizes = [8, 32], strides = [1, 1]} : vector<8x128xf32> to vector<8x32xf32>
    %660 = arith.negf %659 : vector<8x32xf32>
    %661 = math.exp %660 : vector<8x32xf32>
    %cst_115 = arith.constant 1.000000e+00 : f32
    %662 = vector.broadcast %cst_115 : f32 to vector<8x32xf32>
    %663 = arith.addf %662, %661 : vector<8x32xf32>
    %664 = arith.divf %662, %663 : vector<8x32xf32>
    %665 = arith.mulf %656, %639 : vector<8x32xf32>
    %666 = arith.mulf %650, %658 : vector<8x32xf32>
    %667 = arith.addf %665, %666 : vector<8x32xf32>
    %668 = math.tanh %667 : vector<8x32xf32>
    %669 = arith.mulf %664, %668 : vector<8x32xf32>
    %670 = vector.extract_strided_slice %469 {offsets = [56, 0], sizes = [8, 128], strides = [1, 1]} : vector<64x256xf32> to vector<8x128xf32>
    %cst_116 = arith.constant dense<0.000000e+00> : vector<8x128xf32>
    %671 = tpu.matmul %669, %471, %cst_116 {dimension_numbers = #tpu.dot_dimension_numbers<[1], [0], [0], [1], [0, 0, 1, 1], [], []>} : vector<8x32xf32>, vector<32x128xf32>, vector<8x128xf32> -> vector<8x128xf32>
    %672 = arith.addf %670, %671 : vector<8x128xf32>
    %673 = vector.extract_strided_slice %672 {offsets = [0, 0], sizes = [8, 32], strides = [1, 1]} : vector<8x128xf32> to vector<8x32xf32>
    %674 = arith.negf %673 : vector<8x32xf32>
    %675 = math.exp %674 : vector<8x32xf32>
    %cst_117 = arith.constant 1.000000e+00 : f32
    %676 = vector.broadcast %cst_117 : f32 to vector<8x32xf32>
    %677 = arith.addf %676, %675 : vector<8x32xf32>
    %678 = arith.divf %676, %677 : vector<8x32xf32>
    %679 = vector.extract_strided_slice %672 {offsets = [0, 32], sizes = [8, 32], strides = [1, 1]} : vector<8x128xf32> to vector<8x32xf32>
    %680 = arith.negf %679 : vector<8x32xf32>
    %681 = math.exp %680 : vector<8x32xf32>
    %cst_118 = arith.constant 1.000000e+00 : f32
    %682 = vector.broadcast %cst_118 : f32 to vector<8x32xf32>
    %683 = arith.addf %682, %681 : vector<8x32xf32>
    %684 = arith.divf %682, %683 : vector<8x32xf32>
    %685 = vector.extract_strided_slice %672 {offsets = [0, 64], sizes = [8, 32], strides = [1, 1]} : vector<8x128xf32> to vector<8x32xf32>
    %686 = math.tanh %685 : vector<8x32xf32>
    %687 = vector.extract_strided_slice %672 {offsets = [0, 96], sizes = [8, 32], strides = [1, 1]} : vector<8x128xf32> to vector<8x32xf32>
    %688 = arith.negf %687 : vector<8x32xf32>
    %689 = math.exp %688 : vector<8x32xf32>
    %cst_119 = arith.constant 1.000000e+00 : f32
    %690 = vector.broadcast %cst_119 : f32 to vector<8x32xf32>
    %691 = arith.addf %690, %689 : vector<8x32xf32>
    %692 = arith.divf %690, %691 : vector<8x32xf32>
    %693 = arith.mulf %684, %667 : vector<8x32xf32>
    %694 = arith.mulf %678, %686 : vector<8x32xf32>
    %695 = arith.addf %693, %694 : vector<8x32xf32>
    %696 = math.tanh %695 : vector<8x32xf32>
    %697 = arith.mulf %692, %696 : vector<8x32xf32>
    %c1_120 = arith.constant 1 : index
    %c0_121 = arith.constant 0 : index
    %c0_122 = arith.constant 0 : index
    %698 = vector.load %arg5[%c1_120, %c0_121, %c0_122] : memref<2x32x128xf32, #tpu.memory_space<vmem>>, vector<1x32x128xf32>
    %699 = vector.shape_cast %698 : vector<1x32x128xf32> to vector<32x128xf32>
    %cst_123 = arith.constant 0.000000e+00 : f32
    %700 = vector.broadcast %cst_123 : f32 to vector<8x32xf32>
    %cst_124 = arith.constant 0.000000e+00 : f32
    %701 = vector.broadcast %cst_124 : f32 to vector<8x32xf32>
    %702 = vector.extract_strided_slice %469 {offsets = [56, 128], sizes = [8, 128], strides = [1, 1]} : vector<64x256xf32> to vector<8x128xf32>
    %cst_125 = arith.constant dense<0.000000e+00> : vector<8x128xf32>
    %703 = tpu.matmul %700, %699, %cst_125 {dimension_numbers = #tpu.dot_dimension_numbers<[1], [0], [0], [1], [0, 0, 1, 1], [], []>} : vector<8x32xf32>, vector<32x128xf32>, vector<8x128xf32> -> vector<8x128xf32>
    %704 = arith.addf %702, %703 : vector<8x128xf32>
    %705 = vector.extract_strided_slice %704 {offsets = [0, 0], sizes = [8, 32], strides = [1, 1]} : vector<8x128xf32> to vector<8x32xf32>
    %706 = arith.negf %705 : vector<8x32xf32>
    %707 = math.exp %706 : vector<8x32xf32>
    %cst_126 = arith.constant 1.000000e+00 : f32
    %708 = vector.broadcast %cst_126 : f32 to vector<8x32xf32>
    %709 = arith.addf %708, %707 : vector<8x32xf32>
    %710 = arith.divf %708, %709 : vector<8x32xf32>
    %711 = vector.extract_strided_slice %704 {offsets = [0, 32], sizes = [8, 32], strides = [1, 1]} : vector<8x128xf32> to vector<8x32xf32>
    %712 = arith.negf %711 : vector<8x32xf32>
    %713 = math.exp %712 : vector<8x32xf32>
    %cst_127 = arith.constant 1.000000e+00 : f32
    %714 = vector.broadcast %cst_127 : f32 to vector<8x32xf32>
    %715 = arith.addf %714, %713 : vector<8x32xf32>
    %716 = arith.divf %714, %715 : vector<8x32xf32>
    %717 = vector.extract_strided_slice %704 {offsets = [0, 64], sizes = [8, 32], strides = [1, 1]} : vector<8x128xf32> to vector<8x32xf32>
    %718 = math.tanh %717 : vector<8x32xf32>
    %719 = vector.extract_strided_slice %704 {offsets = [0, 96], sizes = [8, 32], strides = [1, 1]} : vector<8x128xf32> to vector<8x32xf32>
    %720 = arith.negf %719 : vector<8x32xf32>
    %721 = math.exp %720 : vector<8x32xf32>
    %cst_128 = arith.constant 1.000000e+00 : f32
    %722 = vector.broadcast %cst_128 : f32 to vector<8x32xf32>
    %723 = arith.addf %722, %721 : vector<8x32xf32>
    %724 = arith.divf %722, %723 : vector<8x32xf32>
    %725 = arith.mulf %716, %701 : vector<8x32xf32>
    %726 = arith.mulf %710, %718 : vector<8x32xf32>
    %727 = arith.addf %725, %726 : vector<8x32xf32>
    %728 = math.tanh %727 : vector<8x32xf32>
    %729 = arith.mulf %724, %728 : vector<8x32xf32>
    %730 = vector.extract_strided_slice %469 {offsets = [48, 128], sizes = [8, 128], strides = [1, 1]} : vector<64x256xf32> to vector<8x128xf32>
    %cst_129 = arith.constant dense<0.000000e+00> : vector<8x128xf32>
    %731 = tpu.matmul %729, %699, %cst_129 {dimension_numbers = #tpu.dot_dimension_numbers<[1], [0], [0], [1], [0, 0, 1, 1], [], []>} : vector<8x32xf32>, vector<32x128xf32>, vector<8x128xf32> -> vector<8x128xf32>
    %732 = arith.addf %730, %731 : vector<8x128xf32>
    %733 = vector.extract_strided_slice %732 {offsets = [0, 0], sizes = [8, 32], strides = [1, 1]} : vector<8x128xf32> to vector<8x32xf32>
    %734 = arith.negf %733 : vector<8x32xf32>
    %735 = math.exp %734 : vector<8x32xf32>
    %cst_130 = arith.constant 1.000000e+00 : f32
    %736 = vector.broadcast %cst_130 : f32 to vector<8x32xf32>
    %737 = arith.addf %736, %735 : vector<8x32xf32>
    %738 = arith.divf %736, %737 : vector<8x32xf32>
    %739 = vector.extract_strided_slice %732 {offsets = [0, 32], sizes = [8, 32], strides = [1, 1]} : vector<8x128xf32> to vector<8x32xf32>
    %740 = arith.negf %739 : vector<8x32xf32>
    %741 = math.exp %740 : vector<8x32xf32>
    %cst_131 = arith.constant 1.000000e+00 : f32
    %742 = vector.broadcast %cst_131 : f32 to vector<8x32xf32>
    %743 = arith.addf %742, %741 : vector<8x32xf32>
    %744 = arith.divf %742, %743 : vector<8x32xf32>
    %745 = vector.extract_strided_slice %732 {offsets = [0, 64], sizes = [8, 32], strides = [1, 1]} : vector<8x128xf32> to vector<8x32xf32>
    %746 = math.tanh %745 : vector<8x32xf32>
    %747 = vector.extract_strided_slice %732 {offsets = [0, 96], sizes = [8, 32], strides = [1, 1]} : vector<8x128xf32> to vector<8x32xf32>
    %748 = arith.negf %747 : vector<8x32xf32>
    %749 = math.exp %748 : vector<8x32xf32>
    %cst_132 = arith.constant 1.000000e+00 : f32
    %750 = vector.broadcast %cst_132 : f32 to vector<8x32xf32>
    %751 = arith.addf %750, %749 : vector<8x32xf32>
    %752 = arith.divf %750, %751 : vector<8x32xf32>
    %753 = arith.mulf %744, %727 : vector<8x32xf32>
    %754 = arith.mulf %738, %746 : vector<8x32xf32>
    %755 = arith.addf %753, %754 : vector<8x32xf32>
    %756 = math.tanh %755 : vector<8x32xf32>
    %757 = arith.mulf %752, %756 : vector<8x32xf32>
    %758 = vector.extract_strided_slice %469 {offsets = [40, 128], sizes = [8, 128], strides = [1, 1]} : vector<64x256xf32> to vector<8x128xf32>
    %cst_133 = arith.constant dense<0.000000e+00> : vector<8x128xf32>
    %759 = tpu.matmul %757, %699, %cst_133 {dimension_numbers = #tpu.dot_dimension_numbers<[1], [0], [0], [1], [0, 0, 1, 1], [], []>} : vector<8x32xf32>, vector<32x128xf32>, vector<8x128xf32> -> vector<8x128xf32>
    %760 = arith.addf %758, %759 : vector<8x128xf32>
    %761 = vector.extract_strided_slice %760 {offsets = [0, 0], sizes = [8, 32], strides = [1, 1]} : vector<8x128xf32> to vector<8x32xf32>
    %762 = arith.negf %761 : vector<8x32xf32>
    %763 = math.exp %762 : vector<8x32xf32>
    %cst_134 = arith.constant 1.000000e+00 : f32
    %764 = vector.broadcast %cst_134 : f32 to vector<8x32xf32>
    %765 = arith.addf %764, %763 : vector<8x32xf32>
    %766 = arith.divf %764, %765 : vector<8x32xf32>
    %767 = vector.extract_strided_slice %760 {offsets = [0, 32], sizes = [8, 32], strides = [1, 1]} : vector<8x128xf32> to vector<8x32xf32>
    %768 = arith.negf %767 : vector<8x32xf32>
    %769 = math.exp %768 : vector<8x32xf32>
    %cst_135 = arith.constant 1.000000e+00 : f32
    %770 = vector.broadcast %cst_135 : f32 to vector<8x32xf32>
    %771 = arith.addf %770, %769 : vector<8x32xf32>
    %772 = arith.divf %770, %771 : vector<8x32xf32>
    %773 = vector.extract_strided_slice %760 {offsets = [0, 64], sizes = [8, 32], strides = [1, 1]} : vector<8x128xf32> to vector<8x32xf32>
    %774 = math.tanh %773 : vector<8x32xf32>
    %775 = vector.extract_strided_slice %760 {offsets = [0, 96], sizes = [8, 32], strides = [1, 1]} : vector<8x128xf32> to vector<8x32xf32>
    %776 = arith.negf %775 : vector<8x32xf32>
    %777 = math.exp %776 : vector<8x32xf32>
    %cst_136 = arith.constant 1.000000e+00 : f32
    %778 = vector.broadcast %cst_136 : f32 to vector<8x32xf32>
    %779 = arith.addf %778, %777 : vector<8x32xf32>
    %780 = arith.divf %778, %779 : vector<8x32xf32>
    %781 = arith.mulf %772, %755 : vector<8x32xf32>
    %782 = arith.mulf %766, %774 : vector<8x32xf32>
    %783 = arith.addf %781, %782 : vector<8x32xf32>
    %784 = math.tanh %783 : vector<8x32xf32>
    %785 = arith.mulf %780, %784 : vector<8x32xf32>
    %786 = vector.extract_strided_slice %469 {offsets = [32, 128], sizes = [8, 128], strides = [1, 1]} : vector<64x256xf32> to vector<8x128xf32>
    %cst_137 = arith.constant dense<0.000000e+00> : vector<8x128xf32>
    %787 = tpu.matmul %785, %699, %cst_137 {dimension_numbers = #tpu.dot_dimension_numbers<[1], [0], [0], [1], [0, 0, 1, 1], [], []>} : vector<8x32xf32>, vector<32x128xf32>, vector<8x128xf32> -> vector<8x128xf32>
    %788 = arith.addf %786, %787 : vector<8x128xf32>
    %789 = vector.extract_strided_slice %788 {offsets = [0, 0], sizes = [8, 32], strides = [1, 1]} : vector<8x128xf32> to vector<8x32xf32>
    %790 = arith.negf %789 : vector<8x32xf32>
    %791 = math.exp %790 : vector<8x32xf32>
    %cst_138 = arith.constant 1.000000e+00 : f32
    %792 = vector.broadcast %cst_138 : f32 to vector<8x32xf32>
    %793 = arith.addf %792, %791 : vector<8x32xf32>
    %794 = arith.divf %792, %793 : vector<8x32xf32>
    %795 = vector.extract_strided_slice %788 {offsets = [0, 32], sizes = [8, 32], strides = [1, 1]} : vector<8x128xf32> to vector<8x32xf32>
    %796 = arith.negf %795 : vector<8x32xf32>
    %797 = math.exp %796 : vector<8x32xf32>
    %cst_139 = arith.constant 1.000000e+00 : f32
    %798 = vector.broadcast %cst_139 : f32 to vector<8x32xf32>
    %799 = arith.addf %798, %797 : vector<8x32xf32>
    %800 = arith.divf %798, %799 : vector<8x32xf32>
    %801 = vector.extract_strided_slice %788 {offsets = [0, 64], sizes = [8, 32], strides = [1, 1]} : vector<8x128xf32> to vector<8x32xf32>
    %802 = math.tanh %801 : vector<8x32xf32>
    %803 = vector.extract_strided_slice %788 {offsets = [0, 96], sizes = [8, 32], strides = [1, 1]} : vector<8x128xf32> to vector<8x32xf32>
    %804 = arith.negf %803 : vector<8x32xf32>
    %805 = math.exp %804 : vector<8x32xf32>
    %cst_140 = arith.constant 1.000000e+00 : f32
    %806 = vector.broadcast %cst_140 : f32 to vector<8x32xf32>
    %807 = arith.addf %806, %805 : vector<8x32xf32>
    %808 = arith.divf %806, %807 : vector<8x32xf32>
    %809 = arith.mulf %800, %783 : vector<8x32xf32>
    %810 = arith.mulf %794, %802 : vector<8x32xf32>
    %811 = arith.addf %809, %810 : vector<8x32xf32>
    %812 = math.tanh %811 : vector<8x32xf32>
    %813 = arith.mulf %808, %812 : vector<8x32xf32>
    %814 = vector.extract_strided_slice %469 {offsets = [24, 128], sizes = [8, 128], strides = [1, 1]} : vector<64x256xf32> to vector<8x128xf32>
    %cst_141 = arith.constant dense<0.000000e+00> : vector<8x128xf32>
    %815 = tpu.matmul %813, %699, %cst_141 {dimension_numbers = #tpu.dot_dimension_numbers<[1], [0], [0], [1], [0, 0, 1, 1], [], []>} : vector<8x32xf32>, vector<32x128xf32>, vector<8x128xf32> -> vector<8x128xf32>
    %816 = arith.addf %814, %815 : vector<8x128xf32>
    %817 = vector.extract_strided_slice %816 {offsets = [0, 0], sizes = [8, 32], strides = [1, 1]} : vector<8x128xf32> to vector<8x32xf32>
    %818 = arith.negf %817 : vector<8x32xf32>
    %819 = math.exp %818 : vector<8x32xf32>
    %cst_142 = arith.constant 1.000000e+00 : f32
    %820 = vector.broadcast %cst_142 : f32 to vector<8x32xf32>
    %821 = arith.addf %820, %819 : vector<8x32xf32>
    %822 = arith.divf %820, %821 : vector<8x32xf32>
    %823 = vector.extract_strided_slice %816 {offsets = [0, 32], sizes = [8, 32], strides = [1, 1]} : vector<8x128xf32> to vector<8x32xf32>
    %824 = arith.negf %823 : vector<8x32xf32>
    %825 = math.exp %824 : vector<8x32xf32>
    %cst_143 = arith.constant 1.000000e+00 : f32
    %826 = vector.broadcast %cst_143 : f32 to vector<8x32xf32>
    %827 = arith.addf %826, %825 : vector<8x32xf32>
    %828 = arith.divf %826, %827 : vector<8x32xf32>
    %829 = vector.extract_strided_slice %816 {offsets = [0, 64], sizes = [8, 32], strides = [1, 1]} : vector<8x128xf32> to vector<8x32xf32>
    %830 = math.tanh %829 : vector<8x32xf32>
    %831 = vector.extract_strided_slice %816 {offsets = [0, 96], sizes = [8, 32], strides = [1, 1]} : vector<8x128xf32> to vector<8x32xf32>
    %832 = arith.negf %831 : vector<8x32xf32>
    %833 = math.exp %832 : vector<8x32xf32>
    %cst_144 = arith.constant 1.000000e+00 : f32
    %834 = vector.broadcast %cst_144 : f32 to vector<8x32xf32>
    %835 = arith.addf %834, %833 : vector<8x32xf32>
    %836 = arith.divf %834, %835 : vector<8x32xf32>
    %837 = arith.mulf %828, %811 : vector<8x32xf32>
    %838 = arith.mulf %822, %830 : vector<8x32xf32>
    %839 = arith.addf %837, %838 : vector<8x32xf32>
    %840 = math.tanh %839 : vector<8x32xf32>
    %841 = arith.mulf %836, %840 : vector<8x32xf32>
    %842 = vector.extract_strided_slice %469 {offsets = [16, 128], sizes = [8, 128], strides = [1, 1]} : vector<64x256xf32> to vector<8x128xf32>
    %cst_145 = arith.constant dense<0.000000e+00> : vector<8x128xf32>
    %843 = tpu.matmul %841, %699, %cst_145 {dimension_numbers = #tpu.dot_dimension_numbers<[1], [0], [0], [1], [0, 0, 1, 1], [], []>} : vector<8x32xf32>, vector<32x128xf32>, vector<8x128xf32> -> vector<8x128xf32>
    %844 = arith.addf %842, %843 : vector<8x128xf32>
    %845 = vector.extract_strided_slice %844 {offsets = [0, 0], sizes = [8, 32], strides = [1, 1]} : vector<8x128xf32> to vector<8x32xf32>
    %846 = arith.negf %845 : vector<8x32xf32>
    %847 = math.exp %846 : vector<8x32xf32>
    %cst_146 = arith.constant 1.000000e+00 : f32
    %848 = vector.broadcast %cst_146 : f32 to vector<8x32xf32>
    %849 = arith.addf %848, %847 : vector<8x32xf32>
    %850 = arith.divf %848, %849 : vector<8x32xf32>
    %851 = vector.extract_strided_slice %844 {offsets = [0, 32], sizes = [8, 32], strides = [1, 1]} : vector<8x128xf32> to vector<8x32xf32>
    %852 = arith.negf %851 : vector<8x32xf32>
    %853 = math.exp %852 : vector<8x32xf32>
    %cst_147 = arith.constant 1.000000e+00 : f32
    %854 = vector.broadcast %cst_147 : f32 to vector<8x32xf32>
    %855 = arith.addf %854, %853 : vector<8x32xf32>
    %856 = arith.divf %854, %855 : vector<8x32xf32>
    %857 = vector.extract_strided_slice %844 {offsets = [0, 64], sizes = [8, 32], strides = [1, 1]} : vector<8x128xf32> to vector<8x32xf32>
    %858 = math.tanh %857 : vector<8x32xf32>
    %859 = vector.extract_strided_slice %844 {offsets = [0, 96], sizes = [8, 32], strides = [1, 1]} : vector<8x128xf32> to vector<8x32xf32>
    %860 = arith.negf %859 : vector<8x32xf32>
    %861 = math.exp %860 : vector<8x32xf32>
    %cst_148 = arith.constant 1.000000e+00 : f32
    %862 = vector.broadcast %cst_148 : f32 to vector<8x32xf32>
    %863 = arith.addf %862, %861 : vector<8x32xf32>
    %864 = arith.divf %862, %863 : vector<8x32xf32>
    %865 = arith.mulf %856, %839 : vector<8x32xf32>
    %866 = arith.mulf %850, %858 : vector<8x32xf32>
    %867 = arith.addf %865, %866 : vector<8x32xf32>
    %868 = math.tanh %867 : vector<8x32xf32>
    %869 = arith.mulf %864, %868 : vector<8x32xf32>
    %870 = vector.extract_strided_slice %469 {offsets = [8, 128], sizes = [8, 128], strides = [1, 1]} : vector<64x256xf32> to vector<8x128xf32>
    %cst_149 = arith.constant dense<0.000000e+00> : vector<8x128xf32>
    %871 = tpu.matmul %869, %699, %cst_149 {dimension_numbers = #tpu.dot_dimension_numbers<[1], [0], [0], [1], [0, 0, 1, 1], [], []>} : vector<8x32xf32>, vector<32x128xf32>, vector<8x128xf32> -> vector<8x128xf32>
    %872 = arith.addf %870, %871 : vector<8x128xf32>
    %873 = vector.extract_strided_slice %872 {offsets = [0, 0], sizes = [8, 32], strides = [1, 1]} : vector<8x128xf32> to vector<8x32xf32>
    %874 = arith.negf %873 : vector<8x32xf32>
    %875 = math.exp %874 : vector<8x32xf32>
    %cst_150 = arith.constant 1.000000e+00 : f32
    %876 = vector.broadcast %cst_150 : f32 to vector<8x32xf32>
    %877 = arith.addf %876, %875 : vector<8x32xf32>
    %878 = arith.divf %876, %877 : vector<8x32xf32>
    %879 = vector.extract_strided_slice %872 {offsets = [0, 32], sizes = [8, 32], strides = [1, 1]} : vector<8x128xf32> to vector<8x32xf32>
    %880 = arith.negf %879 : vector<8x32xf32>
    %881 = math.exp %880 : vector<8x32xf32>
    %cst_151 = arith.constant 1.000000e+00 : f32
    %882 = vector.broadcast %cst_151 : f32 to vector<8x32xf32>
    %883 = arith.addf %882, %881 : vector<8x32xf32>
    %884 = arith.divf %882, %883 : vector<8x32xf32>
    %885 = vector.extract_strided_slice %872 {offsets = [0, 64], sizes = [8, 32], strides = [1, 1]} : vector<8x128xf32> to vector<8x32xf32>
    %886 = math.tanh %885 : vector<8x32xf32>
    %887 = vector.extract_strided_slice %872 {offsets = [0, 96], sizes = [8, 32], strides = [1, 1]} : vector<8x128xf32> to vector<8x32xf32>
    %888 = arith.negf %887 : vector<8x32xf32>
    %889 = math.exp %888 : vector<8x32xf32>
    %cst_152 = arith.constant 1.000000e+00 : f32
    %890 = vector.broadcast %cst_152 : f32 to vector<8x32xf32>
    %891 = arith.addf %890, %889 : vector<8x32xf32>
    %892 = arith.divf %890, %891 : vector<8x32xf32>
    %893 = arith.mulf %884, %867 : vector<8x32xf32>
    %894 = arith.mulf %878, %886 : vector<8x32xf32>
    %895 = arith.addf %893, %894 : vector<8x32xf32>
    %896 = math.tanh %895 : vector<8x32xf32>
    %897 = arith.mulf %892, %896 : vector<8x32xf32>
    %898 = vector.extract_strided_slice %469 {offsets = [0, 128], sizes = [8, 128], strides = [1, 1]} : vector<64x256xf32> to vector<8x128xf32>
    %cst_153 = arith.constant dense<0.000000e+00> : vector<8x128xf32>
    %899 = tpu.matmul %897, %699, %cst_153 {dimension_numbers = #tpu.dot_dimension_numbers<[1], [0], [0], [1], [0, 0, 1, 1], [], []>} : vector<8x32xf32>, vector<32x128xf32>, vector<8x128xf32> -> vector<8x128xf32>
    %900 = arith.addf %898, %899 : vector<8x128xf32>
    %901 = vector.extract_strided_slice %900 {offsets = [0, 0], sizes = [8, 32], strides = [1, 1]} : vector<8x128xf32> to vector<8x32xf32>
    %902 = arith.negf %901 : vector<8x32xf32>
    %903 = math.exp %902 : vector<8x32xf32>
    %cst_154 = arith.constant 1.000000e+00 : f32
    %904 = vector.broadcast %cst_154 : f32 to vector<8x32xf32>
    %905 = arith.addf %904, %903 : vector<8x32xf32>
    %906 = arith.divf %904, %905 : vector<8x32xf32>
    %907 = vector.extract_strided_slice %900 {offsets = [0, 32], sizes = [8, 32], strides = [1, 1]} : vector<8x128xf32> to vector<8x32xf32>
    %908 = arith.negf %907 : vector<8x32xf32>
    %909 = math.exp %908 : vector<8x32xf32>
    %cst_155 = arith.constant 1.000000e+00 : f32
    %910 = vector.broadcast %cst_155 : f32 to vector<8x32xf32>
    %911 = arith.addf %910, %909 : vector<8x32xf32>
    %912 = arith.divf %910, %911 : vector<8x32xf32>
    %913 = vector.extract_strided_slice %900 {offsets = [0, 64], sizes = [8, 32], strides = [1, 1]} : vector<8x128xf32> to vector<8x32xf32>
    %914 = math.tanh %913 : vector<8x32xf32>
    %915 = vector.extract_strided_slice %900 {offsets = [0, 96], sizes = [8, 32], strides = [1, 1]} : vector<8x128xf32> to vector<8x32xf32>
    %916 = arith.negf %915 : vector<8x32xf32>
    %917 = math.exp %916 : vector<8x32xf32>
    %cst_156 = arith.constant 1.000000e+00 : f32
    %918 = vector.broadcast %cst_156 : f32 to vector<8x32xf32>
    %919 = arith.addf %918, %917 : vector<8x32xf32>
    %920 = arith.divf %918, %919 : vector<8x32xf32>
    %921 = arith.mulf %912, %895 : vector<8x32xf32>
    %922 = arith.mulf %906, %914 : vector<8x32xf32>
    %923 = arith.addf %921, %922 : vector<8x32xf32>
    %924 = math.tanh %923 : vector<8x32xf32>
    %925 = arith.mulf %920, %924 : vector<8x32xf32>
    %926 = tpu.concatenate %501, %925 in 1 : vector<8x32xf32>, vector<8x32xf32> -> vector<8x64xf32>
    %927 = tpu.concatenate %529, %897 in 1 : vector<8x32xf32>, vector<8x32xf32> -> vector<8x64xf32>
    %928 = tpu.concatenate %557, %869 in 1 : vector<8x32xf32>, vector<8x32xf32> -> vector<8x64xf32>
    %929 = tpu.concatenate %585, %841 in 1 : vector<8x32xf32>, vector<8x32xf32> -> vector<8x64xf32>
    %930 = tpu.concatenate %613, %813 in 1 : vector<8x32xf32>, vector<8x32xf32> -> vector<8x64xf32>
    %931 = tpu.concatenate %641, %785 in 1 : vector<8x32xf32>, vector<8x32xf32> -> vector<8x64xf32>
    %932 = tpu.concatenate %669, %757 in 1 : vector<8x32xf32>, vector<8x32xf32> -> vector<8x64xf32>
    %933 = tpu.concatenate %697, %729 in 1 : vector<8x32xf32>, vector<8x32xf32> -> vector<8x64xf32>
    %c0_157 = arith.constant 0 : index
    %c0_158 = arith.constant 0 : index
    %934 = vector.load %arg7[%c0_157, %c0_158] : memref<1x64xf32, #tpu.memory_space<vmem>>, vector<1x64xf32>
    %935 = vector.broadcast %934 : vector<1x64xf32> to vector<8x64xf32>
    %936 = arith.mulf %926, %935 : vector<8x64xf32>
    %cst_159 = arith.constant dense<0.000000e+00> : vector<8xf32>
    %937 = vector.multi_reduction <add>, %936, %cst_159 [1] : vector<8x64xf32> to vector<8xf32>
    %938 = vector.shape_cast %937 : vector<8xf32> to vector<8x1xf32>
    %939 = vector.broadcast %934 : vector<1x64xf32> to vector<8x64xf32>
    %940 = arith.mulf %927, %939 : vector<8x64xf32>
    %cst_160 = arith.constant dense<0.000000e+00> : vector<8xf32>
    %941 = vector.multi_reduction <add>, %940, %cst_160 [1] : vector<8x64xf32> to vector<8xf32>
    %942 = vector.shape_cast %941 : vector<8xf32> to vector<8x1xf32>
    %943 = vector.broadcast %934 : vector<1x64xf32> to vector<8x64xf32>
    %944 = arith.mulf %928, %943 : vector<8x64xf32>
    %cst_161 = arith.constant dense<0.000000e+00> : vector<8xf32>
    %945 = vector.multi_reduction <add>, %944, %cst_161 [1] : vector<8x64xf32> to vector<8xf32>
    %946 = vector.shape_cast %945 : vector<8xf32> to vector<8x1xf32>
    %947 = vector.broadcast %934 : vector<1x64xf32> to vector<8x64xf32>
    %948 = arith.mulf %929, %947 : vector<8x64xf32>
    %cst_162 = arith.constant dense<0.000000e+00> : vector<8xf32>
    %949 = vector.multi_reduction <add>, %948, %cst_162 [1] : vector<8x64xf32> to vector<8xf32>
    %950 = vector.shape_cast %949 : vector<8xf32> to vector<8x1xf32>
    %951 = vector.broadcast %934 : vector<1x64xf32> to vector<8x64xf32>
    %952 = arith.mulf %930, %951 : vector<8x64xf32>
    %cst_163 = arith.constant dense<0.000000e+00> : vector<8xf32>
    %953 = vector.multi_reduction <add>, %952, %cst_163 [1] : vector<8x64xf32> to vector<8xf32>
    %954 = vector.shape_cast %953 : vector<8xf32> to vector<8x1xf32>
    %955 = vector.broadcast %934 : vector<1x64xf32> to vector<8x64xf32>
    %956 = arith.mulf %931, %955 : vector<8x64xf32>
    %cst_164 = arith.constant dense<0.000000e+00> : vector<8xf32>
    %957 = vector.multi_reduction <add>, %956, %cst_164 [1] : vector<8x64xf32> to vector<8xf32>
    %958 = vector.shape_cast %957 : vector<8xf32> to vector<8x1xf32>
    %959 = vector.broadcast %934 : vector<1x64xf32> to vector<8x64xf32>
    %960 = arith.mulf %932, %959 : vector<8x64xf32>
    %cst_165 = arith.constant dense<0.000000e+00> : vector<8xf32>
    %961 = vector.multi_reduction <add>, %960, %cst_165 [1] : vector<8x64xf32> to vector<8xf32>
    %962 = vector.shape_cast %961 : vector<8xf32> to vector<8x1xf32>
    %963 = vector.broadcast %934 : vector<1x64xf32> to vector<8x64xf32>
    %964 = arith.mulf %933, %963 : vector<8x64xf32>
    %cst_166 = arith.constant dense<0.000000e+00> : vector<8xf32>
    %965 = vector.multi_reduction <add>, %964, %cst_166 [1] : vector<8x64xf32> to vector<8xf32>
    %966 = vector.shape_cast %965 : vector<8xf32> to vector<8x1xf32>
    %967 = arith.maximumf %938, %942 : vector<8x1xf32>
    %968 = arith.maximumf %967, %946 : vector<8x1xf32>
    %969 = arith.maximumf %968, %950 : vector<8x1xf32>
    %970 = arith.maximumf %969, %954 : vector<8x1xf32>
    %971 = arith.maximumf %970, %958 : vector<8x1xf32>
    %972 = arith.maximumf %971, %962 : vector<8x1xf32>
    %973 = arith.maximumf %972, %966 : vector<8x1xf32>
    %974 = arith.subf %938, %973 : vector<8x1xf32>
    %975 = math.exp %974 : vector<8x1xf32>
    %976 = arith.subf %942, %973 : vector<8x1xf32>
    %977 = math.exp %976 : vector<8x1xf32>
    %978 = arith.subf %946, %973 : vector<8x1xf32>
    %979 = math.exp %978 : vector<8x1xf32>
    %980 = arith.subf %950, %973 : vector<8x1xf32>
    %981 = math.exp %980 : vector<8x1xf32>
    %982 = arith.subf %954, %973 : vector<8x1xf32>
    %983 = math.exp %982 : vector<8x1xf32>
    %984 = arith.subf %958, %973 : vector<8x1xf32>
    %985 = math.exp %984 : vector<8x1xf32>
    %986 = arith.subf %962, %973 : vector<8x1xf32>
    %987 = math.exp %986 : vector<8x1xf32>
    %988 = arith.subf %966, %973 : vector<8x1xf32>
    %989 = math.exp %988 : vector<8x1xf32>
    %990 = arith.addf %975, %977 : vector<8x1xf32>
    %991 = arith.addf %990, %979 : vector<8x1xf32>
    %992 = arith.addf %991, %981 : vector<8x1xf32>
    %993 = arith.addf %992, %983 : vector<8x1xf32>
    %994 = arith.addf %993, %985 : vector<8x1xf32>
    %995 = arith.addf %994, %987 : vector<8x1xf32>
    %996 = arith.addf %995, %989 : vector<8x1xf32>
    %cst_167 = arith.constant 1.000000e+00 : f32
    %997 = vector.broadcast %cst_167 : f32 to vector<8x1xf32>
    %998 = arith.divf %997, %996 : vector<8x1xf32>
    %999 = arith.mulf %975, %998 : vector<8x1xf32>
    %1000 = vector.broadcast %999 : vector<8x1xf32> to vector<8x64xf32>
    %1001 = arith.mulf %1000, %926 : vector<8x64xf32>
    %1002 = arith.mulf %977, %998 : vector<8x1xf32>
    %1003 = vector.broadcast %1002 : vector<8x1xf32> to vector<8x64xf32>
    %1004 = arith.mulf %1003, %927 : vector<8x64xf32>
    %1005 = arith.addf %1001, %1004 : vector<8x64xf32>
    %1006 = arith.mulf %979, %998 : vector<8x1xf32>
    %1007 = vector.broadcast %1006 : vector<8x1xf32> to vector<8x64xf32>
    %1008 = arith.mulf %1007, %928 : vector<8x64xf32>
    %1009 = arith.addf %1005, %1008 : vector<8x64xf32>
    %1010 = arith.mulf %981, %998 : vector<8x1xf32>
    %1011 = vector.broadcast %1010 : vector<8x1xf32> to vector<8x64xf32>
    %1012 = arith.mulf %1011, %929 : vector<8x64xf32>
    %1013 = arith.addf %1009, %1012 : vector<8x64xf32>
    %1014 = arith.mulf %983, %998 : vector<8x1xf32>
    %1015 = vector.broadcast %1014 : vector<8x1xf32> to vector<8x64xf32>
    %1016 = arith.mulf %1015, %930 : vector<8x64xf32>
    %1017 = arith.addf %1013, %1016 : vector<8x64xf32>
    %1018 = arith.mulf %985, %998 : vector<8x1xf32>
    %1019 = vector.broadcast %1018 : vector<8x1xf32> to vector<8x64xf32>
    %1020 = arith.mulf %1019, %931 : vector<8x64xf32>
    %1021 = arith.addf %1017, %1020 : vector<8x64xf32>
    %1022 = arith.mulf %987, %998 : vector<8x1xf32>
    %1023 = vector.broadcast %1022 : vector<8x1xf32> to vector<8x64xf32>
    %1024 = arith.mulf %1023, %932 : vector<8x64xf32>
    %1025 = arith.addf %1021, %1024 : vector<8x64xf32>
    %1026 = arith.mulf %989, %998 : vector<8x1xf32>
    %1027 = vector.broadcast %1026 : vector<8x1xf32> to vector<8x64xf32>
    %1028 = arith.mulf %1027, %933 : vector<8x64xf32>
    %1029 = arith.addf %1025, %1028 : vector<8x64xf32>
    %c0_168 = arith.constant 0 : index
    %c0_169 = arith.constant 0 : index
    %1030 = vector.load %arg8[%c0_168, %c0_169] : memref<64x5xf32, #tpu.memory_space<vmem>>, vector<64x5xf32>
    %cst_170 = arith.constant dense<0.000000e+00> : vector<8x5xf32>
    %1031 = tpu.matmul %1029, %1030, %cst_170 {dimension_numbers = #tpu.dot_dimension_numbers<[1], [0], [0], [1], [0, 0, 1, 1], [], []>} : vector<8x64xf32>, vector<64x5xf32>, vector<8x5xf32> -> vector<8x5xf32>
    %c0_171 = arith.constant 0 : index
    %c0_172 = arith.constant 0 : index
    %1032 = vector.load %arg9[%c0_171, %c0_172] : memref<1x5xf32, #tpu.memory_space<vmem>>, vector<1x5xf32>
    %1033 = vector.broadcast %1032 : vector<1x5xf32> to vector<8x5xf32>
    %1034 = arith.addf %1031, %1033 : vector<8x5xf32>
    %cst_173 = arith.constant -1.000000e+01 : f32
    %cst_174 = arith.constant 1.000000e+01 : f32
    %1035 = vector.broadcast %cst_173 : f32 to vector<8x5xf32>
    %1036 = arith.maximumf %1035, %1034 : vector<8x5xf32>
    %1037 = vector.broadcast %cst_174 : f32 to vector<8x5xf32>
    %1038 = arith.minimumf %1037, %1036 : vector<8x5xf32>
    %1039 = math.exp %1038 : vector<8x5xf32>
    %c0_175 = arith.constant 0 : index
    %c0_176 = arith.constant 0 : index
    %1040 = vector.load %arg10[%c0_175, %c0_176] : memref<8x5xf32, #tpu.memory_space<vmem>>, vector<8x5xf32>
    tpu.vector_store %arg10[%c0_175, %c0_176], %1039 {strides = array<i32>} : memref<8x5xf32, #tpu.memory_space<vmem>>, vector<8x5xf32>,
    return
  }
}

</mosaic_0001>

<llo_original>
// kernel: _lambda_.1
$region0: #{_lambda_.1}
  #allocation0 [shape = 'u32[]', space=smem, size = 0x4, offset = 0x4, fixed_abs, tag = 'smem constant byte address 0x4 - core index']
  #allocation1 [shape = 'u32[72,128]{1,0:T(1,128)}', space=vmem, size = 0x9000, scoped, tag = 'internal scratch']
  %s0 = inlined_call_operand.vmem [shape: f32[64,48], index: 0, kind: input, shape index: {}]
  %s1 = inlined_call_operand.vmem [shape: f32[48,256], index: 1, kind: input, shape index: {}]
  %s2 = inlined_call_operand.vmem [shape: f32[2,32,128], index: 2, kind: input, shape index: {}]
  %s3 = inlined_call_operand.vmem [shape: f32[1,256], index: 3, kind: input, shape index: {}, may-alias: {3,6}]
  %s4 = inlined_call_operand.vmem [shape: f32[64,256], index: 4, kind: input, shape index: {}]
  %s5 = inlined_call_operand.vmem [shape: f32[2,32,128], index: 5, kind: input, shape index: {}]
  %s6 = inlined_call_operand.vmem [shape: f32[1,256], index: 6, kind: input, shape index: {}, may-alias: {3,6}]
  %s7 = inlined_call_operand.vmem [shape: f32[1,64], index: 7, kind: input, shape index: {}]
  %s8 = inlined_call_operand.vmem [shape: f32[64,5], index: 8, kind: input, shape index: {}]
  %s9 = inlined_call_operand.vmem [shape: f32[1,5], index: 9, kind: input, shape index: {}]
  %s10 = inlined_call_operand.vmem [shape: f32[8,5], index: 10, kind: output, shape index: {}]
  %s11 = sld [smem:[#allocation0]]
  $region50: #{_lambda_.1} parent=0
    _
  %s13 = ssub.s32 1, %s11
  %s14 = scalar_select 0, %s13, %s11
  // Predicated region
  $region2: #{_lambda_.1} parent=0 // pred_check
    _
  $region3: #{_lambda_.1} parent=0 // pred_check_branch
    %16 = sbr.rel (0) target = $region5
  $region4: #{_lambda_.1} parent=0 // pred_region
    _
  $region5: #{_lambda_.1} parent=0 // pred_fallthru
    _
  // Predicated region
  $region6: #{_lambda_.1} parent=0 // pred_check
    _
  $region7: #{_lambda_.1} parent=0 // pred_check_branch
    %18 = sbr.rel (0) target = $region9
  $region8: #{_lambda_.1} parent=0 // pred_region
    _
  $region9: #{_lambda_.1} parent=0 // pred_fallthru
    _
  // Predicated region
  $region10: #{_lambda_.1} parent=0 // pred_check
    _
  $region11: #{_lambda_.1} parent=0 // pred_check_branch
    %20 = sbr.rel (0) target = $region13
  $region12: #{_lambda_.1} parent=0 // pred_region
    _
  $region13: #{_lambda_.1} parent=0 // pred_fallthru
    _
  // Predicated region
  $region14: #{_lambda_.1} parent=0 // pred_check
    _
  $region15: #{_lambda_.1} parent=0 // pred_check_branch
    %22 = sbr.rel (0) target = $region17
  $region16: #{_lambda_.1} parent=0 // pred_region
    _
  $region17: #{_lambda_.1} parent=0 // pred_fallthru
    _
  // Predicated region
  $region18: #{_lambda_.1} parent=0 // pred_check
    _
  $region19: #{_lambda_.1} parent=0 // pred_check_branch
    %24 = sbr.rel (0) target = $region21
  $region20: #{_lambda_.1} parent=0 // pred_region
    _
  $region21: #{_lambda_.1} parent=0 // pred_fallthru
    _
  // Predicated region
  $region22: #{_lambda_.1} parent=0 // pred_check
    _
  $region23: #{_lambda_.1} parent=0 // pred_check_branch
    %26 = sbr.rel (0) target = $region25
  $region24: #{_lambda_.1} parent=0 // pred_region
    _
  $region25: #{_lambda_.1} parent=0 // pred_fallthru
    _
  // Predicated region
  $region26: #{_lambda_.1} parent=0 // pred_check
    _
  $region27: #{_lambda_.1} parent=0 // pred_check_branch
    %28 = sbr.rel (0) target = $region29
  $region28: #{_lambda_.1} parent=0 // pred_region
    _
  $region29: #{_lambda_.1} parent=0 // pred_fallthru
    _
  // Predicated region
  $region30: #{_lambda_.1} parent=0 // pred_check
    _
  $region31: #{_lambda_.1} parent=0 // pred_check_branch
    %30 = sbr.rel (0) target = $region33
  $region32: #{_lambda_.1} parent=0 // pred_region
    _
  $region33: #{_lambda_.1} parent=0 // pred_fallthru
    _
  // Predicated region
  $region34: #{_lambda_.1} parent=0 // pred_check
    _
  $region35: #{_lambda_.1} parent=0 // pred_check_branch
    %32 = sbr.rel (0) target = $region37
  $region36: #{_lambda_.1} parent=0 // pred_region
    _
  $region37: #{_lambda_.1} parent=0 // pred_fallthru
    _
  // Predicated region
  $region38: #{_lambda_.1} parent=0 // pred_check
    _
  $region39: #{_lambda_.1} parent=0 // pred_check_branch
    %34 = sbr.rel (0) target = $region41
  $region40: #{_lambda_.1} parent=0 // pred_region
    _
  $region41: #{_lambda_.1} parent=0 // pred_fallthru
    _
  %v35 = vld [vmem:[%s0] sm:$0xff]
  %v36 = vld [vmem:[%s0 + $0x8] sm:$0xff]
  %v37 = vld [vmem:[%s0 + $0x10] sm:$0xff]
  %v38 = vld [vmem:[%s0 + $0x18] sm:$0xff]
  %v39 = vld [vmem:[%s0 + $0x20] sm:$0xff]
  %v40 = vld [vmem:[%s0 + $0x28] sm:$0xff]
  %v41 = vld [vmem:[%s0 + $0x30] sm:$0xff]
  %v42 = vld [vmem:[%s0 + $0x38] sm:$0xff]
  %v43 = vld [vmem:[%s1] sm:$0xff]
  %v44 = vld [vmem:[%s1 + $0x8] sm:$0xff]
  %v45 = vld [vmem:[%s1 + $0x10] sm:$0xff]
  %v46 = vld [vmem:[%s1 + $0x18] sm:$0xff]
  %v47 = vld [vmem:[%s1 + $0x20] sm:$0xff]
  %v48 = vld [vmem:[%s1 + $0x28] sm:$0xff]
  %v49 = vld [vmem:[%s1 + $0x30] sm:$0xff]
  %v50 = vld [vmem:[%s1 + $0x38] sm:$0xff]
  %v51 = vld [vmem:[%s1 + $0x40] sm:$0xff]
  %v52 = vld [vmem:[%s1 + $0x48] sm:$0xff]
  %v53 = vld [vmem:[%s1 + $0x50] sm:$0xff]
  %v54 = vld [vmem:[%s1 + $0x58] sm:$0xff]
  %v55 = vld [vmem:[%s3] sm:$0x3]
  %v57 = vperm.slane %v55, 0
  %v58 = vperm.slane %v55, 1
  %vm61 = vcmask 392192
  %v63 = vsel %vm61, %v35, 0
  %v66 = vsel %vm61, %v36, 0
  %v69 = vsel %vm61, %v37, 0
  %v72 = vsel %vm61, %v38, 0
  %v75 = vsel %vm61, %v39, 0
  %v78 = vsel %vm61, %v40, 0
  %v81 = vsel %vm61, %v41, 0
  %v84 = vsel %vm61, %v42, 0
  %86 = vmatpush.msra.mxu0 0.0
  %87 = vmatpush.msra.mxu0 0.0
  %88 = vmatpush.msra.mxu0 0.0
  %89 = vmatpush.msra.mxu0 0.0
  %90 = vmatpush.msra.mxu0 0.0
  %91 = vmatpush.msra.mxu0 0.0
  %92 = vmatpush.msra.mxu0 0.0
  %93 = vmatpush.msra.mxu0 0.0
  %94 = vmatpush.msra.mxu0 0.0
  %95 = vmatpush.msra.mxu0 0.0
  %96 = vmatpush.msra.mxu0 %v53
  %97 = vmatpush.msra.mxu0 %v51
  %98 = vmatpush.msra.mxu0 %v49
  %99 = vmatpush.msra.mxu0 %v47
  %100 = vmatpush.msra.mxu0 %v45
  %101 = vmatpush.msra.mxu0 %v43
  %102 = vmatmul.f32.gmra.mxu0 %v63
  %v103 = vpop.f32.mrf.mxu0
  %v104 = vadd.f32 %v57, %v103
  %105 = vmatmul.f32.gmra.mxu0 %v66
  %v106 = vpop.f32.mrf.mxu0
  %v107 = vadd.f32 %v57, %v106
  %108 = vmatmul.f32.gmra.mxu0 %v69
  %v109 = vpop.f32.mrf.mxu0
  %v110 = vadd.f32 %v57, %v109
  %111 = vmatmul.f32.gmra.mxu0 %v72
  %v112 = vpop.f32.mrf.mxu0
  %v113 = vadd.f32 %v57, %v112
  %114 = vmatmul.f32.gmra.mxu0 %v75
  %v115 = vpop.f32.mrf.mxu0
  %v116 = vadd.f32 %v57, %v115
  %117 = vmatmul.f32.gmra.mxu0 %v78
  %v118 = vpop.f32.mrf.mxu0
  %v119 = vadd.f32 %v57, %v118
  %120 = vmatmul.f32.gmra.mxu0 %v81
  %v121 = vpop.f32.mrf.mxu0
  %v122 = vadd.f32 %v57, %v121
  %123 = vmatmul.f32.gmra.mxu0 %v84
  %v124 = vpop.f32.mrf.mxu0
  %v125 = vadd.f32 %v57, %v124
  %126 = vdwg.mxu0
  %127 = vmatpush.msra.mxu0 0.0
  %128 = vmatpush.msra.mxu0 0.0
  %129 = vmatpush.msra.mxu0 0.0
  %130 = vmatpush.msra.mxu0 0.0
  %131 = vmatpush.msra.mxu0 0.0
  %132 = vmatpush.msra.mxu0 0.0
  %133 = vmatpush.msra.mxu0 0.0
  %134 = vmatpush.msra.mxu0 0.0
  %135 = vmatpush.msra.mxu0 0.0
  %136 = vmatpush.msra.mxu0 0.0
  %137 = vmatpush.msra.mxu0 %v54
  %138 = vmatpush.msra.mxu0 %v52
  %139 = vmatpush.msra.mxu0 %v50
  %140 = vmatpush.msra.mxu0 %v48
  %141 = vmatpush.msra.mxu0 %v46
  %142 = vmatpush.msra.mxu0 %v44
  %143 = vmatmul.f32.gmra.mxu0 %v63
  %v144 = vpop.f32.mrf.mxu0
  %v145 = vadd.f32 %v58, %v144
  %146 = vmatmul.f32.gmra.mxu0 %v66
  %v147 = vpop.f32.mrf.mxu0
  %v148 = vadd.f32 %v58, %v147
  %149 = vmatmul.f32.gmra.mxu0 %v69
  %v150 = vpop.f32.mrf.mxu0
  %v151 = vadd.f32 %v58, %v150
  %152 = vmatmul.f32.gmra.mxu0 %v72
  %v153 = vpop.f32.mrf.mxu0
  %v154 = vadd.f32 %v58, %v153
  %155 = vmatmul.f32.gmra.mxu0 %v75
  %v156 = vpop.f32.mrf.mxu0
  %v157 = vadd.f32 %v58, %v156
  %158 = vmatmul.f32.gmra.mxu0 %v78
  %v159 = vpop.f32.mrf.mxu0
  %v160 = vadd.f32 %v58, %v159
  %161 = vmatmul.f32.gmra.mxu0 %v81
  %v162 = vpop.f32.mrf.mxu0
  %v163 = vadd.f32 %v58, %v162
  %164 = vmatmul.f32.gmra.mxu0 %v84
  %v165 = vpop.f32.mrf.mxu0
  %v166 = vadd.f32 %v58, %v165
  %167 = vdwg.mxu0
  %v168 = vld [vmem:[%s2] sm:$0xff]
  %v169 = vld [vmem:[%s2 + $0x8] sm:$0xff]
  %v170 = vld [vmem:[%s2 + $0x10] sm:$0xff]
  %v171 = vld [vmem:[%s2 + $0x18] sm:$0xff]
  %vm172 = vcmask 261120
  %v174 = vsel %vm172, 0.0, 0
  %176 = vmatpush.msra.mxu0 0.0
  %177 = vmatpush.msra.mxu0 0.0
  %178 = vmatpush.msra.mxu0 0.0
  %179 = vmatpush.msra.mxu0 0.0
  %180 = vmatpush.msra.mxu0 0.0
  %181 = vmatpush.msra.mxu0 0.0
  %182 = vmatpush.msra.mxu0 0.0
  %183 = vmatpush.msra.mxu0 0.0
  %184 = vmatpush.msra.mxu0 0.0
  %185 = vmatpush.msra.mxu0 0.0
  %186 = vmatpush.msra.mxu0 0.0
  %187 = vmatpush.msra.mxu0 0.0
  %188 = vmatpush.msra.mxu0 %v171
  %189 = vmatpush.msra.mxu0 %v170
  %190 = vmatpush.msra.mxu0 %v169
  %191 = vmatpush.msra.mxu0 %v168
  %192 = vmatmul.f32.gmra.mxu0 %v174
  %v193 = vpop.f32.mrf.mxu0
  %v194 = vadd.f32 0.0, %v193
  %195 = vdwg.mxu0
  %v196 = vadd.f32 %v104, %v194
  %v197 = vxor.u32 %v196, 2147483648
  %v198 = vmul.f32 %v197, 1.442695
  %v199 = vpow.pop %v198
  %v200 = vadd.f32 %v199, 1.0
  %v201 = vrcp.pop %v200
  %v202 = vmul.f32 %v200, %v201
  %v203 = vsub.f32 1.0, %v202
  %v204 = vmul.f32 %v201, %v203
  %v205 = vadd.f32 %v201, %v204
  %vm206 = vweird.f32 %v200
  %vm207 = vweird.f32 %v201
  %vm208 = vmor %vm206, %vm207
  %v209 = vsel %vm208, %v201, %v205
  %v210 = vand.u32 2147483647, %v200
  %vm211 = vcmp.eq.f32.partialorder %v210, 8.507059e+37
  %v212 = vand.u32 %v200, 2147483648
  %v213 = vor.u32 1.1754944e-38, %v212
  %v214 = vsel %vm211, %v213, %v209
  %v215 = vmul.f32 1.0, %v214
  %v216 = vtanh.pop %v196
  %v217 = vmul.f32 %v215, 0.0
  %219 = vrot.lane.b32.xlu0 %v216, 64
  %v220 = vpop.permute.xlu0 %219
  %v222 = vmul.f32 %v215, %v220
  %224 = vrot.lane.b32.xlu0 %v222, 32
  %v225 = vpop.permute.xlu0 %224
  %v227 = vadd.f32 %v217, %v225
  %v228 = vtanh.pop %v227
  %230 = vrot.lane.b32.xlu0 %v228, 64
  %v231 = vpop.permute.xlu0 %230
  %v233 = vmul.f32 %v215, %v231
  %235 = vrot.lane.b32.xlu0 %v233, 32
  %v236 = vpop.permute.xlu0 %235
  %v237 = vsel %vm172, %v236, 0
  %239 = vmatpush.msra.mxu0 0.0
  %240 = vmatpush.msra.mxu0 0.0
  %241 = vmatpush.msra.mxu0 0.0
  %242 = vmatpush.msra.mxu0 0.0
  %243 = vmatpush.msra.mxu0 0.0
  %244 = vmatpush.msra.mxu0 0.0
  %245 = vmatpush.msra.mxu0 0.0
  %246 = vmatpush.msra.mxu0 0.0
  %247 = vmatpush.msra.mxu0 0.0
  %248 = vmatpush.msra.mxu0 0.0
  %249 = vmatpush.msra.mxu0 0.0
  %250 = vmatpush.msra.mxu0 0.0
  %251 = vmatpush.msra.mxu0 %v171
  %252 = vmatpush.msra.mxu0 %v170
  %253 = vmatpush.msra.mxu0 %v169
  %254 = vmatpush.msra.mxu0 %v168
  %255 = vmatmul.f32.gmra.mxu0 %v237
  %v256 = vpop.f32.mrf.mxu0
  %v257 = vadd.f32 0.0, %v256
  %258 = vdwg.mxu0
  %v259 = vadd.f32 %v107, %v257
  %v260 = vxor.u32 %v259, 2147483648
  %v261 = vmul.f32 %v260, 1.442695
  %v262 = vpow.pop %v261
  %v263 = vadd.f32 %v262, 1.0
  %v264 = vrcp.pop %v263
  %v265 = vmul.f32 %v263, %v264
  %v266 = vsub.f32 1.0, %v265
  %v267 = vmul.f32 %v264, %v266
  %v268 = vadd.f32 %v264, %v267
  %vm269 = vweird.f32 %v263
  %vm270 = vweird.f32 %v264
  %vm271 = vmor %vm269, %vm270
  %v272 = vsel %vm271, %v264, %v268
  %v273 = vand.u32 2147483647, %v263
  %vm274 = vcmp.eq.f32.partialorder %v273, 8.507059e+37
  %v275 = vand.u32 %v263, 2147483648
  %v276 = vor.u32 1.1754944e-38, %v275
  %v277 = vsel %vm274, %v276, %v272
  %v278 = vmul.f32 1.0, %v277
  %v279 = vtanh.pop %v259
  %v280 = vmul.f32 %v278, %v227
  %282 = vrot.lane.b32.xlu0 %v279, 64
  %v283 = vpop.permute.xlu0 %282
  %v285 = vmul.f32 %v278, %v283
  %287 = vrot.lane.b32.xlu0 %v285, 32
  %v288 = vpop.permute.xlu0 %287
  %v290 = vadd.f32 %v280, %v288
  %v291 = vtanh.pop %v290
  %293 = vrot.lane.b32.xlu0 %v291, 64
  %v294 = vpop.permute.xlu0 %293
  %v296 = vmul.f32 %v278, %v294
  %298 = vrot.lane.b32.xlu0 %v296, 32
  %v299 = vpop.permute.xlu0 %298
  %v300 = vsel %vm172, %v299, 0
  %302 = vmatpush.msra.mxu0 0.0
  %303 = vmatpush.msra.mxu0 0.0
  %304 = vmatpush.msra.mxu0 0.0
  %305 = vmatpush.msra.mxu0 0.0
  %306 = vmatpush.msra.mxu0 0.0
  %307 = vmatpush.msra.mxu0 0.0
  %308 = vmatpush.msra.mxu0 0.0
  %309 = vmatpush.msra.mxu0 0.0
  %310 = vmatpush.msra.mxu0 0.0
  %311 = vmatpush.msra.mxu0 0.0
  %312 = vmatpush.msra.mxu0 0.0
  %313 = vmatpush.msra.mxu0 0.0
  %314 = vmatpush.msra.mxu0 %v171
  %315 = vmatpush.msra.mxu0 %v170
  %316 = vmatpush.msra.mxu0 %v169
  %317 = vmatpush.msra.mxu0 %v168
  %318 = vmatmul.f32.gmra.mxu0 %v300
  %v319 = vpop.f32.mrf.mxu0
  %v320 = vadd.f32 0.0, %v319
  %321 = vdwg.mxu0
  %v322 = vadd.f32 %v110, %v320
  %v323 = vxor.u32 %v322, 2147483648
  %v324 = vmul.f32 %v323, 1.442695
  %v325 = vpow.pop %v324
  %v326 = vadd.f32 %v325, 1.0
  %v327 = vrcp.pop %v326
  %v328 = vmul.f32 %v326, %v327
  %v329 = vsub.f32 1.0, %v328
  %v330 = vmul.f32 %v327, %v329
  %v331 = vadd.f32 %v327, %v330
  %vm332 = vweird.f32 %v326
  %vm333 = vweird.f32 %v327
  %vm334 = vmor %vm332, %vm333
  %v335 = vsel %vm334, %v327, %v331
  %v336 = vand.u32 2147483647, %v326
  %vm337 = vcmp.eq.f32.partialorder %v336, 8.507059e+37
  %v338 = vand.u32 %v326, 2147483648
  %v339 = vor.u32 1.1754944e-38, %v338
  %v340 = vsel %vm337, %v339, %v335
  %v341 = vmul.f32 1.0, %v340
  %v342 = vtanh.pop %v322
  %v343 = vmul.f32 %v341, %v290
  %345 = vrot.lane.b32.xlu0 %v342, 64
  %v346 = vpop.permute.xlu0 %345
  %v348 = vmul.f32 %v341, %v346
  %350 = vrot.lane.b32.xlu0 %v348, 32
  %v351 = vpop.permute.xlu0 %350
  %v353 = vadd.f32 %v343, %v351
  %v354 = vtanh.pop %v353
  %356 = vrot.lane.b32.xlu0 %v354, 64
  %v357 = vpop.permute.xlu0 %356
  %v359 = vmul.f32 %v341, %v357
  %361 = vrot.lane.b32.xlu0 %v359, 32
  %v362 = vpop.permute.xlu0 %361
  %v363 = vsel %vm172, %v362, 0
  %365 = vmatpush.msra.mxu0 0.0
  %366 = vmatpush.msra.mxu0 0.0
  %367 = vmatpush.msra.mxu0 0.0
  %368 = vmatpush.msra.mxu0 0.0
  %369 = vmatpush.msra.mxu0 0.0
  %370 = vmatpush.msra.mxu0 0.0
  %371 = vmatpush.msra.mxu0 0.0
  %372 = vmatpush.msra.mxu0 0.0
  %373 = vmatpush.msra.mxu0 0.0
  %374 = vmatpush.msra.mxu0 0.0
  %375 = vmatpush.msra.mxu0 0.0
  %376 = vmatpush.msra.mxu0 0.0
  %377 = vmatpush.msra.mxu0 %v171
  %378 = vmatpush.msra.mxu0 %v170
  %379 = vmatpush.msra.mxu0 %v169
  %380 = vmatpush.msra.mxu0 %v168
  %381 = vmatmul.f32.gmra.mxu0 %v363
  %v382 = vpop.f32.mrf.mxu0
  %v383 = vadd.f32 0.0, %v382
  %384 = vdwg.mxu0
  %v385 = vadd.f32 %v113, %v383
  %v386 = vxor.u32 %v385, 2147483648
  %v387 = vmul.f32 %v386, 1.442695
  %v388 = vpow.pop %v387
  %v389 = vadd.f32 %v388, 1.0
  %v390 = vrcp.pop %v389
  %v391 = vmul.f32 %v389, %v390
  %v392 = vsub.f32 1.0, %v391
  %v393 = vmul.f32 %v390, %v392
  %v394 = vadd.f32 %v390, %v393
  %vm395 = vweird.f32 %v389
  %vm396 = vweird.f32 %v390
  %vm397 = vmor %vm395, %vm396
  %v398 = vsel %vm397, %v390, %v394
  %v399 = vand.u32 2147483647, %v389
  %vm400 = vcmp.eq.f32.partialorder %v399, 8.507059e+37
  %v401 = vand.u32 %v389, 2147483648
  %v402 = vor.u32 1.1754944e-38, %v401
  %v403 = vsel %vm400, %v402, %v398
  %v404 = vmul.f32 1.0, %v403
  %v405 = vtanh.pop %v385
  %v406 = vmul.f32 %v404, %v353
  %408 = vrot.lane.b32.xlu0 %v405, 64
  %v409 = vpop.permute.xlu0 %408
  %v411 = vmul.f32 %v404, %v409
  %413 = vrot.lane.b32.xlu0 %v411, 32
  %v414 = vpop.permute.xlu0 %413
  %v416 = vadd.f32 %v406, %v414
  %v417 = vtanh.pop %v416
  %419 = vrot.lane.b32.xlu0 %v417, 64
  %v420 = vpop.permute.xlu0 %419
  %v422 = vmul.f32 %v404, %v420
  %424 = vrot.lane.b32.xlu0 %v422, 32
  %v425 = vpop.permute.xlu0 %424
  %v426 = vsel %vm172, %v425, 0
  %428 = vmatpush.msra.mxu0 0.0
  %429 = vmatpush.msra.mxu0 0.0
  %430 = vmatpush.msra.mxu0 0.0
  %431 = vmatpush.msra.mxu0 0.0
  %432 = vmatpush.msra.mxu0 0.0
  %433 = vmatpush.msra.mxu0 0.0
  %434 = vmatpush.msra.mxu0 0.0
  %435 = vmatpush.msra.mxu0 0.0
  %436 = vmatpush.msra.mxu0 0.0
  %437 = vmatpush.msra.mxu0 0.0
  %438 = vmatpush.msra.mxu0 0.0
  %439 = vmatpush.msra.mxu0 0.0
  %440 = vmatpush.msra.mxu0 %v171
  %441 = vmatpush.msra.mxu0 %v170
  %442 = vmatpush.msra.mxu0 %v169
  %443 = vmatpush.msra.mxu0 %v168
  %444 = vmatmul.f32.gmra.mxu0 %v426
  %v445 = vpop.f32.mrf.mxu0
  %v446 = vadd.f32 0.0, %v445
  %447 = vdwg.mxu0
  %v448 = vadd.f32 %v116, %v446
  %v449 = vxor.u32 %v448, 2147483648
  %v450 = vmul.f32 %v449, 1.442695
  %v451 = vpow.pop %v450
  %v452 = vadd.f32 %v451, 1.0
  %v453 = vrcp.pop %v452
  %v454 = vmul.f32 %v452, %v453
  %v455 = vsub.f32 1.0, %v454
  %v456 = vmul.f32 %v453, %v455
  %v457 = vadd.f32 %v453, %v456
  %vm458 = vweird.f32 %v452
  %vm459 = vweird.f32 %v453
  %vm460 = vmor %vm458, %vm459
  %v461 = vsel %vm460, %v453, %v457
  %v462 = vand.u32 2147483647, %v452
  %vm463 = vcmp.eq.f32.partialorder %v462, 8.507059e+37
  %v464 = vand.u32 %v452, 2147483648
  %v465 = vor.u32 1.1754944e-38, %v464
  %v466 = vsel %vm463, %v465, %v461
  %v467 = vmul.f32 1.0, %v466
  %v468 = vtanh.pop %v448
  %v469 = vmul.f32 %v467, %v416
  %471 = vrot.lane.b32.xlu0 %v468, 64
  %v472 = vpop.permute.xlu0 %471
  %v474 = vmul.f32 %v467, %v472
  %476 = vrot.lane.b32.xlu0 %v474, 32
  %v477 = vpop.permute.xlu0 %476
  %v479 = vadd.f32 %v469, %v477
  %v480 = vtanh.pop %v479
  %482 = vrot.lane.b32.xlu0 %v480, 64
  %v483 = vpop.permute.xlu0 %482
  %v485 = vmul.f32 %v467, %v483
  %487 = vrot.lane.b32.xlu0 %v485, 32
  %v488 = vpop.permute.xlu0 %487
  %v489 = vsel %vm172, %v488, 0
  %491 = vmatpush.msra.mxu0 0.0
  %492 = vmatpush.msra.mxu0 0.0
  %493 = vmatpush.msra.mxu0 0.0
  %494 = vmatpush.msra.mxu0 0.0
  %495 = vmatpush.msra.mxu0 0.0
  %496 = vmatpush.msra.mxu0 0.0
  %497 = vmatpush.msra.mxu0 0.0
  %498 = vmatpush.msra.mxu0 0.0
  %499 = vmatpush.msra.mxu0 0.0
  %500 = vmatpush.msra.mxu0 0.0
  %501 = vmatpush.msra.mxu0 0.0
  %502 = vmatpush.msra.mxu0 0.0
  %503 = vmatpush.msra.mxu0 %v171
  %504 = vmatpush.msra.mxu0 %v170
  %505 = vmatpush.msra.mxu0 %v169
  %506 = vmatpush.msra.mxu0 %v168
  %507 = vmatmul.f32.gmra.mxu0 %v489
  %v508 = vpop.f32.mrf.mxu0
  %v509 = vadd.f32 0.0, %v508
  %510 = vdwg.mxu0
  %v511 = vadd.f32 %v119, %v509
  %v512 = vxor.u32 %v511, 2147483648
  %v513 = vmul.f32 %v512, 1.442695
  %v514 = vpow.pop %v513
  %v515 = vadd.f32 %v514, 1.0
  %v516 = vrcp.pop %v515
  %v517 = vmul.f32 %v515, %v516
  %v518 = vsub.f32 1.0, %v517
  %v519 = vmul.f32 %v516, %v518
  %v520 = vadd.f32 %v516, %v519
  %vm521 = vweird.f32 %v515
  %vm522 = vweird.f32 %v516
  %vm523 = vmor %vm521, %vm522
  %v524 = vsel %vm523, %v516, %v520
  %v525 = vand.u32 2147483647, %v515
  %vm526 = vcmp.eq.f32.partialorder %v525, 8.507059e+37
  %v527 = vand.u32 %v515, 2147483648
  %v528 = vor.u32 1.1754944e-38, %v527
  %v529 = vsel %vm526, %v528, %v524
  %v530 = vmul.f32 1.0, %v529
  %v531 = vtanh.pop %v511
  %v532 = vmul.f32 %v530, %v479
  %534 = vrot.lane.b32.xlu0 %v531, 64
  %v535 = vpop.permute.xlu0 %534
  %v537 = vmul.f32 %v530, %v535
  %539 = vrot.lane.b32.xlu0 %v537, 32
  %v540 = vpop.permute.xlu0 %539
  %v542 = vadd.f32 %v532, %v540
  %v543 = vtanh.pop %v542
  %545 = vrot.lane.b32.xlu0 %v543, 64
  %v546 = vpop.permute.xlu0 %545
  %v548 = vmul.f32 %v530, %v546
  %550 = vrot.lane.b32.xlu0 %v548, 32
  %v551 = vpop.permute.xlu0 %550
  %v552 = vsel %vm172, %v551, 0
  %554 = vmatpush.msra.mxu0 0.0
  %555 = vmatpush.msra.mxu0 0.0
  %556 = vmatpush.msra.mxu0 0.0
  %557 = vmatpush.msra.mxu0 0.0
  %558 = vmatpush.msra.mxu0 0.0
  %559 = vmatpush.msra.mxu0 0.0
  %560 = vmatpush.msra.mxu0 0.0
  %561 = vmatpush.msra.mxu0 0.0
  %562 = vmatpush.msra.mxu0 0.0
  %563 = vmatpush.msra.mxu0 0.0
  %564 = vmatpush.msra.mxu0 0.0
  %565 = vmatpush.msra.mxu0 0.0
  %566 = vmatpush.msra.mxu0 %v171
  %567 = vmatpush.msra.mxu0 %v170
  %568 = vmatpush.msra.mxu0 %v169
  %569 = vmatpush.msra.mxu0 %v168
  %570 = vmatmul.f32.gmra.mxu0 %v552
  %v571 = vpop.f32.mrf.mxu0
  %v572 = vadd.f32 0.0, %v571
  %573 = vdwg.mxu0
  %v574 = vadd.f32 %v122, %v572
  %v575 = vxor.u32 %v574, 2147483648
  %v576 = vmul.f32 %v575, 1.442695
  %v577 = vpow.pop %v576
  %v578 = vadd.f32 %v577, 1.0
  %v579 = vrcp.pop %v578
  %v580 = vmul.f32 %v578, %v579
  %v581 = vsub.f32 1.0, %v580
  %v582 = vmul.f32 %v579, %v581
  %v583 = vadd.f32 %v579, %v582
  %vm584 = vweird.f32 %v578
  %vm585 = vweird.f32 %v579
  %vm586 = vmor %vm584, %vm585
  %v587 = vsel %vm586, %v579, %v583
  %v588 = vand.u32 2147483647, %v578
  %vm589 = vcmp.eq.f32.partialorder %v588, 8.507059e+37
  %v590 = vand.u32 %v578, 2147483648
  %v591 = vor.u32 1.1754944e-38, %v590
  %v592 = vsel %vm589, %v591, %v587
  %v593 = vmul.f32 1.0, %v592
  %v594 = vtanh.pop %v574
  %v595 = vmul.f32 %v593, %v542
  %597 = vrot.lane.b32.xlu0 %v594, 64
  %v598 = vpop.permute.xlu0 %597
  %v600 = vmul.f32 %v593, %v598
  %602 = vrot.lane.b32.xlu0 %v600, 32
  %v603 = vpop.permute.xlu0 %602
  %v605 = vadd.f32 %v595, %v603
  %v606 = vtanh.pop %v605
  %608 = vrot.lane.b32.xlu0 %v606, 64
  %v609 = vpop.permute.xlu0 %608
  %v611 = vmul.f32 %v593, %v609
  %613 = vrot.lane.b32.xlu0 %v611, 32
  %v614 = vpop.permute.xlu0 %613
  %v615 = vsel %vm172, %v614, 0
  %617 = vmatpush.msra.mxu0 0.0
  %618 = vmatpush.msra.mxu0 0.0
  %619 = vmatpush.msra.mxu0 0.0
  %620 = vmatpush.msra.mxu0 0.0
  %621 = vmatpush.msra.mxu0 0.0
  %622 = vmatpush.msra.mxu0 0.0
  %623 = vmatpush.msra.mxu0 0.0
  %624 = vmatpush.msra.mxu0 0.0
  %625 = vmatpush.msra.mxu0 0.0
  %626 = vmatpush.msra.mxu0 0.0
  %627 = vmatpush.msra.mxu0 0.0
  %628 = vmatpush.msra.mxu0 0.0
  %629 = vmatpush.msra.mxu0 %v171
  %630 = vmatpush.msra.mxu0 %v170
  %631 = vmatpush.msra.mxu0 %v169
  %632 = vmatpush.msra.mxu0 %v168
  %633 = vmatmul.f32.gmra.mxu0 %v615
  %v634 = vpop.f32.mrf.mxu0
  %v635 = vadd.f32 0.0, %v634
  %636 = vdwg.mxu0
  %v637 = vadd.f32 %v125, %v635
  %v638 = vxor.u32 %v637, 2147483648
  %v639 = vmul.f32 %v638, 1.442695
  %v640 = vpow.pop %v639
  %v641 = vadd.f32 %v640, 1.0
  %v642 = vrcp.pop %v641
  %v643 = vmul.f32 %v641, %v642
  %v644 = vsub.f32 1.0, %v643
  %v645 = vmul.f32 %v642, %v644
  %v646 = vadd.f32 %v642, %v645
  %vm647 = vweird.f32 %v641
  %vm648 = vweird.f32 %v642
  %vm649 = vmor %vm647, %vm648
  %v650 = vsel %vm649, %v642, %v646
  %v651 = vand.u32 2147483647, %v641
  %vm652 = vcmp.eq.f32.partialorder %v651, 8.507059e+37
  %v653 = vand.u32 %v641, 2147483648
  %v654 = vor.u32 1.1754944e-38, %v653
  %v655 = vsel %vm652, %v654, %v650
  %v656 = vmul.f32 1.0, %v655
  %v657 = vtanh.pop %v637
  %v658 = vmul.f32 %v656, %v605
  %660 = vrot.lane.b32.xlu0 %v657, 64
  %v661 = vpop.permute.xlu0 %660
  %v663 = vmul.f32 %v656, %v661
  %665 = vrot.lane.b32.xlu0 %v663, 32
  %v666 = vpop.permute.xlu0 %665
  %v668 = vadd.f32 %v658, %v666
  %v669 = vtanh.pop %v668
  %671 = vrot.lane.b32.xlu0 %v669, 64
  %v672 = vpop.permute.xlu0 %671
  %v674 = vmul.f32 %v656, %v672
  %s675 = scalar_lea.vmem %s2, 32
  %v676 = vld [vmem:[%s675] sm:$0xff]
  %v677 = vld [vmem:[%s675 + $0x8] sm:$0xff]
  %v678 = vld [vmem:[%s675 + $0x10] sm:$0xff]
  %v679 = vld [vmem:[%s675 + $0x18] sm:$0xff]
  %680 = vmatpush.msra.mxu0 0.0
  %681 = vmatpush.msra.mxu0 0.0
  %682 = vmatpush.msra.mxu0 0.0
  %683 = vmatpush.msra.mxu0 0.0
  %684 = vmatpush.msra.mxu0 0.0
  %685 = vmatpush.msra.mxu0 0.0
  %686 = vmatpush.msra.mxu0 0.0
  %687 = vmatpush.msra.mxu0 0.0
  %688 = vmatpush.msra.mxu0 0.0
  %689 = vmatpush.msra.mxu0 0.0
  %690 = vmatpush.msra.mxu0 0.0
  %691 = vmatpush.msra.mxu0 0.0
  %692 = vmatpush.msra.mxu0 %v679
  %693 = vmatpush.msra.mxu0 %v678
  %694 = vmatpush.msra.mxu0 %v677
  %695 = vmatpush.msra.mxu0 %v676
  %696 = vmatmul.f32.gmra.mxu0 %v174
  %v697 = vpop.f32.mrf.mxu0
  %v698 = vadd.f32 0.0, %v697
  %699 = vdwg.mxu0
  %v700 = vadd.f32 %v166, %v698
  %v701 = vxor.u32 %v700, 2147483648
  %v702 = vmul.f32 %v701, 1.442695
  %v703 = vpow.pop %v702
  %v704 = vadd.f32 %v703, 1.0
  %v705 = vrcp.pop %v704
  %v706 = vmul.f32 %v704, %v705
  %v707 = vsub.f32 1.0, %v706
  %v708 = vmul.f32 %v705, %v707
  %v709 = vadd.f32 %v705, %v708
  %vm710 = vweird.f32 %v704
  %vm711 = vweird.f32 %v705
  %vm712 = vmor %vm710, %vm711
  %v713 = vsel %vm712, %v705, %v709
  %v714 = vand.u32 2147483647, %v704
  %vm715 = vcmp.eq.f32.partialorder %v714, 8.507059e+37
  %v716 = vand.u32 %v704, 2147483648
  %v717 = vor.u32 1.1754944e-38, %v716
  %v718 = vsel %vm715, %v717, %v713
  %v719 = vmul.f32 1.0, %v718
  %v720 = vtanh.pop %v700
  %v721 = vmul.f32 %v719, 0.0
  %723 = vrot.lane.b32.xlu0 %v720, 64
  %v724 = vpop.permute.xlu0 %723
  %v726 = vmul.f32 %v719, %v724
  %728 = vrot.lane.b32.xlu0 %v726, 32
  %v729 = vpop.permute.xlu0 %728
  %v731 = vadd.f32 %v721, %v729
  %v732 = vtanh.pop %v731
  %734 = vrot.lane.b32.xlu0 %v732, 64
  %v735 = vpop.permute.xlu0 %734
  %v737 = vmul.f32 %v719, %v735
  %739 = vrot.lane.b32.xlu0 %v737, 32
  %v740 = vpop.permute.xlu0 %739
  %v741 = vsel %vm172, %v740, 0
  %743 = vmatpush.msra.mxu0 0.0
  %744 = vmatpush.msra.mxu0 0.0
  %745 = vmatpush.msra.mxu0 0.0
  %746 = vmatpush.msra.mxu0 0.0
  %747 = vmatpush.msra.mxu0 0.0
  %748 = vmatpush.msra.mxu0 0.0
  %749 = vmatpush.msra.mxu0 0.0
  %750 = vmatpush.msra.mxu0 0.0
  %751 = vmatpush.msra.mxu0 0.0
  %752 = vmatpush.msra.mxu0 0.0
  %753 = vmatpush.msra.mxu0 0.0
  %754 = vmatpush.msra.mxu0 0.0
  %755 = vmatpush.msra.mxu0 %v679
  %756 = vmatpush.msra.mxu0 %v678
  %757 = vmatpush.msra.mxu0 %v677
  %758 = vmatpush.msra.mxu0 %v676
  %759 = vmatmul.f32.gmra.mxu0 %v741
  %v760 = vpop.f32.mrf.mxu0
  %v761 = vadd.f32 0.0, %v760
  %762 = vdwg.mxu0
  %v763 = vadd.f32 %v163, %v761
  %v764 = vxor.u32 %v763, 2147483648
  %v765 = vmul.f32 %v764, 1.442695
  %v766 = vpow.pop %v765
  %v767 = vadd.f32 %v766, 1.0
  %v768 = vrcp.pop %v767
  %v769 = vmul.f32 %v767, %v768
  %v770 = vsub.f32 1.0, %v769
  %v771 = vmul.f32 %v768, %v770
  %v772 = vadd.f32 %v768, %v771
  %vm773 = vweird.f32 %v767
  %vm774 = vweird.f32 %v768
  %vm775 = vmor %vm773, %vm774
  %v776 = vsel %vm775, %v768, %v772
  %v777 = vand.u32 2147483647, %v767
  %vm778 = vcmp.eq.f32.partialorder %v777, 8.507059e+37
  %v779 = vand.u32 %v767, 2147483648
  %v780 = vor.u32 1.1754944e-38, %v779
  %v781 = vsel %vm778, %v780, %v776
  %v782 = vmul.f32 1.0, %v781
  %v783 = vtanh.pop %v763
  %v784 = vmul.f32 %v782, %v731
  %786 = vrot.lane.b32.xlu0 %v783, 64
  %v787 = vpop.permute.xlu0 %786
  %v789 = vmul.f32 %v782, %v787
  %791 = vrot.lane.b32.xlu0 %v789, 32
  %v792 = vpop.permute.xlu0 %791
  %v794 = vadd.f32 %v784, %v792
  %v795 = vtanh.pop %v794
  %797 = vrot.lane.b32.xlu0 %v795, 64
  %v798 = vpop.permute.xlu0 %797
  %v800 = vmul.f32 %v782, %v798
  %802 = vrot.lane.b32.xlu0 %v800, 32
  %v803 = vpop.permute.xlu0 %802
  %v804 = vsel %vm172, %v803, 0
  %806 = vmatpush.msra.mxu0 0.0
  %807 = vmatpush.msra.mxu0 0.0
  %808 = vmatpush.msra.mxu0 0.0
  %809 = vmatpush.msra.mxu0 0.0
  %810 = vmatpush.msra.mxu0 0.0
  %811 = vmatpush.msra.mxu0 0.0
  %812 = vmatpush.msra.mxu0 0.0
  %813 = vmatpush.msra.mxu0 0.0
  %814 = vmatpush.msra.mxu0 0.0
  %815 = vmatpush.msra.mxu0 0.0
  %816 = vmatpush.msra.mxu0 0.0
  %817 = vmatpush.msra.mxu0 0.0
  %818 = vmatpush.msra.mxu0 %v679
  %819 = vmatpush.msra.mxu0 %v678
  %820 = vmatpush.msra.mxu0 %v677
  %821 = vmatpush.msra.mxu0 %v676
  %822 = vmatmul.f32.gmra.mxu0 %v804
  %v823 = vpop.f32.mrf.mxu0
  %v824 = vadd.f32 0.0, %v823
  %825 = vdwg.mxu0
  %v826 = vadd.f32 %v160, %v824
  %v827 = vxor.u32 %v826, 2147483648
  %v828 = vmul.f32 %v827, 1.442695
  %v829 = vpow.pop %v828
  %v830 = vadd.f32 %v829, 1.0
  %v831 = vrcp.pop %v830
  %v832 = vmul.f32 %v830, %v831
  %v833 = vsub.f32 1.0, %v832
  %v834 = vmul.f32 %v831, %v833
  %v835 = vadd.f32 %v831, %v834
  %vm836 = vweird.f32 %v830
  %vm837 = vweird.f32 %v831
  %vm838 = vmor %vm836, %vm837
  %v839 = vsel %vm838, %v831, %v835
  %v840 = vand.u32 2147483647, %v830
  %vm841 = vcmp.eq.f32.partialorder %v840, 8.507059e+37
  %v842 = vand.u32 %v830, 2147483648
  %v843 = vor.u32 1.1754944e-38, %v842
  %v844 = vsel %vm841, %v843, %v839
  %v845 = vmul.f32 1.0, %v844
  %v846 = vtanh.pop %v826
  %v847 = vmul.f32 %v845, %v794
  %849 = vrot.lane.b32.xlu0 %v846, 64
  %v850 = vpop.permute.xlu0 %849
  %v852 = vmul.f32 %v845, %v850
  %854 = vrot.lane.b32.xlu0 %v852, 32
  %v855 = vpop.permute.xlu0 %854
  %v857 = vadd.f32 %v847, %v855
  %v858 = vtanh.pop %v857
  %860 = vrot.lane.b32.xlu0 %v858, 64
  %v861 = vpop.permute.xlu0 %860
  %v863 = vmul.f32 %v845, %v861
  %865 = vrot.lane.b32.xlu0 %v863, 32
  %v866 = vpop.permute.xlu0 %865
  %v867 = vsel %vm172, %v866, 0
  %869 = vmatpush.msra.mxu0 0.0
  %870 = vmatpush.msra.mxu0 0.0
  %871 = vmatpush.msra.mxu0 0.0
  %872 = vmatpush.msra.mxu0 0.0
  %873 = vmatpush.msra.mxu0 0.0
  %874 = vmatpush.msra.mxu0 0.0
  %875 = vmatpush.msra.mxu0 0.0
  %876 = vmatpush.msra.mxu0 0.0
  %877 = vmatpush.msra.mxu0 0.0
  %878 = vmatpush.msra.mxu0 0.0
  %879 = vmatpush.msra.mxu0 0.0
  %880 = vmatpush.msra.mxu0 0.0
  %881 = vmatpush.msra.mxu0 %v679
  %882 = vmatpush.msra.mxu0 %v678
  %883 = vmatpush.msra.mxu0 %v677
  %884 = vmatpush.msra.mxu0 %v676
  %885 = vmatmul.f32.gmra.mxu0 %v867
  %v886 = vpop.f32.mrf.mxu0
  %v887 = vadd.f32 0.0, %v886
  %888 = vdwg.mxu0
  %v889 = vadd.f32 %v157, %v887
  %v890 = vxor.u32 %v889, 2147483648
  %v891 = vmul.f32 %v890, 1.442695
  %v892 = vpow.pop %v891
  %v893 = vadd.f32 %v892, 1.0
  %v894 = vrcp.pop %v893
  %v895 = vmul.f32 %v893, %v894
  %v896 = vsub.f32 1.0, %v895
  %v897 = vmul.f32 %v894, %v896
  %v898 = vadd.f32 %v894, %v897
  %vm899 = vweird.f32 %v893
  %vm900 = vweird.f32 %v894
  %vm901 = vmor %vm899, %vm900
  %v902 = vsel %vm901, %v894, %v898
  %v903 = vand.u32 2147483647, %v893
  %vm904 = vcmp.eq.f32.partialorder %v903, 8.507059e+37
  %v905 = vand.u32 %v893, 2147483648
  %v906 = vor.u32 1.1754944e-38, %v905
  %v907 = vsel %vm904, %v906, %v902
  %v908 = vmul.f32 1.0, %v907
  %v909 = vtanh.pop %v889
  %v910 = vmul.f32 %v908, %v857
  %912 = vrot.lane.b32.xlu0 %v909, 64
  %v913 = vpop.permute.xlu0 %912
  %v915 = vmul.f32 %v908, %v913
  %917 = vrot.lane.b32.xlu0 %v915, 32
  %v918 = vpop.permute.xlu0 %917
  %v920 = vadd.f32 %v910, %v918
  %v921 = vtanh.pop %v920
  %923 = vrot.lane.b32.xlu0 %v921, 64
  %v924 = vpop.permute.xlu0 %923
  %v926 = vmul.f32 %v908, %v924
  %928 = vrot.lane.b32.xlu0 %v926, 32
  %v929 = vpop.permute.xlu0 %928
  %v930 = vsel %vm172, %v929, 0
  %932 = vmatpush.msra.mxu0 0.0
  %933 = vmatpush.msra.mxu0 0.0
  %934 = vmatpush.msra.mxu0 0.0
  %935 = vmatpush.msra.mxu0 0.0
  %936 = vmatpush.msra.mxu0 0.0
  %937 = vmatpush.msra.mxu0 0.0
  %938 = vmatpush.msra.mxu0 0.0
  %939 = vmatpush.msra.mxu0 0.0
  %940 = vmatpush.msra.mxu0 0.0
  %941 = vmatpush.msra.mxu0 0.0
  %942 = vmatpush.msra.mxu0 0.0
  %943 = vmatpush.msra.mxu0 0.0
  %944 = vmatpush.msra.mxu0 %v679
  %945 = vmatpush.msra.mxu0 %v678
  %946 = vmatpush.msra.mxu0 %v677
  %947 = vmatpush.msra.mxu0 %v676
  %948 = vmatmul.f32.gmra.mxu0 %v930
  %v949 = vpop.f32.mrf.mxu0
  %v950 = vadd.f32 0.0, %v949
  %951 = vdwg.mxu0
  %v952 = vadd.f32 %v154, %v950
  %v953 = vxor.u32 %v952, 2147483648
  %v954 = vmul.f32 %v953, 1.442695
  %v955 = vpow.pop %v954
  %v956 = vadd.f32 %v955, 1.0
  %v957 = vrcp.pop %v956
  %v958 = vmul.f32 %v956, %v957
  %v959 = vsub.f32 1.0, %v958
  %v960 = vmul.f32 %v957, %v959
  %v961 = vadd.f32 %v957, %v960
  %vm962 = vweird.f32 %v956
  %vm963 = vweird.f32 %v957
  %vm964 = vmor %vm962, %vm963
  %v965 = vsel %vm964, %v957, %v961
  %v966 = vand.u32 2147483647, %v956
  %vm967 = vcmp.eq.f32.partialorder %v966, 8.507059e+37
  %v968 = vand.u32 %v956, 2147483648
  %v969 = vor.u32 1.1754944e-38, %v968
  %v970 = vsel %vm967, %v969, %v965
  %v971 = vmul.f32 1.0, %v970
  %v972 = vtanh.pop %v952
  %v973 = vmul.f32 %v971, %v920
  %975 = vrot.lane.b32.xlu0 %v972, 64
  %v976 = vpop.permute.xlu0 %975
  %v978 = vmul.f32 %v971, %v976
  %980 = vrot.lane.b32.xlu0 %v978, 32
  %v981 = vpop.permute.xlu0 %980
  %v983 = vadd.f32 %v973, %v981
  %v984 = vtanh.pop %v983
  %986 = vrot.lane.b32.xlu0 %v984, 64
  %v987 = vpop.permute.xlu0 %986
  %v989 = vmul.f32 %v971, %v987
  %991 = vrot.lane.b32.xlu0 %v989, 32
  %v992 = vpop.permute.xlu0 %991
  %v993 = vsel %vm172, %v992, 0
  %995 = vmatpush.msra.mxu0 0.0
  %996 = vmatpush.msra.mxu0 0.0
  %997 = vmatpush.msra.mxu0 0.0
  %998 = vmatpush.msra.mxu0 0.0
  %999 = vmatpush.msra.mxu0 0.0
  %1000 = vmatpush.msra.mxu0 0.0
  %1001 = vmatpush.msra.mxu0 0.0
  %1002 = vmatpush.msra.mxu0 0.0
  %1003 = vmatpush.msra.mxu0 0.0
  %1004 = vmatpush.msra.mxu0 0.0
  %1005 = vmatpush.msra.mxu0 0.0
  %1006 = vmatpush.msra.mxu0 0.0
  %1007 = vmatpush.msra.mxu0 %v679
  %1008 = vmatpush.msra.mxu0 %v678
  %1009 = vmatpush.msra.mxu0 %v677
  %1010 = vmatpush.msra.mxu0 %v676
  %1011 = vmatmul.f32.gmra.mxu0 %v993
  %v1012 = vpop.f32.mrf.mxu0
  %v1013 = vadd.f32 0.0, %v1012
  %1014 = vdwg.mxu0
  %v1015 = vadd.f32 %v151, %v1013
  %v1016 = vxor.u32 %v1015, 2147483648
  %v1017 = vmul.f32 %v1016, 1.442695
  %v1018 = vpow.pop %v1017
  %v1019 = vadd.f32 %v1018, 1.0
  %v1020 = vrcp.pop %v1019
  %v1021 = vmul.f32 %v1019, %v1020
  %v1022 = vsub.f32 1.0, %v1021
  %v1023 = vmul.f32 %v1020, %v1022
  %v1024 = vadd.f32 %v1020, %v1023
  %vm1025 = vweird.f32 %v1019
  %vm1026 = vweird.f32 %v1020
  %vm1027 = vmor %vm1025, %vm1026
  %v1028 = vsel %vm1027, %v1020, %v1024
  %v1029 = vand.u32 2147483647, %v1019
  %vm1030 = vcmp.eq.f32.partialorder %v1029, 8.507059e+37
  %v1031 = vand.u32 %v1019, 2147483648
  %v1032 = vor.u32 1.1754944e-38, %v1031
  %v1033 = vsel %vm1030, %v1032, %v1028
  %v1034 = vmul.f32 1.0, %v1033
  %v1035 = vtanh.pop %v1015
  %v1036 = vmul.f32 %v1034, %v983
  %1038 = vrot.lane.b32.xlu0 %v1035, 64
  %v1039 = vpop.permute.xlu0 %1038
  %v1041 = vmul.f32 %v1034, %v1039
  %1043 = vrot.lane.b32.xlu0 %v1041, 32
  %v1044 = vpop.permute.xlu0 %1043
  %v1046 = vadd.f32 %v1036, %v1044
  %v1047 = vtanh.pop %v1046
  %1049 = vrot.lane.b32.xlu0 %v1047, 64
  %v1050 = vpop.permute.xlu0 %1049
  %v1052 = vmul.f32 %v1034, %v1050
  %1054 = vrot.lane.b32.xlu0 %v1052, 32
  %v1055 = vpop.permute.xlu0 %1054
  %v1056 = vsel %vm172, %v1055, 0
  %1058 = vmatpush.msra.mxu0 0.0
  %1059 = vmatpush.msra.mxu0 0.0
  %1060 = vmatpush.msra.mxu0 0.0
  %1061 = vmatpush.msra.mxu0 0.0
  %1062 = vmatpush.msra.mxu0 0.0
  %1063 = vmatpush.msra.mxu0 0.0
  %1064 = vmatpush.msra.mxu0 0.0
  %1065 = vmatpush.msra.mxu0 0.0
  %1066 = vmatpush.msra.mxu0 0.0
  %1067 = vmatpush.msra.mxu0 0.0
  %1068 = vmatpush.msra.mxu0 0.0
  %1069 = vmatpush.msra.mxu0 0.0
  %1070 = vmatpush.msra.mxu0 %v679
  %1071 = vmatpush.msra.mxu0 %v678
  %1072 = vmatpush.msra.mxu0 %v677
  %1073 = vmatpush.msra.mxu0 %v676
  %1074 = vmatmul.f32.gmra.mxu0 %v1056
  %v1075 = vpop.f32.mrf.mxu0
  %v1076 = vadd.f32 0.0, %v1075
  %1077 = vdwg.mxu0
  %v1078 = vadd.f32 %v148, %v1076
  %v1079 = vxor.u32 %v1078, 2147483648
  %v1080 = vmul.f32 %v1079, 1.442695
  %v1081 = vpow.pop %v1080
  %v1082 = vadd.f32 %v1081, 1.0
  %v1083 = vrcp.pop %v1082
  %v1084 = vmul.f32 %v1082, %v1083
  %v1085 = vsub.f32 1.0, %v1084
  %v1086 = vmul.f32 %v1083, %v1085
  %v1087 = vadd.f32 %v1083, %v1086
  %vm1088 = vweird.f32 %v1082
  %vm1089 = vweird.f32 %v1083
  %vm1090 = vmor %vm1088, %vm1089
  %v1091 = vsel %vm1090, %v1083, %v1087
  %v1092 = vand.u32 2147483647, %v1082
  %vm1093 = vcmp.eq.f32.partialorder %v1092, 8.507059e+37
  %v1094 = vand.u32 %v1082, 2147483648
  %v1095 = vor.u32 1.1754944e-38, %v1094
  %v1096 = vsel %vm1093, %v1095, %v1091
  %v1097 = vmul.f32 1.0, %v1096
  %v1098 = vtanh.pop %v1078
  %v1099 = vmul.f32 %v1097, %v1046
  %1101 = vrot.lane.b32.xlu0 %v1098, 64
  %v1102 = vpop.permute.xlu0 %1101
  %v1104 = vmul.f32 %v1097, %v1102
  %1106 = vrot.lane.b32.xlu0 %v1104, 32
  %v1107 = vpop.permute.xlu0 %1106
  %v1109 = vadd.f32 %v1099, %v1107
  %v1110 = vtanh.pop %v1109
  %1112 = vrot.lane.b32.xlu0 %v1110, 64
  %v1113 = vpop.permute.xlu0 %1112
  %v1115 = vmul.f32 %v1097, %v1113
  %1117 = vrot.lane.b32.xlu0 %v1115, 32
  %v1118 = vpop.permute.xlu0 %1117
  %v1119 = vsel %vm172, %v1118, 0
  %1121 = vmatpush.msra.mxu0 0.0
  %1122 = vmatpush.msra.mxu0 0.0
  %1123 = vmatpush.msra.mxu0 0.0
  %1124 = vmatpush.msra.mxu0 0.0
  %1125 = vmatpush.msra.mxu0 0.0
  %1126 = vmatpush.msra.mxu0 0.0
  %1127 = vmatpush.msra.mxu0 0.0
  %1128 = vmatpush.msra.mxu0 0.0
  %1129 = vmatpush.msra.mxu0 0.0
  %1130 = vmatpush.msra.mxu0 0.0
  %1131 = vmatpush.msra.mxu0 0.0
  %1132 = vmatpush.msra.mxu0 0.0
  %1133 = vmatpush.msra.mxu0 %v679
  %1134 = vmatpush.msra.mxu0 %v678
  %1135 = vmatpush.msra.mxu0 %v677
  %1136 = vmatpush.msra.mxu0 %v676
  %1137 = vmatmul.f32.gmra.mxu0 %v1119
  %v1138 = vpop.f32.mrf.mxu0
  %v1139 = vadd.f32 0.0, %v1138
  %1140 = vdwg.mxu0
  %v1141 = vadd.f32 %v145, %v1139
  %v1142 = vxor.u32 %v1141, 2147483648
  %v1143 = vmul.f32 %v1142, 1.442695
  %v1144 = vpow.pop %v1143
  %v1145 = vadd.f32 %v1144, 1.0
  %v1146 = vrcp.pop %v1145
  %v1147 = vmul.f32 %v1145, %v1146
  %v1148 = vsub.f32 1.0, %v1147
  %v1149 = vmul.f32 %v1146, %v1148
  %v1150 = vadd.f32 %v1146, %v1149
  %vm1151 = vweird.f32 %v1145
  %vm1152 = vweird.f32 %v1146
  %vm1153 = vmor %vm1151, %vm1152
  %v1154 = vsel %vm1153, %v1146, %v1150
  %v1155 = vand.u32 2147483647, %v1145
  %vm1156 = vcmp.eq.f32.partialorder %v1155, 8.507059e+37
  %v1157 = vand.u32 %v1145, 2147483648
  %v1158 = vor.u32 1.1754944e-38, %v1157
  %v1159 = vsel %vm1156, %v1158, %v1154
  %v1160 = vmul.f32 1.0, %v1159
  %v1161 = vtanh.pop %v1141
  %v1162 = vmul.f32 %v1160, %v1109
  %1164 = vrot.lane.b32.xlu0 %v1161, 64
  %v1165 = vpop.permute.xlu0 %1164
  %v1167 = vmul.f32 %v1160, %v1165
  %1169 = vrot.lane.b32.xlu0 %v1167, 32
  %v1170 = vpop.permute.xlu0 %1169
  %v1172 = vadd.f32 %v1162, %v1170
  %v1173 = vtanh.pop %v1172
  %1175 = vrot.lane.b32.xlu0 %v1173, 64
  %v1176 = vpop.permute.xlu0 %1175
  %v1178 = vmul.f32 %v1160, %v1176
  %1180 = vrot.lane.b32.xlu0 %v674, 32
  %v1181 = vpop.permute.xlu0 %1180
  %1191 = vrot.lane.b32.xlu0 %v1178, 64
  %v1192 = vpop.permute.xlu0 %1191
  %1193 = vrot.lane.b32.xlu0 %v1115, 64
  %v1194 = vpop.permute.xlu0 %1193
  %1195 = vrot.lane.b32.xlu0 %v1052, 64
  %v1196 = vpop.permute.xlu0 %1195
  %1197 = vrot.lane.b32.xlu0 %v989, 64
  %v1198 = vpop.permute.xlu0 %1197
  %1199 = vrot.lane.b32.xlu0 %v926, 64
  %v1200 = vpop.permute.xlu0 %1199
  %1201 = vrot.lane.b32.xlu0 %v863, 64
  %v1202 = vpop.permute.xlu0 %1201
  %1203 = vrot.lane.b32.xlu0 %v800, 64
  %v1204 = vpop.permute.xlu0 %1203
  %1205 = vrot.lane.b32.xlu0 %v737, 64
  %v1206 = vpop.permute.xlu0 %1205
  %v1215 = vsel %vm172, %v236, %v1192
  %v1216 = vsel %vm172, %v299, %v1194
  %v1217 = vsel %vm172, %v362, %v1196
  %v1218 = vsel %vm172, %v425, %v1198
  %v1219 = vsel %vm172, %v488, %v1200
  %v1220 = vsel %vm172, %v551, %v1202
  %v1221 = vsel %vm172, %v614, %v1204
  %v1222 = vsel %vm172, %v1181, %v1206
  %v1223 = vld [vmem:[%s4] sm:$0xff]
  %v1224 = vld [vmem:[%s4 + $0x8] sm:$0xff]
  %v1225 = vld [vmem:[%s4 + $0x10] sm:$0xff]
  %v1226 = vld [vmem:[%s4 + $0x18] sm:$0xff]
  %v1227 = vld [vmem:[%s4 + $0x20] sm:$0xff]
  %v1228 = vld [vmem:[%s4 + $0x28] sm:$0xff]
  %v1229 = vld [vmem:[%s4 + $0x30] sm:$0xff]
  %v1230 = vld [vmem:[%s4 + $0x38] sm:$0xff]
  %v1231 = vld [vmem:[%s4 + $0x40] sm:$0xff]
  %v1232 = vld [vmem:[%s4 + $0x48] sm:$0xff]
  %v1233 = vld [vmem:[%s4 + $0x50] sm:$0xff]
  %v1234 = vld [vmem:[%s4 + $0x58] sm:$0xff]
  %v1235 = vld [vmem:[%s4 + $0x60] sm:$0xff]
  %v1236 = vld [vmem:[%s4 + $0x68] sm:$0xff]
  %v1237 = vld [vmem:[%s4 + $0x70] sm:$0xff]
  %v1238 = vld [vmem:[%s4 + $0x78] sm:$0xff]
  %v1239 = vld [vmem:[%s6] sm:$0x3]
  %v1241 = vperm.slane %v1239, 0
  %v1242 = vperm.slane %v1239, 1
  %vm1245 = vcmask 523264
  %v1247 = vsel %vm1245, %v1215, 0
  %v1250 = vsel %vm1245, %v1216, 0
  %v1253 = vsel %vm1245, %v1217, 0
  %v1256 = vsel %vm1245, %v1218, 0
  %v1259 = vsel %vm1245, %v1219, 0
  %v1262 = vsel %vm1245, %v1220, 0
  %v1265 = vsel %vm1245, %v1221, 0
  %v1268 = vsel %vm1245, %v1222, 0
  %1270 = vmatpush.msra.mxu0 0.0
  %1271 = vmatpush.msra.mxu0 0.0
  %1272 = vmatpush.msra.mxu0 0.0
  %1273 = vmatpush.msra.mxu0 0.0
  %1274 = vmatpush.msra.mxu0 0.0
  %1275 = vmatpush.msra.mxu0 0.0
  %1276 = vmatpush.msra.mxu0 0.0
  %1277 = vmatpush.msra.mxu0 0.0
  %1278 = vmatpush.msra.mxu0 %v1237
  %1279 = vmatpush.msra.mxu0 %v1235
  %1280 = vmatpush.msra.mxu0 %v1233
  %1281 = vmatpush.msra.mxu0 %v1231
  %1282 = vmatpush.msra.mxu0 %v1229
  %1283 = vmatpush.msra.mxu0 %v1227
  %1284 = vmatpush.msra.mxu0 %v1225
  %1285 = vmatpush.msra.mxu0 %v1223
  %1286 = vmatmul.f32.gmra.mxu0 %v1247
  %v1287 = vpop.f32.mrf.mxu0
  %v1288 = vadd.f32 %v1241, %v1287
  %1289 = vmatmul.f32.gmra.mxu0 %v1250
  %v1290 = vpop.f32.mrf.mxu0
  %v1291 = vadd.f32 %v1241, %v1290
  %1292 = vmatmul.f32.gmra.mxu0 %v1253
  %v1293 = vpop.f32.mrf.mxu0
  %v1294 = vadd.f32 %v1241, %v1293
  %1295 = vmatmul.f32.gmra.mxu0 %v1256
  %v1296 = vpop.f32.mrf.mxu0
  %v1297 = vadd.f32 %v1241, %v1296
  %1298 = vmatmul.f32.gmra.mxu0 %v1259
  %v1299 = vpop.f32.mrf.mxu0
  %v1300 = vadd.f32 %v1241, %v1299
  %1301 = vmatmul.f32.gmra.mxu0 %v1262
  %v1302 = vpop.f32.mrf.mxu0
  %v1303 = vadd.f32 %v1241, %v1302
  %1304 = vmatmul.f32.gmra.mxu0 %v1265
  %v1305 = vpop.f32.mrf.mxu0
  %v1306 = vadd.f32 %v1241, %v1305
  %1307 = vmatmul.f32.gmra.mxu0 %v1268
  %v1308 = vpop.f32.mrf.mxu0
  %v1309 = vadd.f32 %v1241, %v1308
  %1310 = vdwg.mxu0
  %1311 = vmatpush.msra.mxu0 0.0
  %1312 = vmatpush.msra.mxu0 0.0
  %1313 = vmatpush.msra.mxu0 0.0
  %1314 = vmatpush.msra.mxu0 0.0
  %1315 = vmatpush.msra.mxu0 0.0
  %1316 = vmatpush.msra.mxu0 0.0
  %1317 = vmatpush.msra.mxu0 0.0
  %1318 = vmatpush.msra.mxu0 0.0
  %1319 = vmatpush.msra.mxu0 %v1238
  %1320 = vmatpush.msra.mxu0 %v1236
  %1321 = vmatpush.msra.mxu0 %v1234
  %1322 = vmatpush.msra.mxu0 %v1232
  %1323 = vmatpush.msra.mxu0 %v1230
  %1324 = vmatpush.msra.mxu0 %v1228
  %1325 = vmatpush.msra.mxu0 %v1226
  %1326 = vmatpush.msra.mxu0 %v1224
  %1327 = vmatmul.f32.gmra.mxu0 %v1247
  %v1328 = vpop.f32.mrf.mxu0
  %v1329 = vadd.f32 %v1242, %v1328
  %1330 = vmatmul.f32.gmra.mxu0 %v1250
  %v1331 = vpop.f32.mrf.mxu0
  %v1332 = vadd.f32 %v1242, %v1331
  %1333 = vmatmul.f32.gmra.mxu0 %v1253
  %v1334 = vpop.f32.mrf.mxu0
  %v1335 = vadd.f32 %v1242, %v1334
  %1336 = vmatmul.f32.gmra.mxu0 %v1256
  %v1337 = vpop.f32.mrf.mxu0
  %v1338 = vadd.f32 %v1242, %v1337
  %1339 = vmatmul.f32.gmra.mxu0 %v1259
  %v1340 = vpop.f32.mrf.mxu0
  %v1341 = vadd.f32 %v1242, %v1340
  %1342 = vmatmul.f32.gmra.mxu0 %v1262
  %v1343 = vpop.f32.mrf.mxu0
  %v1344 = vadd.f32 %v1242, %v1343
  %1345 = vmatmul.f32.gmra.mxu0 %v1265
  %v1346 = vpop.f32.mrf.mxu0
  %v1347 = vadd.f32 %v1242, %v1346
  %1348 = vmatmul.f32.gmra.mxu0 %v1268
  %v1349 = vpop.f32.mrf.mxu0
  %v1350 = vadd.f32 %v1242, %v1349
  %1351 = vdwg.mxu0
  %v1352 = vld [vmem:[%s5] sm:$0xff]
  %v1353 = vld [vmem:[%s5 + $0x8] sm:$0xff]
  %v1354 = vld [vmem:[%s5 + $0x10] sm:$0xff]
  %v1355 = vld [vmem:[%s5 + $0x18] sm:$0xff]
  %1356 = vmatpush.msra.mxu0 0.0
  %1357 = vmatpush.msra.mxu0 0.0
  %1358 = vmatpush.msra.mxu0 0.0
  %1359 = vmatpush.msra.mxu0 0.0
  %1360 = vmatpush.msra.mxu0 0.0
  %1361 = vmatpush.msra.mxu0 0.0
  %1362 = vmatpush.msra.mxu0 0.0
  %1363 = vmatpush.msra.mxu0 0.0
  %1364 = vmatpush.msra.mxu0 0.0
  %1365 = vmatpush.msra.mxu0 0.0
  %1366 = vmatpush.msra.mxu0 0.0
  %1367 = vmatpush.msra.mxu0 0.0
  %1368 = vmatpush.msra.mxu0 %v1355
  %1369 = vmatpush.msra.mxu0 %v1354
  %1370 = vmatpush.msra.mxu0 %v1353
  %1371 = vmatpush.msra.mxu0 %v1352
  %1372 = vmatmul.f32.gmra.mxu0 %v174
  %v1373 = vpop.f32.mrf.mxu0
  %v1374 = vadd.f32 0.0, %v1373
  %1375 = vdwg.mxu0
  %v1376 = vadd.f32 %v1288, %v1374
  %v1377 = vxor.u32 %v1376, 2147483648
  %v1378 = vmul.f32 %v1377, 1.442695
  %v1379 = vpow.pop %v1378
  %v1380 = vadd.f32 %v1379, 1.0
  %v1381 = vrcp.pop %v1380
  %v1382 = vmul.f32 %v1380, %v1381
  %v1383 = vsub.f32 1.0, %v1382
  %v1384 = vmul.f32 %v1381, %v1383
  %v1385 = vadd.f32 %v1381, %v1384
  %vm1386 = vweird.f32 %v1380
  %vm1387 = vweird.f32 %v1381
  %vm1388 = vmor %vm1386, %vm1387
  %v1389 = vsel %vm1388, %v1381, %v1385
  %v1390 = vand.u32 2147483647, %v1380
  %vm1391 = vcmp.eq.f32.partialorder %v1390, 8.507059e+37
  %v1392 = vand.u32 %v1380, 2147483648
  %v1393 = vor.u32 1.1754944e-38, %v1392
  %v1394 = vsel %vm1391, %v1393, %v1389
  %v1395 = vmul.f32 1.0, %v1394
  %v1396 = vtanh.pop %v1376
  %v1397 = vmul.f32 %v1395, 0.0
  %1399 = vrot.lane.b32.xlu0 %v1396, 64
  %v1400 = vpop.permute.xlu0 %1399
  %v1402 = vmul.f32 %v1395, %v1400
  %1404 = vrot.lane.b32.xlu0 %v1402, 32
  %v1405 = vpop.permute.xlu0 %1404
  %v1407 = vadd.f32 %v1397, %v1405
  %v1408 = vtanh.pop %v1407
  %1410 = vrot.lane.b32.xlu0 %v1408, 64
  %v1411 = vpop.permute.xlu0 %1410
  %v1413 = vmul.f32 %v1395, %v1411
  %1415 = vrot.lane.b32.xlu0 %v1413, 32
  %v1416 = vpop.permute.xlu0 %1415
  %v1417 = vsel %vm172, %v1416, 0
  %1419 = vmatpush.msra.mxu0 0.0
  %1420 = vmatpush.msra.mxu0 0.0
  %1421 = vmatpush.msra.mxu0 0.0
  %1422 = vmatpush.msra.mxu0 0.0
  %1423 = vmatpush.msra.mxu0 0.0
  %1424 = vmatpush.msra.mxu0 0.0
  %1425 = vmatpush.msra.mxu0 0.0
  %1426 = vmatpush.msra.mxu0 0.0
  %1427 = vmatpush.msra.mxu0 0.0
  %1428 = vmatpush.msra.mxu0 0.0
  %1429 = vmatpush.msra.mxu0 0.0
  %1430 = vmatpush.msra.mxu0 0.0
  %1431 = vmatpush.msra.mxu0 %v1355
  %1432 = vmatpush.msra.mxu0 %v1354
  %1433 = vmatpush.msra.mxu0 %v1353
  %1434 = vmatpush.msra.mxu0 %v1352
  %1435 = vmatmul.f32.gmra.mxu0 %v1417
  %v1436 = vpop.f32.mrf.mxu0
  %v1437 = vadd.f32 0.0, %v1436
  %1438 = vdwg.mxu0
  %v1439 = vadd.f32 %v1291, %v1437
  %v1440 = vxor.u32 %v1439, 2147483648
  %v1441 = vmul.f32 %v1440, 1.442695
  %v1442 = vpow.pop %v1441
  %v1443 = vadd.f32 %v1442, 1.0
  %v1444 = vrcp.pop %v1443
  %v1445 = vmul.f32 %v1443, %v1444
  %v1446 = vsub.f32 1.0, %v1445
  %v1447 = vmul.f32 %v1444, %v1446
  %v1448 = vadd.f32 %v1444, %v1447
  %vm1449 = vweird.f32 %v1443
  %vm1450 = vweird.f32 %v1444
  %vm1451 = vmor %vm1449, %vm1450
  %v1452 = vsel %vm1451, %v1444, %v1448
  %v1453 = vand.u32 2147483647, %v1443
  %vm1454 = vcmp.eq.f32.partialorder %v1453, 8.507059e+37
  %v1455 = vand.u32 %v1443, 2147483648
  %v1456 = vor.u32 1.1754944e-38, %v1455
  %v1457 = vsel %vm1454, %v1456, %v1452
  %v1458 = vmul.f32 1.0, %v1457
  %v1459 = vtanh.pop %v1439
  %v1460 = vmul.f32 %v1458, %v1407
  %1462 = vrot.lane.b32.xlu0 %v1459, 64
  %v1463 = vpop.permute.xlu0 %1462
  %v1465 = vmul.f32 %v1458, %v1463
  %1467 = vrot.lane.b32.xlu0 %v1465, 32
  %v1468 = vpop.permute.xlu0 %1467
  %v1470 = vadd.f32 %v1460, %v1468
  %v1471 = vtanh.pop %v1470
  %1473 = vrot.lane.b32.xlu0 %v1471, 64
  %v1474 = vpop.permute.xlu0 %1473
  %v1476 = vmul.f32 %v1458, %v1474
  %1478 = vrot.lane.b32.xlu0 %v1476, 32
  %v1479 = vpop.permute.xlu0 %1478
  %v1480 = vsel %vm172, %v1479, 0
  %1482 = vmatpush.msra.mxu0 0.0
  %1483 = vmatpush.msra.mxu0 0.0
  %1484 = vmatpush.msra.mxu0 0.0
  %1485 = vmatpush.msra.mxu0 0.0
  %1486 = vmatpush.msra.mxu0 0.0
  %1487 = vmatpush.msra.mxu0 0.0
  %1488 = vmatpush.msra.mxu0 0.0
  %1489 = vmatpush.msra.mxu0 0.0
  %1490 = vmatpush.msra.mxu0 0.0
  %1491 = vmatpush.msra.mxu0 0.0
  %1492 = vmatpush.msra.mxu0 0.0
  %1493 = vmatpush.msra.mxu0 0.0
  %1494 = vmatpush.msra.mxu0 %v1355
  %1495 = vmatpush.msra.mxu0 %v1354
  %1496 = vmatpush.msra.mxu0 %v1353
  %1497 = vmatpush.msra.mxu0 %v1352
  %1498 = vmatmul.f32.gmra.mxu0 %v1480
  %v1499 = vpop.f32.mrf.mxu0
  %v1500 = vadd.f32 0.0, %v1499
  %1501 = vdwg.mxu0
  %v1502 = vadd.f32 %v1294, %v1500
  %v1503 = vxor.u32 %v1502, 2147483648
  %v1504 = vmul.f32 %v1503, 1.442695
  %v1505 = vpow.pop %v1504
  %v1506 = vadd.f32 %v1505, 1.0
  %v1507 = vrcp.pop %v1506
  %v1508 = vmul.f32 %v1506, %v1507
  %v1509 = vsub.f32 1.0, %v1508
  %v1510 = vmul.f32 %v1507, %v1509
  %v1511 = vadd.f32 %v1507, %v1510
  %vm1512 = vweird.f32 %v1506
  %vm1513 = vweird.f32 %v1507
  %vm1514 = vmor %vm1512, %vm1513
  %v1515 = vsel %vm1514, %v1507, %v1511
  %v1516 = vand.u32 2147483647, %v1506
  %vm1517 = vcmp.eq.f32.partialorder %v1516, 8.507059e+37
  %v1518 = vand.u32 %v1506, 2147483648
  %v1519 = vor.u32 1.1754944e-38, %v1518
  %v1520 = vsel %vm1517, %v1519, %v1515
  %v1521 = vmul.f32 1.0, %v1520
  %v1522 = vtanh.pop %v1502
  %v1523 = vmul.f32 %v1521, %v1470
  %1525 = vrot.lane.b32.xlu0 %v1522, 64
  %v1526 = vpop.permute.xlu0 %1525
  %v1528 = vmul.f32 %v1521, %v1526
  %1530 = vrot.lane.b32.xlu0 %v1528, 32
  %v1531 = vpop.permute.xlu0 %1530
  %v1533 = vadd.f32 %v1523, %v1531
  %v1534 = vtanh.pop %v1533
  %1536 = vrot.lane.b32.xlu0 %v1534, 64
  %v1537 = vpop.permute.xlu0 %1536
  %v1539 = vmul.f32 %v1521, %v1537
  %1541 = vrot.lane.b32.xlu0 %v1539, 32
  %v1542 = vpop.permute.xlu0 %1541
  %v1543 = vsel %vm172, %v1542, 0
  %1545 = vmatpush.msra.mxu0 0.0
  %1546 = vmatpush.msra.mxu0 0.0
  %1547 = vmatpush.msra.mxu0 0.0
  %1548 = vmatpush.msra.mxu0 0.0
  %1549 = vmatpush.msra.mxu0 0.0
  %1550 = vmatpush.msra.mxu0 0.0
  %1551 = vmatpush.msra.mxu0 0.0
  %1552 = vmatpush.msra.mxu0 0.0
  %1553 = vmatpush.msra.mxu0 0.0
  %1554 = vmatpush.msra.mxu0 0.0
  %1555 = vmatpush.msra.mxu0 0.0
  %1556 = vmatpush.msra.mxu0 0.0
  %1557 = vmatpush.msra.mxu0 %v1355
  %1558 = vmatpush.msra.mxu0 %v1354
  %1559 = vmatpush.msra.mxu0 %v1353
  %1560 = vmatpush.msra.mxu0 %v1352
  %1561 = vmatmul.f32.gmra.mxu0 %v1543
  %v1562 = vpop.f32.mrf.mxu0
  %v1563 = vadd.f32 0.0, %v1562
  %1564 = vdwg.mxu0
  %v1565 = vadd.f32 %v1297, %v1563
  %v1566 = vxor.u32 %v1565, 2147483648
  %v1567 = vmul.f32 %v1566, 1.442695
  %v1568 = vpow.pop %v1567
  %v1569 = vadd.f32 %v1568, 1.0
  %v1570 = vrcp.pop %v1569
  %v1571 = vmul.f32 %v1569, %v1570
  %v1572 = vsub.f32 1.0, %v1571
  %v1573 = vmul.f32 %v1570, %v1572
  %v1574 = vadd.f32 %v1570, %v1573
  %vm1575 = vweird.f32 %v1569
  %vm1576 = vweird.f32 %v1570
  %vm1577 = vmor %vm1575, %vm1576
  %v1578 = vsel %vm1577, %v1570, %v1574
  %v1579 = vand.u32 2147483647, %v1569
  %vm1580 = vcmp.eq.f32.partialorder %v1579, 8.507059e+37
  %v1581 = vand.u32 %v1569, 2147483648
  %v1582 = vor.u32 1.1754944e-38, %v1581
  %v1583 = vsel %vm1580, %v1582, %v1578
  %v1584 = vmul.f32 1.0, %v1583
  %v1585 = vtanh.pop %v1565
  %v1586 = vmul.f32 %v1584, %v1533
  %1588 = vrot.lane.b32.xlu0 %v1585, 64
  %v1589 = vpop.permute.xlu0 %1588
  %v1591 = vmul.f32 %v1584, %v1589
  %1593 = vrot.lane.b32.xlu0 %v1591, 32
  %v1594 = vpop.permute.xlu0 %1593
  %v1596 = vadd.f32 %v1586, %v1594
  %v1597 = vtanh.pop %v1596
  %1599 = vrot.lane.b32.xlu0 %v1597, 64
  %v1600 = vpop.permute.xlu0 %1599
  %v1602 = vmul.f32 %v1584, %v1600
  %1604 = vrot.lane.b32.xlu0 %v1602, 32
  %v1605 = vpop.permute.xlu0 %1604
  %v1606 = vsel %vm172, %v1605, 0
  %1608 = vmatpush.msra.mxu0 0.0
  %1609 = vmatpush.msra.mxu0 0.0
  %1610 = vmatpush.msra.mxu0 0.0
  %1611 = vmatpush.msra.mxu0 0.0
  %1612 = vmatpush.msra.mxu0 0.0
  %1613 = vmatpush.msra.mxu0 0.0
  %1614 = vmatpush.msra.mxu0 0.0
  %1615 = vmatpush.msra.mxu0 0.0
  %1616 = vmatpush.msra.mxu0 0.0
  %1617 = vmatpush.msra.mxu0 0.0
  %1618 = vmatpush.msra.mxu0 0.0
  %1619 = vmatpush.msra.mxu0 0.0
  %1620 = vmatpush.msra.mxu0 %v1355
  %1621 = vmatpush.msra.mxu0 %v1354
  %1622 = vmatpush.msra.mxu0 %v1353
  %1623 = vmatpush.msra.mxu0 %v1352
  %1624 = vmatmul.f32.gmra.mxu0 %v1606
  %v1625 = vpop.f32.mrf.mxu0
  %v1626 = vadd.f32 0.0, %v1625
  %1627 = vdwg.mxu0
  %v1628 = vadd.f32 %v1300, %v1626
  %v1629 = vxor.u32 %v1628, 2147483648
  %v1630 = vmul.f32 %v1629, 1.442695
  %v1631 = vpow.pop %v1630
  %v1632 = vadd.f32 %v1631, 1.0
  %v1633 = vrcp.pop %v1632
  %v1634 = vmul.f32 %v1632, %v1633
  %v1635 = vsub.f32 1.0, %v1634
  %v1636 = vmul.f32 %v1633, %v1635
  %v1637 = vadd.f32 %v1633, %v1636
  %vm1638 = vweird.f32 %v1632
  %vm1639 = vweird.f32 %v1633
  %vm1640 = vmor %vm1638, %vm1639
  %v1641 = vsel %vm1640, %v1633, %v1637
  %v1642 = vand.u32 2147483647, %v1632
  %vm1643 = vcmp.eq.f32.partialorder %v1642, 8.507059e+37
  %v1644 = vand.u32 %v1632, 2147483648
  %v1645 = vor.u32 1.1754944e-38, %v1644
  %v1646 = vsel %vm1643, %v1645, %v1641
  %v1647 = vmul.f32 1.0, %v1646
  %v1648 = vtanh.pop %v1628
  %v1649 = vmul.f32 %v1647, %v1596
  %1651 = vrot.lane.b32.xlu0 %v1648, 64
  %v1652 = vpop.permute.xlu0 %1651
  %v1654 = vmul.f32 %v1647, %v1652
  %1656 = vrot.lane.b32.xlu0 %v1654, 32
  %v1657 = vpop.permute.xlu0 %1656
  %v1659 = vadd.f32 %v1649, %v1657
  %v1660 = vtanh.pop %v1659
  %1662 = vrot.lane.b32.xlu0 %v1660, 64
  %v1663 = vpop.permute.xlu0 %1662
  %v1665 = vmul.f32 %v1647, %v1663
  %1667 = vrot.lane.b32.xlu0 %v1665, 32
  %v1668 = vpop.permute.xlu0 %1667
  %v1669 = vsel %vm172, %v1668, 0
  %1671 = vmatpush.msra.mxu0 0.0
  %1672 = vmatpush.msra.mxu0 0.0
  %1673 = vmatpush.msra.mxu0 0.0
  %1674 = vmatpush.msra.mxu0 0.0
  %1675 = vmatpush.msra.mxu0 0.0
  %1676 = vmatpush.msra.mxu0 0.0
  %1677 = vmatpush.msra.mxu0 0.0
  %1678 = vmatpush.msra.mxu0 0.0
  %1679 = vmatpush.msra.mxu0 0.0
  %1680 = vmatpush.msra.mxu0 0.0
  %1681 = vmatpush.msra.mxu0 0.0
  %1682 = vmatpush.msra.mxu0 0.0
  %1683 = vmatpush.msra.mxu0 %v1355
  %1684 = vmatpush.msra.mxu0 %v1354
  %1685 = vmatpush.msra.mxu0 %v1353
  %1686 = vmatpush.msra.mxu0 %v1352
  %1687 = vmatmul.f32.gmra.mxu0 %v1669
  %v1688 = vpop.f32.mrf.mxu0
  %v1689 = vadd.f32 0.0, %v1688
  %1690 = vdwg.mxu0
  %v1691 = vadd.f32 %v1303, %v1689
  %v1692 = vxor.u32 %v1691, 2147483648
  %v1693 = vmul.f32 %v1692, 1.442695
  %v1694 = vpow.pop %v1693
  %v1695 = vadd.f32 %v1694, 1.0
  %v1696 = vrcp.pop %v1695
  %v1697 = vmul.f32 %v1695, %v1696
  %v1698 = vsub.f32 1.0, %v1697
  %v1699 = vmul.f32 %v1696, %v1698
  %v1700 = vadd.f32 %v1696, %v1699
  %vm1701 = vweird.f32 %v1695
  %vm1702 = vweird.f32 %v1696
  %vm1703 = vmor %vm1701, %vm1702
  %v1704 = vsel %vm1703, %v1696, %v1700
  %v1705 = vand.u32 2147483647, %v1695
  %vm1706 = vcmp.eq.f32.partialorder %v1705, 8.507059e+37
  %v1707 = vand.u32 %v1695, 2147483648
  %v1708 = vor.u32 1.1754944e-38, %v1707
  %v1709 = vsel %vm1706, %v1708, %v1704
  %v1710 = vmul.f32 1.0, %v1709
  %v1711 = vtanh.pop %v1691
  %v1712 = vmul.f32 %v1710, %v1659
  %1714 = vrot.lane.b32.xlu0 %v1711, 64
  %v1715 = vpop.permute.xlu0 %1714
  %v1717 = vmul.f32 %v1710, %v1715
  %1719 = vrot.lane.b32.xlu0 %v1717, 32
  %v1720 = vpop.permute.xlu0 %1719
  %v1722 = vadd.f32 %v1712, %v1720
  %v1723 = vtanh.pop %v1722
  %1725 = vrot.lane.b32.xlu0 %v1723, 64
  %v1726 = vpop.permute.xlu0 %1725
  %v1728 = vmul.f32 %v1710, %v1726
  %1730 = vrot.lane.b32.xlu0 %v1728, 32
  %v1731 = vpop.permute.xlu0 %1730
  %v1732 = vsel %vm172, %v1731, 0
  %1734 = vmatpush.msra.mxu0 0.0
  %1735 = vmatpush.msra.mxu0 0.0
  %1736 = vmatpush.msra.mxu0 0.0
  %1737 = vmatpush.msra.mxu0 0.0
  %1738 = vmatpush.msra.mxu0 0.0
  %1739 = vmatpush.msra.mxu0 0.0
  %1740 = vmatpush.msra.mxu0 0.0
  %1741 = vmatpush.msra.mxu0 0.0
  %1742 = vmatpush.msra.mxu0 0.0
  %1743 = vmatpush.msra.mxu0 0.0
  %1744 = vmatpush.msra.mxu0 0.0
  %1745 = vmatpush.msra.mxu0 0.0
  %1746 = vmatpush.msra.mxu0 %v1355
  %1747 = vmatpush.msra.mxu0 %v1354
  %1748 = vmatpush.msra.mxu0 %v1353
  %1749 = vmatpush.msra.mxu0 %v1352
  %1750 = vmatmul.f32.gmra.mxu0 %v1732
  %v1751 = vpop.f32.mrf.mxu0
  %v1752 = vadd.f32 0.0, %v1751
  %1753 = vdwg.mxu0
  %v1754 = vadd.f32 %v1306, %v1752
  %v1755 = vxor.u32 %v1754, 2147483648
  %v1756 = vmul.f32 %v1755, 1.442695
  %v1757 = vpow.pop %v1756
  %v1758 = vadd.f32 %v1757, 1.0
  %v1759 = vrcp.pop %v1758
  %v1760 = vmul.f32 %v1758, %v1759
  %v1761 = vsub.f32 1.0, %v1760
  %v1762 = vmul.f32 %v1759, %v1761
  %v1763 = vadd.f32 %v1759, %v1762
  %vm1764 = vweird.f32 %v1758
  %vm1765 = vweird.f32 %v1759
  %vm1766 = vmor %vm1764, %vm1765
  %v1767 = vsel %vm1766, %v1759, %v1763
  %v1768 = vand.u32 2147483647, %v1758
  %vm1769 = vcmp.eq.f32.partialorder %v1768, 8.507059e+37
  %v1770 = vand.u32 %v1758, 2147483648
  %v1771 = vor.u32 1.1754944e-38, %v1770
  %v1772 = vsel %vm1769, %v1771, %v1767
  %v1773 = vmul.f32 1.0, %v1772
  %v1774 = vtanh.pop %v1754
  %v1775 = vmul.f32 %v1773, %v1722
  %1777 = vrot.lane.b32.xlu0 %v1774, 64
  %v1778 = vpop.permute.xlu0 %1777
  %v1780 = vmul.f32 %v1773, %v1778
  %1782 = vrot.lane.b32.xlu0 %v1780, 32
  %v1783 = vpop.permute.xlu0 %1782
  %v1785 = vadd.f32 %v1775, %v1783
  %v1786 = vtanh.pop %v1785
  %1788 = vrot.lane.b32.xlu0 %v1786, 64
  %v1789 = vpop.permute.xlu0 %1788
  %v1791 = vmul.f32 %v1773, %v1789
  %1793 = vrot.lane.b32.xlu0 %v1791, 32
  %v1794 = vpop.permute.xlu0 %1793
  %v1795 = vsel %vm172, %v1794, 0
  %1797 = vmatpush.msra.mxu0 0.0
  %1798 = vmatpush.msra.mxu0 0.0
  %1799 = vmatpush.msra.mxu0 0.0
  %1800 = vmatpush.msra.mxu0 0.0
  %1801 = vmatpush.msra.mxu0 0.0
  %1802 = vmatpush.msra.mxu0 0.0
  %1803 = vmatpush.msra.mxu0 0.0
  %1804 = vmatpush.msra.mxu0 0.0
  %1805 = vmatpush.msra.mxu0 0.0
  %1806 = vmatpush.msra.mxu0 0.0
  %1807 = vmatpush.msra.mxu0 0.0
  %1808 = vmatpush.msra.mxu0 0.0
  %1809 = vmatpush.msra.mxu0 %v1355
  %1810 = vmatpush.msra.mxu0 %v1354
  %1811 = vmatpush.msra.mxu0 %v1353
  %1812 = vmatpush.msra.mxu0 %v1352
  %1813 = vmatmul.f32.gmra.mxu0 %v1795
  %v1814 = vpop.f32.mrf.mxu0
  %v1815 = vadd.f32 0.0, %v1814
  %1816 = vdwg.mxu0
  %v1817 = vadd.f32 %v1309, %v1815
  %v1818 = vxor.u32 %v1817, 2147483648
  %v1819 = vmul.f32 %v1818, 1.442695
  %v1820 = vpow.pop %v1819
  %v1821 = vadd.f32 %v1820, 1.0
  %v1822 = vrcp.pop %v1821
  %v1823 = vmul.f32 %v1821, %v1822
  %v1824 = vsub.f32 1.0, %v1823
  %v1825 = vmul.f32 %v1822, %v1824
  %v1826 = vadd.f32 %v1822, %v1825
  %vm1827 = vweird.f32 %v1821
  %vm1828 = vweird.f32 %v1822
  %vm1829 = vmor %vm1827, %vm1828
  %v1830 = vsel %vm1829, %v1822, %v1826
  %v1831 = vand.u32 2147483647, %v1821
  %vm1832 = vcmp.eq.f32.partialorder %v1831, 8.507059e+37
  %v1833 = vand.u32 %v1821, 2147483648
  %v1834 = vor.u32 1.1754944e-38, %v1833
  %v1835 = vsel %vm1832, %v1834, %v1830
  %v1836 = vmul.f32 1.0, %v1835
  %v1837 = vtanh.pop %v1817
  %v1838 = vmul.f32 %v1836, %v1785
  %1840 = vrot.lane.b32.xlu0 %v1837, 64
  %v1841 = vpop.permute.xlu0 %1840
  %v1843 = vmul.f32 %v1836, %v1841
  %1845 = vrot.lane.b32.xlu0 %v1843, 32
  %v1846 = vpop.permute.xlu0 %1845
  %v1848 = vadd.f32 %v1838, %v1846
  %v1849 = vtanh.pop %v1848
  %1851 = vrot.lane.b32.xlu0 %v1849, 64
  %v1852 = vpop.permute.xlu0 %1851
  %v1854 = vmul.f32 %v1836, %v1852
  %s1855 = scalar_lea.vmem %s5, 32
  %v1856 = vld [vmem:[%s1855] sm:$0xff]
  %v1857 = vld [vmem:[%s1855 + $0x8] sm:$0xff]
  %v1858 = vld [vmem:[%s1855 + $0x10] sm:$0xff]
  %v1859 = vld [vmem:[%s1855 + $0x18] sm:$0xff]
  %1860 = vmatpush.msra.mxu0 0.0
  %1861 = vmatpush.msra.mxu0 0.0
  %1862 = vmatpush.msra.mxu0 0.0
  %1863 = vmatpush.msra.mxu0 0.0
  %1864 = vmatpush.msra.mxu0 0.0
  %1865 = vmatpush.msra.mxu0 0.0
  %1866 = vmatpush.msra.mxu0 0.0
  %1867 = vmatpush.msra.mxu0 0.0
  %1868 = vmatpush.msra.mxu0 0.0
  %1869 = vmatpush.msra.mxu0 0.0
  %1870 = vmatpush.msra.mxu0 0.0
  %1871 = vmatpush.msra.mxu0 0.0
  %1872 = vmatpush.msra.mxu0 %v1859
  %1873 = vmatpush.msra.mxu0 %v1858
  %1874 = vmatpush.msra.mxu0 %v1857
  %1875 = vmatpush.msra.mxu0 %v1856
  %1876 = vmatmul.f32.gmra.mxu0 %v174
  %v1877 = vpop.f32.mrf.mxu0
  %v1878 = vadd.f32 0.0, %v1877
  %1879 = vdwg.mxu0
  %v1880 = vadd.f32 %v1350, %v1878
  %v1881 = vxor.u32 %v1880, 2147483648
  %v1882 = vmul.f32 %v1881, 1.442695
  %v1883 = vpow.pop %v1882
  %v1884 = vadd.f32 %v1883, 1.0
  %v1885 = vrcp.pop %v1884
  %v1886 = vmul.f32 %v1884, %v1885
  %v1887 = vsub.f32 1.0, %v1886
  %v1888 = vmul.f32 %v1885, %v1887
  %v1889 = vadd.f32 %v1885, %v1888
  %vm1890 = vweird.f32 %v1884
  %vm1891 = vweird.f32 %v1885
  %vm1892 = vmor %vm1890, %vm1891
  %v1893 = vsel %vm1892, %v1885, %v1889
  %v1894 = vand.u32 2147483647, %v1884
  %vm1895 = vcmp.eq.f32.partialorder %v1894, 8.507059e+37
  %v1896 = vand.u32 %v1884, 2147483648
  %v1897 = vor.u32 1.1754944e-38, %v1896
  %v1898 = vsel %vm1895, %v1897, %v1893
  %v1899 = vmul.f32 1.0, %v1898
  %v1900 = vtanh.pop %v1880
  %v1901 = vmul.f32 %v1899, 0.0
  %1903 = vrot.lane.b32.xlu0 %v1900, 64
  %v1904 = vpop.permute.xlu0 %1903
  %v1906 = vmul.f32 %v1899, %v1904
  %1908 = vrot.lane.b32.xlu0 %v1906, 32
  %v1909 = vpop.permute.xlu0 %1908
  %v1911 = vadd.f32 %v1901, %v1909
  %v1912 = vtanh.pop %v1911
  %1914 = vrot.lane.b32.xlu0 %v1912, 64
  %v1915 = vpop.permute.xlu0 %1914
  %v1917 = vmul.f32 %v1899, %v1915
  %1919 = vrot.lane.b32.xlu0 %v1917, 32
  %v1920 = vpop.permute.xlu0 %1919
  %v1921 = vsel %vm172, %v1920, 0
  %1923 = vmatpush.msra.mxu0 0.0
  %1924 = vmatpush.msra.mxu0 0.0
  %1925 = vmatpush.msra.mxu0 0.0
  %1926 = vmatpush.msra.mxu0 0.0
  %1927 = vmatpush.msra.mxu0 0.0
  %1928 = vmatpush.msra.mxu0 0.0
  %1929 = vmatpush.msra.mxu0 0.0
  %1930 = vmatpush.msra.mxu0 0.0
  %1931 = vmatpush.msra.mxu0 0.0
  %1932 = vmatpush.msra.mxu0 0.0
  %1933 = vmatpush.msra.mxu0 0.0
  %1934 = vmatpush.msra.mxu0 0.0
  %1935 = vmatpush.msra.mxu0 %v1859
  %1936 = vmatpush.msra.mxu0 %v1858
  %1937 = vmatpush.msra.mxu0 %v1857
  %1938 = vmatpush.msra.mxu0 %v1856
  %1939 = vmatmul.f32.gmra.mxu0 %v1921
  %v1940 = vpop.f32.mrf.mxu0
  %v1941 = vadd.f32 0.0, %v1940
  %1942 = vdwg.mxu0
  %v1943 = vadd.f32 %v1347, %v1941
  %v1944 = vxor.u32 %v1943, 2147483648
  %v1945 = vmul.f32 %v1944, 1.442695
  %v1946 = vpow.pop %v1945
  %v1947 = vadd.f32 %v1946, 1.0
  %v1948 = vrcp.pop %v1947
  %v1949 = vmul.f32 %v1947, %v1948
  %v1950 = vsub.f32 1.0, %v1949
  %v1951 = vmul.f32 %v1948, %v1950
  %v1952 = vadd.f32 %v1948, %v1951
  %vm1953 = vweird.f32 %v1947
  %vm1954 = vweird.f32 %v1948
  %vm1955 = vmor %vm1953, %vm1954
  %v1956 = vsel %vm1955, %v1948, %v1952
  %v1957 = vand.u32 2147483647, %v1947
  %vm1958 = vcmp.eq.f32.partialorder %v1957, 8.507059e+37
  %v1959 = vand.u32 %v1947, 2147483648
  %v1960 = vor.u32 1.1754944e-38, %v1959
  %v1961 = vsel %vm1958, %v1960, %v1956
  %v1962 = vmul.f32 1.0, %v1961
  %v1963 = vtanh.pop %v1943
  %v1964 = vmul.f32 %v1962, %v1911
  %1966 = vrot.lane.b32.xlu0 %v1963, 64
  %v1967 = vpop.permute.xlu0 %1966
  %v1969 = vmul.f32 %v1962, %v1967
  %1971 = vrot.lane.b32.xlu0 %v1969, 32
  %v1972 = vpop.permute.xlu0 %1971
  %v1974 = vadd.f32 %v1964, %v1972
  %v1975 = vtanh.pop %v1974
  %1977 = vrot.lane.b32.xlu0 %v1975, 64
  %v1978 = vpop.permute.xlu0 %1977
  %v1980 = vmul.f32 %v1962, %v1978
  %1982 = vrot.lane.b32.xlu0 %v1980, 32
  %v1983 = vpop.permute.xlu0 %1982
  %v1984 = vsel %vm172, %v1983, 0
  %1986 = vmatpush.msra.mxu0 0.0
  %1987 = vmatpush.msra.mxu0 0.0
  %1988 = vmatpush.msra.mxu0 0.0
  %1989 = vmatpush.msra.mxu0 0.0
  %1990 = vmatpush.msra.mxu0 0.0
  %1991 = vmatpush.msra.mxu0 0.0
  %1992 = vmatpush.msra.mxu0 0.0
  %1993 = vmatpush.msra.mxu0 0.0
  %1994 = vmatpush.msra.mxu0 0.0
  %1995 = vmatpush.msra.mxu0 0.0
  %1996 = vmatpush.msra.mxu0 0.0
  %1997 = vmatpush.msra.mxu0 0.0
  %1998 = vmatpush.msra.mxu0 %v1859
  %1999 = vmatpush.msra.mxu0 %v1858
  %2000 = vmatpush.msra.mxu0 %v1857
  %2001 = vmatpush.msra.mxu0 %v1856
  %2002 = vmatmul.f32.gmra.mxu0 %v1984
  %v2003 = vpop.f32.mrf.mxu0
  %v2004 = vadd.f32 0.0, %v2003
  %2005 = vdwg.mxu0
  %v2006 = vadd.f32 %v1344, %v2004
  %v2007 = vxor.u32 %v2006, 2147483648
  %v2008 = vmul.f32 %v2007, 1.442695
  %v2009 = vpow.pop %v2008
  %v2010 = vadd.f32 %v2009, 1.0
  %v2011 = vrcp.pop %v2010
  %v2012 = vmul.f32 %v2010, %v2011
  %v2013 = vsub.f32 1.0, %v2012
  %v2014 = vmul.f32 %v2011, %v2013
  %v2015 = vadd.f32 %v2011, %v2014
  %vm2016 = vweird.f32 %v2010
  %vm2017 = vweird.f32 %v2011
  %vm2018 = vmor %vm2016, %vm2017
  %v2019 = vsel %vm2018, %v2011, %v2015
  %v2020 = vand.u32 2147483647, %v2010
  %vm2021 = vcmp.eq.f32.partialorder %v2020, 8.507059e+37
  %v2022 = vand.u32 %v2010, 2147483648
  %v2023 = vor.u32 1.1754944e-38, %v2022
  %v2024 = vsel %vm2021, %v2023, %v2019
  %v2025 = vmul.f32 1.0, %v2024
  %v2026 = vtanh.pop %v2006
  %v2027 = vmul.f32 %v2025, %v1974
  %2029 = vrot.lane.b32.xlu0 %v2026, 64
  %v2030 = vpop.permute.xlu0 %2029
  %v2032 = vmul.f32 %v2025, %v2030
  %2034 = vrot.lane.b32.xlu0 %v2032, 32
  %v2035 = vpop.permute.xlu0 %2034
  %v2037 = vadd.f32 %v2027, %v2035
  %v2038 = vtanh.pop %v2037
  %2040 = vrot.lane.b32.xlu0 %v2038, 64
  %v2041 = vpop.permute.xlu0 %2040
  %v2043 = vmul.f32 %v2025, %v2041
  %2045 = vrot.lane.b32.xlu0 %v2043, 32
  %v2046 = vpop.permute.xlu0 %2045
  %v2047 = vsel %vm172, %v2046, 0
  %2049 = vmatpush.msra.mxu0 0.0
  %2050 = vmatpush.msra.mxu0 0.0
  %2051 = vmatpush.msra.mxu0 0.0
  %2052 = vmatpush.msra.mxu0 0.0
  %2053 = vmatpush.msra.mxu0 0.0
  %2054 = vmatpush.msra.mxu0 0.0
  %2055 = vmatpush.msra.mxu0 0.0
  %2056 = vmatpush.msra.mxu0 0.0
  %2057 = vmatpush.msra.mxu0 0.0
  %2058 = vmatpush.msra.mxu0 0.0
  %2059 = vmatpush.msra.mxu0 0.0
  %2060 = vmatpush.msra.mxu0 0.0
  %2061 = vmatpush.msra.mxu0 %v1859
  %2062 = vmatpush.msra.mxu0 %v1858
  %2063 = vmatpush.msra.mxu0 %v1857
  %2064 = vmatpush.msra.mxu0 %v1856
  %2065 = vmatmul.f32.gmra.mxu0 %v2047
  %v2066 = vpop.f32.mrf.mxu0
  %v2067 = vadd.f32 0.0, %v2066
  %2068 = vdwg.mxu0
  %v2069 = vadd.f32 %v1341, %v2067
  %v2070 = vxor.u32 %v2069, 2147483648
  %v2071 = vmul.f32 %v2070, 1.442695
  %v2072 = vpow.pop %v2071
  %v2073 = vadd.f32 %v2072, 1.0
  %v2074 = vrcp.pop %v2073
  %v2075 = vmul.f32 %v2073, %v2074
  %v2076 = vsub.f32 1.0, %v2075
  %v2077 = vmul.f32 %v2074, %v2076
  %v2078 = vadd.f32 %v2074, %v2077
  %vm2079 = vweird.f32 %v2073
  %vm2080 = vweird.f32 %v2074
  %vm2081 = vmor %vm2079, %vm2080
  %v2082 = vsel %vm2081, %v2074, %v2078
  %v2083 = vand.u32 2147483647, %v2073
  %vm2084 = vcmp.eq.f32.partialorder %v2083, 8.507059e+37
  %v2085 = vand.u32 %v2073, 2147483648
  %v2086 = vor.u32 1.1754944e-38, %v2085
  %v2087 = vsel %vm2084, %v2086, %v2082
  %v2088 = vmul.f32 1.0, %v2087
  %v2089 = vtanh.pop %v2069
  %v2090 = vmul.f32 %v2088, %v2037
  %2092 = vrot.lane.b32.xlu0 %v2089, 64
  %v2093 = vpop.permute.xlu0 %2092
  %v2095 = vmul.f32 %v2088, %v2093
  %2097 = vrot.lane.b32.xlu0 %v2095, 32
  %v2098 = vpop.permute.xlu0 %2097
  %v2100 = vadd.f32 %v2090, %v2098
  %v2101 = vtanh.pop %v2100
  %2103 = vrot.lane.b32.xlu0 %v2101, 64
  %v2104 = vpop.permute.xlu0 %2103
  %v2106 = vmul.f32 %v2088, %v2104
  %2108 = vrot.lane.b32.xlu0 %v2106, 32
  %v2109 = vpop.permute.xlu0 %2108
  %v2110 = vsel %vm172, %v2109, 0
  %2112 = vmatpush.msra.mxu0 0.0
  %2113 = vmatpush.msra.mxu0 0.0
  %2114 = vmatpush.msra.mxu0 0.0
  %2115 = vmatpush.msra.mxu0 0.0
  %2116 = vmatpush.msra.mxu0 0.0
  %2117 = vmatpush.msra.mxu0 0.0
  %2118 = vmatpush.msra.mxu0 0.0
  %2119 = vmatpush.msra.mxu0 0.0
  %2120 = vmatpush.msra.mxu0 0.0
  %2121 = vmatpush.msra.mxu0 0.0
  %2122 = vmatpush.msra.mxu0 0.0
  %2123 = vmatpush.msra.mxu0 0.0
  %2124 = vmatpush.msra.mxu0 %v1859
  %2125 = vmatpush.msra.mxu0 %v1858
  %2126 = vmatpush.msra.mxu0 %v1857
  %2127 = vmatpush.msra.mxu0 %v1856
  %2128 = vmatmul.f32.gmra.mxu0 %v2110
  %v2129 = vpop.f32.mrf.mxu0
  %v2130 = vadd.f32 0.0, %v2129
  %2131 = vdwg.mxu0
  %v2132 = vadd.f32 %v1338, %v2130
  %v2133 = vxor.u32 %v2132, 2147483648
  %v2134 = vmul.f32 %v2133, 1.442695
  %v2135 = vpow.pop %v2134
  %v2136 = vadd.f32 %v2135, 1.0
  %v2137 = vrcp.pop %v2136
  %v2138 = vmul.f32 %v2136, %v2137
  %v2139 = vsub.f32 1.0, %v2138
  %v2140 = vmul.f32 %v2137, %v2139
  %v2141 = vadd.f32 %v2137, %v2140
  %vm2142 = vweird.f32 %v2136
  %vm2143 = vweird.f32 %v2137
  %vm2144 = vmor %vm2142, %vm2143
  %v2145 = vsel %vm2144, %v2137, %v2141
  %v2146 = vand.u32 2147483647, %v2136
  %vm2147 = vcmp.eq.f32.partialorder %v2146, 8.507059e+37
  %v2148 = vand.u32 %v2136, 2147483648
  %v2149 = vor.u32 1.1754944e-38, %v2148
  %v2150 = vsel %vm2147, %v2149, %v2145
  %v2151 = vmul.f32 1.0, %v2150
  %v2152 = vtanh.pop %v2132
  %v2153 = vmul.f32 %v2151, %v2100
  %2155 = vrot.lane.b32.xlu0 %v2152, 64
  %v2156 = vpop.permute.xlu0 %2155
  %v2158 = vmul.f32 %v2151, %v2156
  %2160 = vrot.lane.b32.xlu0 %v2158, 32
  %v2161 = vpop.permute.xlu0 %2160
  %v2163 = vadd.f32 %v2153, %v2161
  %v2164 = vtanh.pop %v2163
  %2166 = vrot.lane.b32.xlu0 %v2164, 64
  %v2167 = vpop.permute.xlu0 %2166
  %v2169 = vmul.f32 %v2151, %v2167
  %2171 = vrot.lane.b32.xlu0 %v2169, 32
  %v2172 = vpop.permute.xlu0 %2171
  %v2173 = vsel %vm172, %v2172, 0
  %2175 = vmatpush.msra.mxu0 0.0
  %2176 = vmatpush.msra.mxu0 0.0
  %2177 = vmatpush.msra.mxu0 0.0
  %2178 = vmatpush.msra.mxu0 0.0
  %2179 = vmatpush.msra.mxu0 0.0
  %2180 = vmatpush.msra.mxu0 0.0
  %2181 = vmatpush.msra.mxu0 0.0
  %2182 = vmatpush.msra.mxu0 0.0
  %2183 = vmatpush.msra.mxu0 0.0
  %2184 = vmatpush.msra.mxu0 0.0
  %2185 = vmatpush.msra.mxu0 0.0
  %2186 = vmatpush.msra.mxu0 0.0
  %2187 = vmatpush.msra.mxu0 %v1859
  %2188 = vmatpush.msra.mxu0 %v1858
  %2189 = vmatpush.msra.mxu0 %v1857
  %2190 = vmatpush.msra.mxu0 %v1856
  %2191 = vmatmul.f32.gmra.mxu0 %v2173
  %v2192 = vpop.f32.mrf.mxu0
  %v2193 = vadd.f32 0.0, %v2192
  %2194 = vdwg.mxu0
  %v2195 = vadd.f32 %v1335, %v2193
  %v2196 = vxor.u32 %v2195, 2147483648
  %v2197 = vmul.f32 %v2196, 1.442695
  %v2198 = vpow.pop %v2197
  %v2199 = vadd.f32 %v2198, 1.0
  %v2200 = vrcp.pop %v2199
  %v2201 = vmul.f32 %v2199, %v2200
  %v2202 = vsub.f32 1.0, %v2201
  %v2203 = vmul.f32 %v2200, %v2202
  %v2204 = vadd.f32 %v2200, %v2203
  %vm2205 = vweird.f32 %v2199
  %vm2206 = vweird.f32 %v2200
  %vm2207 = vmor %vm2205, %vm2206
  %v2208 = vsel %vm2207, %v2200, %v2204
  %v2209 = vand.u32 2147483647, %v2199
  %vm2210 = vcmp.eq.f32.partialorder %v2209, 8.507059e+37
  %v2211 = vand.u32 %v2199, 2147483648
  %v2212 = vor.u32 1.1754944e-38, %v2211
  %v2213 = vsel %vm2210, %v2212, %v2208
  %v2214 = vmul.f32 1.0, %v2213
  %v2215 = vtanh.pop %v2195
  %v2216 = vmul.f32 %v2214, %v2163
  %2218 = vrot.lane.b32.xlu0 %v2215, 64
  %v2219 = vpop.permute.xlu0 %2218
  %v2221 = vmul.f32 %v2214, %v2219
  %2223 = vrot.lane.b32.xlu0 %v2221, 32
  %v2224 = vpop.permute.xlu0 %2223
  %v2226 = vadd.f32 %v2216, %v2224
  %v2227 = vtanh.pop %v2226
  %2229 = vrot.lane.b32.xlu0 %v2227, 64
  %v2230 = vpop.permute.xlu0 %2229
  %v2232 = vmul.f32 %v2214, %v2230
  %2234 = vrot.lane.b32.xlu0 %v2232, 32
  %v2235 = vpop.permute.xlu0 %2234
  %v2236 = vsel %vm172, %v2235, 0
  %2238 = vmatpush.msra.mxu0 0.0
  %2239 = vmatpush.msra.mxu0 0.0
  %2240 = vmatpush.msra.mxu0 0.0
  %2241 = vmatpush.msra.mxu0 0.0
  %2242 = vmatpush.msra.mxu0 0.0
  %2243 = vmatpush.msra.mxu0 0.0
  %2244 = vmatpush.msra.mxu0 0.0
  %2245 = vmatpush.msra.mxu0 0.0
  %2246 = vmatpush.msra.mxu0 0.0
  %2247 = vmatpush.msra.mxu0 0.0
  %2248 = vmatpush.msra.mxu0 0.0
  %2249 = vmatpush.msra.mxu0 0.0
  %2250 = vmatpush.msra.mxu0 %v1859
  %2251 = vmatpush.msra.mxu0 %v1858
  %2252 = vmatpush.msra.mxu0 %v1857
  %2253 = vmatpush.msra.mxu0 %v1856
  %2254 = vmatmul.f32.gmra.mxu0 %v2236
  %v2255 = vpop.f32.mrf.mxu0
  %v2256 = vadd.f32 0.0, %v2255
  %2257 = vdwg.mxu0
  %v2258 = vadd.f32 %v1332, %v2256
  %v2259 = vxor.u32 %v2258, 2147483648
  %v2260 = vmul.f32 %v2259, 1.442695
  %v2261 = vpow.pop %v2260
  %v2262 = vadd.f32 %v2261, 1.0
  %v2263 = vrcp.pop %v2262
  %v2264 = vmul.f32 %v2262, %v2263
  %v2265 = vsub.f32 1.0, %v2264
  %v2266 = vmul.f32 %v2263, %v2265
  %v2267 = vadd.f32 %v2263, %v2266
  %vm2268 = vweird.f32 %v2262
  %vm2269 = vweird.f32 %v2263
  %vm2270 = vmor %vm2268, %vm2269
  %v2271 = vsel %vm2270, %v2263, %v2267
  %v2272 = vand.u32 2147483647, %v2262
  %vm2273 = vcmp.eq.f32.partialorder %v2272, 8.507059e+37
  %v2274 = vand.u32 %v2262, 2147483648
  %v2275 = vor.u32 1.1754944e-38, %v2274
  %v2276 = vsel %vm2273, %v2275, %v2271
  %v2277 = vmul.f32 1.0, %v2276
  %v2278 = vtanh.pop %v2258
  %v2279 = vmul.f32 %v2277, %v2226
  %2281 = vrot.lane.b32.xlu0 %v2278, 64
  %v2282 = vpop.permute.xlu0 %2281
  %v2284 = vmul.f32 %v2277, %v2282
  %2286 = vrot.lane.b32.xlu0 %v2284, 32
  %v2287 = vpop.permute.xlu0 %2286
  %v2289 = vadd.f32 %v2279, %v2287
  %v2290 = vtanh.pop %v2289
  %2292 = vrot.lane.b32.xlu0 %v2290, 64
  %v2293 = vpop.permute.xlu0 %2292
  %v2295 = vmul.f32 %v2277, %v2293
  %2297 = vrot.lane.b32.xlu0 %v2295, 32
  %v2298 = vpop.permute.xlu0 %2297
  %v2299 = vsel %vm172, %v2298, 0
  %2301 = vmatpush.msra.mxu0 0.0
  %2302 = vmatpush.msra.mxu0 0.0
  %2303 = vmatpush.msra.mxu0 0.0
  %2304 = vmatpush.msra.mxu0 0.0
  %2305 = vmatpush.msra.mxu0 0.0
  %2306 = vmatpush.msra.mxu0 0.0
  %2307 = vmatpush.msra.mxu0 0.0
  %2308 = vmatpush.msra.mxu0 0.0
  %2309 = vmatpush.msra.mxu0 0.0
  %2310 = vmatpush.msra.mxu0 0.0
  %2311 = vmatpush.msra.mxu0 0.0
  %2312 = vmatpush.msra.mxu0 0.0
  %2313 = vmatpush.msra.mxu0 %v1859
  %2314 = vmatpush.msra.mxu0 %v1858
  %2315 = vmatpush.msra.mxu0 %v1857
  %2316 = vmatpush.msra.mxu0 %v1856
  %2317 = vmatmul.f32.gmra.mxu0 %v2299
  %v2318 = vpop.f32.mrf.mxu0
  %v2319 = vadd.f32 0.0, %v2318
  %2320 = vdwg.mxu0
  %v2321 = vadd.f32 %v1329, %v2319
  %v2322 = vxor.u32 %v2321, 2147483648
  %v2323 = vmul.f32 %v2322, 1.442695
  %v2324 = vpow.pop %v2323
  %v2325 = vadd.f32 %v2324, 1.0
  %v2326 = vrcp.pop %v2325
  %v2327 = vmul.f32 %v2325, %v2326
  %v2328 = vsub.f32 1.0, %v2327
  %v2329 = vmul.f32 %v2326, %v2328
  %v2330 = vadd.f32 %v2326, %v2329
  %vm2331 = vweird.f32 %v2325
  %vm2332 = vweird.f32 %v2326
  %vm2333 = vmor %vm2331, %vm2332
  %v2334 = vsel %vm2333, %v2326, %v2330
  %v2335 = vand.u32 2147483647, %v2325
  %vm2336 = vcmp.eq.f32.partialorder %v2335, 8.507059e+37
  %v2337 = vand.u32 %v2325, 2147483648
  %v2338 = vor.u32 1.1754944e-38, %v2337
  %v2339 = vsel %vm2336, %v2338, %v2334
  %v2340 = vmul.f32 1.0, %v2339
  %v2341 = vtanh.pop %v2321
  %v2342 = vmul.f32 %v2340, %v2289
  %2344 = vrot.lane.b32.xlu0 %v2341, 64
  %v2345 = vpop.permute.xlu0 %2344
  %v2347 = vmul.f32 %v2340, %v2345
  %2349 = vrot.lane.b32.xlu0 %v2347, 32
  %v2350 = vpop.permute.xlu0 %2349
  %v2352 = vadd.f32 %v2342, %v2350
  %v2353 = vtanh.pop %v2352
  %2355 = vrot.lane.b32.xlu0 %v2353, 64
  %v2356 = vpop.permute.xlu0 %2355
  %v2358 = vmul.f32 %v2340, %v2356
  %2361 = vrot.lane.b32.xlu0 %v2358, 64
  %v2362 = vpop.permute.xlu0 %2361
  %v2364 = vsel %vm172, %v1416, %v2362
  %2366 = vrot.lane.b32.xlu0 %v2295, 64
  %v2367 = vpop.permute.xlu0 %2366
  %v2369 = vsel %vm172, %v1479, %v2367
  %2371 = vrot.lane.b32.xlu0 %v2232, 64
  %v2372 = vpop.permute.xlu0 %2371
  %v2374 = vsel %vm172, %v1542, %v2372
  %2376 = vrot.lane.b32.xlu0 %v2169, 64
  %v2377 = vpop.permute.xlu0 %2376
  %v2379 = vsel %vm172, %v1605, %v2377
  %2381 = vrot.lane.b32.xlu0 %v2106, 64
  %v2382 = vpop.permute.xlu0 %2381
  %v2384 = vsel %vm172, %v1668, %v2382
  %2386 = vrot.lane.b32.xlu0 %v2043, 64
  %v2387 = vpop.permute.xlu0 %2386
  %v2389 = vsel %vm172, %v1731, %v2387
  %2391 = vrot.lane.b32.xlu0 %v1980, 64
  %v2392 = vpop.permute.xlu0 %2391
  %v2394 = vsel %vm172, %v1794, %v2392
  %2396 = vrot.lane.b32.xlu0 %v1854, 32
  %v2397 = vpop.permute.xlu0 %2396
  %2399 = vrot.lane.b32.xlu0 %v1917, 64
  %v2400 = vpop.permute.xlu0 %2399
  %v2402 = vsel %vm172, %v2397, %v2400
  %v2403 = vld [vmem:[%s7] sm:$0x1]
  %v2405 = vperm.slane %v2403, 0
  %v2407 = vmul.f32 %v2364, %v2405
  %v2408 = vsel %vm1245, %v2407, 0.0
  %2409 = vadd.xlane.f32.xlu0 %v2408
  %v2410 = vpop.xlane.xlu0 %2409
  %v2411 = vmul.f32 %v2369, %v2405
  %v2412 = vsel %vm1245, %v2411, 0.0
  %2413 = vadd.xlane.f32.xlu0 %v2412
  %v2414 = vpop.xlane.xlu0 %2413
  %v2415 = vmul.f32 %v2374, %v2405
  %v2416 = vsel %vm1245, %v2415, 0.0
  %2417 = vadd.xlane.f32.xlu0 %v2416
  %v2418 = vpop.xlane.xlu0 %2417
  %v2419 = vmul.f32 %v2379, %v2405
  %v2420 = vsel %vm1245, %v2419, 0.0
  %2421 = vadd.xlane.f32.xlu0 %v2420
  %v2422 = vpop.xlane.xlu0 %2421
  %v2423 = vmul.f32 %v2384, %v2405
  %v2424 = vsel %vm1245, %v2423, 0.0
  %2425 = vadd.xlane.f32.xlu0 %v2424
  %v2426 = vpop.xlane.xlu0 %2425
  %v2427 = vmul.f32 %v2389, %v2405
  %v2428 = vsel %vm1245, %v2427, 0.0
  %2429 = vadd.xlane.f32.xlu0 %v2428
  %v2430 = vpop.xlane.xlu0 %2429
  %v2431 = vmul.f32 %v2394, %v2405
  %v2432 = vsel %vm1245, %v2431, 0.0
  %2433 = vadd.xlane.f32.xlu0 %v2432
  %v2434 = vpop.xlane.xlu0 %2433
  %v2435 = vmul.f32 %v2402, %v2405
  %v2436 = vsel %vm1245, %v2435, 0.0
  %2437 = vadd.xlane.f32.xlu0 %v2436
  %v2438 = vpop.xlane.xlu0 %2437
  %v2439 = vmax.f32 %v2410, %v2414
  %v2440 = vmax.f32 %v2439, %v2418
  %v2441 = vmax.f32 %v2440, %v2422
  %v2442 = vmax.f32 %v2441, %v2426
  %v2443 = vmax.f32 %v2442, %v2430
  %v2444 = vmax.f32 %v2443, %v2434
  %v2445 = vmax.f32 %v2444, %v2438
  %v2446 = vsub.f32 %v2410, %v2445
  %v2447 = vmul.f32 %v2446, 1.442695
  %v2448 = vpow.pop %v2447
  %v2449 = vsub.f32 %v2414, %v2445
  %v2450 = vmul.f32 %v2449, 1.442695
  %v2451 = vpow.pop %v2450
  %v2452 = vsub.f32 %v2418, %v2445
  %v2453 = vmul.f32 %v2452, 1.442695
  %v2454 = vpow.pop %v2453
  %v2455 = vsub.f32 %v2422, %v2445
  %v2456 = vmul.f32 %v2455, 1.442695
  %v2457 = vpow.pop %v2456
  %v2458 = vsub.f32 %v2426, %v2445
  %v2459 = vmul.f32 %v2458, 1.442695
  %v2460 = vpow.pop %v2459
  %v2461 = vsub.f32 %v2430, %v2445
  %v2462 = vmul.f32 %v2461, 1.442695
  %v2463 = vpow.pop %v2462
  %v2464 = vsub.f32 %v2434, %v2445
  %v2465 = vmul.f32 %v2464, 1.442695
  %v2466 = vpow.pop %v2465
  %v2467 = vsub.f32 %v2438, %v2445
  %v2468 = vmul.f32 %v2467, 1.442695
  %v2469 = vpow.pop %v2468
  %v2470 = vadd.f32 %v2448, %v2451
  %v2471 = vadd.f32 %v2470, %v2454
  %v2472 = vadd.f32 %v2471, %v2457
  %v2473 = vadd.f32 %v2472, %v2460
  %v2474 = vadd.f32 %v2473, %v2463
  %v2475 = vadd.f32 %v2474, %v2466
  %v2476 = vadd.f32 %v2475, %v2469
  %v2477 = vrcp.pop %v2476
  %v2478 = vmul.f32 %v2476, %v2477
  %v2479 = vsub.f32 1.0, %v2478
  %v2480 = vmul.f32 %v2477, %v2479
  %v2481 = vadd.f32 %v2477, %v2480
  %vm2482 = vweird.f32 %v2476
  %vm2483 = vweird.f32 %v2477
  %vm2484 = vmor %vm2482, %vm2483
  %v2485 = vsel %vm2484, %v2477, %v2481
  %v2486 = vand.u32 2147483647, %v2476
  %vm2487 = vcmp.eq.f32.partialorder %v2486, 8.507059e+37
  %v2488 = vand.u32 %v2476, 2147483648
  %v2489 = vor.u32 1.1754944e-38, %v2488
  %v2490 = vsel %vm2487, %v2489, %v2485
  %v2491 = vmul.f32 1.0, %v2490
  %v2492 = vmul.f32 %v2448, %v2491
  %v2493 = vmul.f32 %v2492, %v2364
  %v2494 = vmul.f32 %v2451, %v2491
  %v2495 = vmul.f32 %v2494, %v2369
  %v2496 = vadd.f32 %v2493, %v2495
  %v2497 = vmul.f32 %v2454, %v2491
  %v2498 = vmul.f32 %v2497, %v2374
  %v2499 = vadd.f32 %v2496, %v2498
  %v2500 = vmul.f32 %v2457, %v2491
  %v2501 = vmul.f32 %v2500, %v2379
  %v2502 = vadd.f32 %v2499, %v2501
  %v2503 = vmul.f32 %v2460, %v2491
  %v2504 = vmul.f32 %v2503, %v2384
  %v2505 = vadd.f32 %v2502, %v2504
  %v2506 = vmul.f32 %v2463, %v2491
  %v2507 = vmul.f32 %v2506, %v2389
  %v2508 = vadd.f32 %v2505, %v2507
  %v2509 = vmul.f32 %v2466, %v2491
  %v2510 = vmul.f32 %v2509, %v2394
  %v2511 = vadd.f32 %v2508, %v2510
  %v2512 = vmul.f32 %v2469, %v2491
  %v2513 = vmul.f32 %v2512, %v2402
  %v2514 = vadd.f32 %v2511, %v2513
  %v2515 = vld [vmem:[%s8] sm:$0xff]
  %v2516 = vld [vmem:[%s8 + $0x8] sm:$0xff]
  %v2517 = vld [vmem:[%s8 + $0x10] sm:$0xff]
  %v2518 = vld [vmem:[%s8 + $0x18] sm:$0xff]
  %v2519 = vld [vmem:[%s8 + $0x20] sm:$0xff]
  %v2520 = vld [vmem:[%s8 + $0x28] sm:$0xff]
  %v2521 = vld [vmem:[%s8 + $0x30] sm:$0xff]
  %v2522 = vld [vmem:[%s8 + $0x38] sm:$0xff]
  %v2523 = vld [vmem:[%s9] sm:$0x1]
  %v2525 = vperm.slane %v2523, 0
  %v2528 = vsel %vm1245, %v2514, 0
  %2530 = vmatpush.msra.mxu0 0.0
  %2531 = vmatpush.msra.mxu0 0.0
  %2532 = vmatpush.msra.mxu0 0.0
  %2533 = vmatpush.msra.mxu0 0.0
  %2534 = vmatpush.msra.mxu0 0.0
  %2535 = vmatpush.msra.mxu0 0.0
  %2536 = vmatpush.msra.mxu0 0.0
  %2537 = vmatpush.msra.mxu0 0.0
  %2538 = vmatpush.msra.mxu0 %v2522
  %2539 = vmatpush.msra.mxu0 %v2521
  %2540 = vmatpush.msra.mxu0 %v2520
  %2541 = vmatpush.msra.mxu0 %v2519
  %2542 = vmatpush.msra.mxu0 %v2518
  %2543 = vmatpush.msra.mxu0 %v2517
  %2544 = vmatpush.msra.mxu0 %v2516
  %2545 = vmatpush.msra.mxu0 %v2515
  %2546 = vmatmul.f32.gmra.mxu0 %v2528
  %v2547 = vpop.f32.mrf.mxu0
  %v2548 = vadd.f32 %v2525, %v2547
  %2549 = vdwg.mxu0
  %v2550 = vmax.f32 %v2548, -10.0
  %v2551 = vmin.f32 %v2550, 10.0
  %v2552 = vmul.f32 %v2551, 1.442695
  %v2553 = vpow.pop %v2552
  %vm2554 = vcmask 39936
  %2555 = vst.msk [vmem:[%s10] sm:$0xff] %vm2554, %v2553
  // Predicated region
  $region42: #{_lambda_.1} parent=0 // pred_check
    _
  $region43: #{_lambda_.1} parent=0 // pred_check_branch
    %2557 = sbr.rel (0) target = $region45
  $region44: #{_lambda_.1} parent=0 // pred_region
    _
  $region45: #{_lambda_.1} parent=0 // pred_fallthru
    _
  // Predicated region
  $region46: #{_lambda_.1} parent=0 // pred_check
    _
  $region47: #{_lambda_.1} parent=0 // pred_check_branch
    %2559 = sbr.rel (0) target = $region49
  $region48: #{_lambda_.1} parent=0 // pred_region
    _
  $region49: #{_lambda_.1} parent=0 // pred_fallthru
    _

</llo_original>
